<compile_context>
chip_gen: v5e
topology: v5e:2x2
jax: 0.10.0
libtpu: 0.0.40
codegen_flags: <defaults>
</compile_context>

<pallas_src>
import numpy as np
import jax
import jax.numpy as jnp
from jax.experimental import pallas as pl
from jax.experimental.pallas import tpu as pltpu

NEG_SLOPE = 0.2


# --------------------------------------------------------------------------- parameters

def init_params(key, in_channels=3, num_halfsize=4, num_filters=16):
    """normal(0,0.02) conv weights, zero biases, BN gamma=1/beta=0 (init_batchnorm=False)."""
    chans = [in_channels] + [num_filters * 2 ** i for i in range(num_halfsize - 1)] + [1]
    layers = []
    for l in range(num_halfsize):
        key, kw = jax.random.split(key)
        cin, cout = chans[l], chans[l + 1]
        layer = {
            "w": 0.02 * jax.random.normal(kw, (cout, cin, 3, 3), jnp.float32),  # OIHW
            "b": jnp.zeros((cout,), jnp.float32),
            "bn": 0 < l < num_halfsize - 1,
        }
        if layer["bn"]:
            layer["gamma"] = jnp.ones((cout,), jnp.float32)
            layer["beta"] = jnp.zeros((cout,), jnp.float32)
        layers.append(layer)
    return layers


# --------------------------------------------------------------- host-side weight packing

def _build_rowsel(n, ho, hp):
    """(3*N*Ho, N*Hp) 0/1: block kh selects padded input row h = 2*ho + kh per image."""
    m = np.zeros((3 * n * ho, n * hp), np.float32)
    for kh in range(3):
        for b in range(n):
            for o in range(ho):
                m[kh * n * ho + b * ho + o, b * hp + 2 * o + kh] = 1.0
    return jnp.asarray(m, jnp.bfloat16)


def _build_wblk(w_oihw, wo):
    """Block-Toeplitz repack: (3*Wp*Cin, Wo*Cout) with
    Wblk[kh][(w,ci),(wo,co)] = W[co,ci,kh,w-2*wo] for w-2*wo in {0,1,2}, zero elsewhere."""
    w_np = np.asarray(w_oihw, dtype=np.float32)
    cout, cin, _, _ = w_np.shape
    wp = 2 * wo + 2
    m = np.zeros((3 * wp * cin, wo * cout), np.float32)
    for kh in range(3):
        base = kh * wp * cin
        for o in range(wo):
            for kw in range(3):
                w = 2 * o + kw
                m[base + w * cin: base + (w + 1) * cin,
                  o * cout:(o + 1) * cout] = w_np[:, :, kh, kw].T
    return jnp.asarray(m, jnp.bfloat16)


def pack_params(layers, n, h, w):
    """Per-layer constant operands for the fused kernel (small, built once on the host)."""
    assert h % (2 ** len(layers)) == 0 and w % (2 ** len(layers)) == 0
    packed = []
    H, W = h, w
    for layer in layers:
        cout, cin = layer["w"].shape[0], layer["w"].shape[1]
        ho, wo, hp, wp = H // 2, W // 2, H + 2, W + 2
        entry = {
            "dims": dict(N=n, Ho=ho, Wo=wo, Hp=hp, Wp=wp, cin=cin, cout=cout),
            "bn": layer["bn"],
            "rowsel": _build_rowsel(n, ho, hp),                      # (3*N*Ho, N*Hp) bf16
            "wblk": _build_wblk(layer["w"], wo),                     # (3*Wp*Cin, Wo*Cout) bf16
            "bias": jnp.tile(layer["b"].astype(jnp.float32), wo)[None, :],   # (1, Wo*Cout)
        }
        if layer["bn"]:
            smat = jnp.tile(jnp.eye(cout, dtype=jnp.float32), (wo, 1))       # (Wo*Cout, Cout)
            entry["smat"] = smat
            entry["stmat"] = smat.T                                          # (Cout, Wo*Cout)
            entry["gamma"] = layer["gamma"].astype(jnp.float32)[None, :]
            entry["beta"] = layer["beta"].astype(jnp.float32)[None, :]
        packed.append(entry)
        H, W = ho, wo
    return packed


# ------------------------------------------------------------------- fused forward kernel

def _fused_forward(a0, packed, eps):
    n_layers = len(packed)
    N = packed[0]["dims"]["N"]

    # Flat operand list (all 2-D arrays) + per-layer argument indices.
    inputs = [a0]
    arg_idx = []
    for e in packed:
        names = ("rowsel", "wblk", "bias") + (("smat", "stmat", "gamma", "beta") if e["bn"] else ())
        idx = {}
        for name in names:
            idx[name] = len(inputs)
            inputs.append(e[name])
        arg_idx.append(idx)

    # One VMEM scratch (zero-bordered 2-D activation matrix) per non-first layer input.
    scratch_shapes = [
        pltpu.VMEM((N * e["dims"]["Hp"], e["dims"]["Wp"] * e["dims"]["cin"]), jnp.float32)
        for e in packed[1:]
    ]

    dl = packed[-1]["dims"]
    out_shape = jax.ShapeDtypeStruct((N * dl["Ho"], dl["Wo"] * dl["cout"]), jnp.float32)

    def kernel(*refs):
        in_refs = refs[:len(inputs)]
        out_ref = refs[len(inputs)]
        scr_refs = refs[len(inputs) + 1:]

        # Zero-init the scratch activation matrices (their borders must stay zero).
        for r in scr_refs:
            r[...] = jnp.zeros(r.shape, r.dtype)

        a_val = in_refs[0][...]                              # (N*Hp0, Wp0*Cin0) bf16
        for l, e in enumerate(packed):
            d, idx = e["dims"], arg_idx[l]
            m2 = N * d["Ho"]                                 # GEMM rows   = (n, ho)
            k = d["Wp"] * d["cin"]                           # contraction = (w, cin)
            lanes = d["Wo"] * d["cout"]                      # GEMM lanes  = (wo, cout)

            # Implicit 3x3/stride-2 conv:  sum_kh (row-select) @ A @ (block-Toeplitz weights).
            rowsel_ref = in_refs[idx["rowsel"]]
            wblk_ref = in_refs[idx["wblk"]]
            acc = jnp.zeros((m2, lanes), jnp.float32)
            for kh in range(3):
                sel = rowsel_ref[kh * m2:(kh + 1) * m2, :]                  # 0/1 bf16
                rows = jnp.dot(sel, a_val, preferred_element_type=jnp.float32)
                rows = rows.astype(jnp.bfloat16)                            # exact (pure selection)
                wblk = wblk_ref[kh * k:(kh + 1) * k, :]
                acc = acc + jnp.dot(rows, wblk, preferred_element_type=jnp.float32)

            y = acc + in_refs[idx["bias"]][...]                             # (m2, lanes) f32

            if e["bn"]:
                # Fused training-mode BatchNorm over (n, ho, wo) per channel, f32 epilogue.
                cnt = float(N * d["Ho"] * d["Wo"])
                smat = in_refs[idx["smat"]][...]                            # (lanes, cout)
                stmat = in_refs[idx["stmat"]][...]                          # (cout, lanes)
                mean_c = jnp.dot(jnp.sum(y, axis=0, keepdims=True), smat,
                                 preferred_element_type=jnp.float32) * (1.0 / cnt)
                mean_l = jnp.dot(mean_c, stmat, preferred_element_type=jnp.float32)
                ctr = y - mean_l
                var_c = jnp.dot(jnp.sum(ctr * ctr, axis=0, keepdims=True), smat,
                                preferred_element_type=jnp.float32) * (1.0 / cnt)
                inv_std = jax.lax.rsqrt(var_c + eps)                        # (1, cout), EUP
                scale_l = jnp.dot(in_refs[idx["gamma"]][...] * inv_std, stmat,
                                  preferred_element_type=jnp.float32)
                shift_l = jnp.dot(in_refs[idx["beta"]][...], stmat,
                                  preferred_element_type=jnp.float32)
                y = ctr * scale_l + shift_l

            if l < n_layers - 1:
                y = jnp.where(y >= 0, y, NEG_SLOPE * y)                     # LeakyReLU(0.2)
                # Write into the next layer's zero-bordered activation matrix:
                #   rows [n*Hp+1, n*Hp+1+Ho), lane groups [cout, cout + Wo*cout).
                dn = packed[l + 1]["dims"]
                nxt = scr_refs[l]
                for b in range(N):
                    nxt[b * dn["Hp"] + 1: b * dn["Hp"] + 1 + d["Ho"],
                        d["cout"]: d["cout"] + lanes] = y[b * d["Ho"]:(b + 1) * d["Ho"], :]
                a_val = nxt[...].astype(jnp.bfloat16)                       # bf16 MXU operand
            else:
                out_ref[...] = jax.nn.sigmoid(y)                            # final activation

    # Advisory cost estimate (helps XLA schedule the tiny surrounding layout ops).
    flops = 0
    for e in packed:
        d = e["dims"]
        m2, k, lanes, r = N * d["Ho"], d["Wp"] * d["cin"], d["Wo"] * d["cout"], N * d["Hp"]
        flops += 3 * 2 * (m2 * r * k + m2 * k * lanes)
    bytes_accessed = sum(int(np.prod(a.shape)) * a.dtype.itemsize for a in inputs)
    bytes_accessed += int(np.prod(out_shape.shape)) * 4

    return pl.pallas_call(
        kernel,
        out_shape=out_shape,
        grid=(1,),
        in_specs=[pl.BlockSpec(a.shape, lambda i: (0, 0)) for a in inputs],
        out_specs=pl.BlockSpec(out_shape.shape, lambda i: (0, 0)),
        scratch_shapes=scratch_shapes,
        compiler_params=pltpu.CompilerParams(dimension_semantics=("arbitrary",)),
        cost_estimate=pl.CostEstimate(flops=flops, transcendentals=256,
                                      bytes_accessed=bytes_accessed),
    )(*inputs)


def discriminator_forward(x_nchw, packed, eps=1e-5):
    n, c, h, w = x_nchw.shape
    xh = jnp.transpose(x_nchw, (0, 2, 3, 1))                 # NCHW -> NHWC
    xp = jnp.pad(xh, ((0, 0), (1, 1), (1, 1), (0, 0)))       # spatial zero pad (once, 12 KB)
    a0 = xp.reshape(n * (h + 2), (w + 2) * c).astype(jnp.bfloat16)   # rows=(n,h), lanes=(w,c)
    out2d = _fused_forward(a0, packed, eps)                  # (N*Ho_last, Wo_last)
    dl = packed[-1]["dims"]
    return out2d.reshape(n, dl["Ho"], dl["Wo"])[:, None, :, :]       # NCHW, C=1


# ----------------------------------------------------------------------------- reference
# Pure-JAX reference with the SAME bf16 MXU-operand / bf16 inter-layer activation
# quantization as the kernel path, so the tolerance check is meaningful.

def reference_forward(x_nchw, layers, eps=1e-5):
    x = jnp.transpose(x_nchw, (0, 2, 3, 1)).astype(jnp.bfloat16)
    nl = len(layers)
    for l, layer in enumerate(layers):
        w_hwio = jnp.transpose(layer["w"], (2, 3, 1, 0)).astype(jnp.bfloat16)
        y = jax.lax.conv_general_dilated(
            x, w_hwio, window_strides=(2, 2), padding=((1, 1), (1, 1)),
            dimension_numbers=("NHWC", "HWIO", "NHWC"),
            preferred_element_type=jnp.float32) + layer["b"]
        if layer["bn"]:
            mean = jnp.mean(y, axis=(0, 1, 2), keepdims=True)
            var = jnp.mean((y - mean) ** 2, axis=(0, 1, 2), keepdims=True)
            y = (y - mean) * jax.lax.rsqrt(var + eps) * layer["gamma"] + layer["beta"]
            y = jnp.where(y >= 0, y, NEG_SLOPE * y)
        elif l < nl - 1:
            y = jnp.where(y >= 0, y, NEG_SLOPE * y)
        else:
            y = jax.nn.sigmoid(y)
        x = y.astype(jnp.bfloat16) if l < nl - 1 else y
    return jnp.transpose(x, (0, 3, 1, 2))


# ----------------------------------------------------------------------------- main

if __name__ == "__main__":
    key = jax.random.PRNGKey(0)
    kx, kp = jax.random.split(key)

    # Small config consistent with the module: in_channels=3, num_halfsize=4, num_filters=16.
    N, C_IN, H, W = 2, 3, 32, 32
    x = jax.random.normal(kx, (N, C_IN, H, W), jnp.float32)
    params = init_params(kp, in_channels=C_IN, num_halfsize=4, num_filters=16)
    packed = pack_params(params, N, H, W)

    fwd = jax.jit(lambda xx: discriminator_forward(xx, packed))
    out = jax.block_until_ready(fwd(x))

    ref = jax.block_until_ready(jax.jit(lambda xx: reference_forward(xx, params))(x))
    assert out.shape == ref.shape, (out.shape, ref.shape)
    # Both paths use bf16 MXU operands + bf16 inter-layer activations with f32 accumulation;
    # only summation order / rare one-ulp bf16 boundary flips differ, well below 2e-3 here.
    err = float(jnp.max(jnp.abs(out - ref)))
    assert jnp.allclose(out, ref, rtol=2e-3, atol=2e-3), err

    print("KERNEL_OK")
</pallas_src>

<mosaic_0001>
module attributes {stable_mosaic.version = 11 : i64} {
  func.func @kernel(%arg0: i32, %arg1: memref<68x102xbf16, #tpu.memory_space<vmem>>, %arg2: memref<96x68xbf16, #tpu.memory_space<vmem>>, %arg3: memref<306x256xbf16, #tpu.memory_space<vmem>>, %arg4: memref<1x256xf32, #tpu.memory_space<vmem>>, %arg5: memref<48x36xbf16, #tpu.memory_space<vmem>>, %arg6: memref<864x256xbf16, #tpu.memory_space<vmem>>, %arg7: memref<1x256xf32, #tpu.memory_space<vmem>>, %arg8: memref<256x32xf32, #tpu.memory_space<vmem>>, %arg9: memref<32x256xf32, #tpu.memory_space<vmem>>, %arg10: memref<1x32xf32, #tpu.memory_space<vmem>>, %arg11: memref<1x32xf32, #tpu.memory_space<vmem>>, %arg12: memref<24x20xbf16, #tpu.memory_space<vmem>>, %arg13: memref<960x256xbf16, #tpu.memory_space<vmem>>, %arg14: memref<1x256xf32, #tpu.memory_space<vmem>>, %arg15: memref<256x64xf32, #tpu.memory_space<vmem>>, %arg16: memref<64x256xf32, #tpu.memory_space<vmem>>, %arg17: memref<1x64xf32, #tpu.memory_space<vmem>>, %arg18: memref<1x64xf32, #tpu.memory_space<vmem>>, %arg19: memref<12x12xbf16, #tpu.memory_space<vmem>>, %arg20: memref<1152x2xbf16, #tpu.memory_space<vmem>>, %arg21: memref<1x2xf32, #tpu.memory_space<vmem>>, %arg22: memref<4x2xf32, #tpu.memory_space<vmem>>, %arg23: memref<36x288xf32, #tpu.memory_space<vmem>>, %arg24: memref<20x320xf32, #tpu.memory_space<vmem>>, %arg25: memref<12x384xf32, #tpu.memory_space<vmem>>) attributes {dimension_semantics = [#tpu.dimension_semantics<arbitrary>], iteration_bounds = array<i64: 1>, scalar_prefetch = 0 : i64, scratch_operands = 3 : i64, tpu.core_type = #tpu.core_type<tc>, window_params = [{pipeline_mode = #tpu.pipeline_mode<synchronous>, transform_indices = @transform_0, window_bounds = array<i64: 68, 102>}, {pipeline_mode = #tpu.pipeline_mode<synchronous>, transform_indices = @transform_1, window_bounds = array<i64: 96, 68>}, {pipeline_mode = #tpu.pipeline_mode<synchronous>, transform_indices = @transform_2, window_bounds = array<i64: 306, 256>}, {pipeline_mode = #tpu.pipeline_mode<synchronous>, transform_indices = @transform_3, window_bounds = array<i64: 1, 256>}, {pipeline_mode = #tpu.pipeline_mode<synchronous>, transform_indices = @transform_4, window_bounds = array<i64: 48, 36>}, {pipeline_mode = #tpu.pipeline_mode<synchronous>, transform_indices = @transform_5, window_bounds = array<i64: 864, 256>}, {pipeline_mode = #tpu.pipeline_mode<synchronous>, transform_indices = @transform_6, window_bounds = array<i64: 1, 256>}, {pipeline_mode = #tpu.pipeline_mode<synchronous>, transform_indices = @transform_7, window_bounds = array<i64: 256, 32>}, {pipeline_mode = #tpu.pipeline_mode<synchronous>, transform_indices = @transform_8, window_bounds = array<i64: 32, 256>}, {pipeline_mode = #tpu.pipeline_mode<synchronous>, transform_indices = @transform_9, window_bounds = array<i64: 1, 32>}, {pipeline_mode = #tpu.pipeline_mode<synchronous>, transform_indices = @transform_10, window_bounds = array<i64: 1, 32>}, {pipeline_mode = #tpu.pipeline_mode<synchronous>, transform_indices = @transform_11, window_bounds = array<i64: 24, 20>}, {pipeline_mode = #tpu.pipeline_mode<synchronous>, transform_indices = @transform_12, window_bounds = array<i64: 960, 256>}, {pipeline_mode = #tpu.pipeline_mode<synchronous>, transform_indices = @transform_13, window_bounds = array<i64: 1, 256>}, {pipeline_mode = #tpu.pipeline_mode<synchronous>, transform_indices = @transform_14, window_bounds = array<i64: 256, 64>}, {pipeline_mode = #tpu.pipeline_mode<synchronous>, transform_indices = @transform_15, window_bounds = array<i64: 64, 256>}, {pipeline_mode = #tpu.pipeline_mode<synchronous>, transform_indices = @transform_16, window_bounds = array<i64: 1, 64>}, {pipeline_mode = #tpu.pipeline_mode<synchronous>, transform_indices = @transform_17, window_bounds = array<i64: 1, 64>}, {pipeline_mode = #tpu.pipeline_mode<synchronous>, transform_indices = @transform_18, window_bounds = array<i64: 12, 12>}, {pipeline_mode = #tpu.pipeline_mode<synchronous>, transform_indices = @transform_19, window_bounds = array<i64: 1152, 2>}, {pipeline_mode = #tpu.pipeline_mode<synchronous>, transform_indices = @transform_20, window_bounds = array<i64: 1, 2>}, {pipeline_mode = #tpu.pipeline_mode<synchronous>, transform_indices = @transform_21, window_bounds = array<i64: 4, 2>}]} {
    %cst = arith.constant 0.000000e+00 : f32
    %0 = vector.broadcast %cst : f32 to vector<36x288xf32>
    %c0 = arith.constant 0 : index
    %c0_0 = arith.constant 0 : index
    %1 = vector.load %arg23[%c0, %c0_0] : memref<36x288xf32, #tpu.memory_space<vmem>>, vector<36x288xf32>
    tpu.vector_store %arg23[%c0, %c0_0], %0 {strides = array<i32>} : memref<36x288xf32, #tpu.memory_space<vmem>>, vector<36x288xf32>,
    %cst_1 = arith.constant 0.000000e+00 : f32
    %2 = vector.broadcast %cst_1 : f32 to vector<20x320xf32>
    %c0_2 = arith.constant 0 : index
    %c0_3 = arith.constant 0 : index
    %3 = vector.load %arg24[%c0_2, %c0_3] : memref<20x320xf32, #tpu.memory_space<vmem>>, vector<20x320xf32>
    tpu.vector_store %arg24[%c0_2, %c0_3], %2 {strides = array<i32>} : memref<20x320xf32, #tpu.memory_space<vmem>>, vector<20x320xf32>,
    %cst_4 = arith.constant 0.000000e+00 : f32
    %4 = vector.broadcast %cst_4 : f32 to vector<12x384xf32>
    %c0_5 = arith.constant 0 : index
    %c0_6 = arith.constant 0 : index
    %5 = vector.load %arg25[%c0_5, %c0_6] : memref<12x384xf32, #tpu.memory_space<vmem>>, vector<12x384xf32>
    tpu.vector_store %arg25[%c0_5, %c0_6], %4 {strides = array<i32>} : memref<12x384xf32, #tpu.memory_space<vmem>>, vector<12x384xf32>,
    %c0_7 = arith.constant 0 : index
    %c0_8 = arith.constant 0 : index
    %6 = vector.load %arg1[%c0_7, %c0_8] : memref<68x102xbf16, #tpu.memory_space<vmem>>, vector<68x102xbf16>
    %cst_9 = arith.constant 0.000000e+00 : f32
    %7 = vector.broadcast %cst_9 : f32 to vector<32x256xf32>
    %c0_10 = arith.constant 0 : index
    %c0_11 = arith.constant 0 : index
    %8 = vector.load %arg2[%c0_10, %c0_11] : memref<96x68xbf16, #tpu.memory_space<vmem>>, vector<32x68xbf16>
    %cst_12 = arith.constant dense<0.000000e+00> : vector<32x102xf32>
    %9 = tpu.matmul %8, %6, %cst_12 {dimension_numbers = #tpu.dot_dimension_numbers<[1], [0], [0], [1], [0, 0, 1, 1], [], []>} : vector<32x68xbf16>, vector<68x102xbf16>, vector<32x102xf32> -> vector<32x102xf32>
    %10 = arith.truncf %9 : vector<32x102xf32> to vector<32x102xbf16>
    %c0_13 = arith.constant 0 : index
    %c0_14 = arith.constant 0 : index
    %11 = vector.load %arg3[%c0_13, %c0_14] : memref<306x256xbf16, #tpu.memory_space<vmem>>, vector<102x256xbf16>
    %cst_15 = arith.constant dense<0.000000e+00> : vector<32x256xf32>
    %12 = tpu.matmul %10, %11, %cst_15 {dimension_numbers = #tpu.dot_dimension_numbers<[1], [0], [0], [1], [0, 0, 1, 1], [], []>} : vector<32x102xbf16>, vector<102x256xbf16>, vector<32x256xf32> -> vector<32x256xf32>
    %13 = arith.addf %7, %12 : vector<32x256xf32>
    %c32 = arith.constant 32 : index
    %c0_16 = arith.constant 0 : index
    %14 = vector.load %arg2[%c32, %c0_16] : memref<96x68xbf16, #tpu.memory_space<vmem>>, vector<32x68xbf16>
    %cst_17 = arith.constant dense<0.000000e+00> : vector<32x102xf32>
    %15 = tpu.matmul %14, %6, %cst_17 {dimension_numbers = #tpu.dot_dimension_numbers<[1], [0], [0], [1], [0, 0, 1, 1], [], []>} : vector<32x68xbf16>, vector<68x102xbf16>, vector<32x102xf32> -> vector<32x102xf32>
    %16 = arith.truncf %15 : vector<32x102xf32> to vector<32x102xbf16>
    %c102 = arith.constant 102 : index
    %c0_18 = arith.constant 0 : index
    %17 = vector.load %arg3[%c102, %c0_18] : memref<306x256xbf16, #tpu.memory_space<vmem>>, vector<102x256xbf16>
    %cst_19 = arith.constant dense<0.000000e+00> : vector<32x256xf32>
    %18 = tpu.matmul %16, %17, %cst_19 {dimension_numbers = #tpu.dot_dimension_numbers<[1], [0], [0], [1], [0, 0, 1, 1], [], []>} : vector<32x102xbf16>, vector<102x256xbf16>, vector<32x256xf32> -> vector<32x256xf32>
    %19 = arith.addf %13, %18 : vector<32x256xf32>
    %c64 = arith.constant 64 : index
    %c0_20 = arith.constant 0 : index
    %20 = vector.load %arg2[%c64, %c0_20] : memref<96x68xbf16, #tpu.memory_space<vmem>>, vector<32x68xbf16>
    %cst_21 = arith.constant dense<0.000000e+00> : vector<32x102xf32>
    %21 = tpu.matmul %20, %6, %cst_21 {dimension_numbers = #tpu.dot_dimension_numbers<[1], [0], [0], [1], [0, 0, 1, 1], [], []>} : vector<32x68xbf16>, vector<68x102xbf16>, vector<32x102xf32> -> vector<32x102xf32>
    %22 = arith.truncf %21 : vector<32x102xf32> to vector<32x102xbf16>
    %c204 = arith.constant 204 : index
    %c0_22 = arith.constant 0 : index
    %23 = vector.load %arg3[%c204, %c0_22] : memref<306x256xbf16, #tpu.memory_space<vmem>>, vector<102x256xbf16>
    %cst_23 = arith.constant dense<0.000000e+00> : vector<32x256xf32>
    %24 = tpu.matmul %22, %23, %cst_23 {dimension_numbers = #tpu.dot_dimension_numbers<[1], [0], [0], [1], [0, 0, 1, 1], [], []>} : vector<32x102xbf16>, vector<102x256xbf16>, vector<32x256xf32> -> vector<32x256xf32>
    %25 = arith.addf %19, %24 : vector<32x256xf32>
    %c0_24 = arith.constant 0 : index
    %c0_25 = arith.constant 0 : index
    %26 = vector.load %arg4[%c0_24, %c0_25] : memref<1x256xf32, #tpu.memory_space<vmem>>, vector<1x256xf32>
    %27 = vector.broadcast %26 : vector<1x256xf32> to vector<32x256xf32>
    %28 = arith.addf %25, %27 : vector<32x256xf32>
    %cst_26 = arith.constant 0.000000e+00 : f32
    %29 = vector.broadcast %cst_26 : f32 to vector<32x256xf32>
    %30 = arith.cmpf oge, %28, %29 : vector<32x256xf32>
    %cst_27 = arith.constant 2.000000e-01 : f32
    %31 = vector.broadcast %cst_27 : f32 to vector<32x256xf32>
    %32 = arith.mulf %31, %28 : vector<32x256xf32>
    %33 = arith.select %30, %28, %32 : vector<32x256xi1>, vector<32x256xf32>
    %34 = vector.extract_strided_slice %33 {offsets = [0, 0], sizes = [16, 256], strides = [1, 1]} : vector<32x256xf32> to vector<16x256xf32>
    %c1 = arith.constant 1 : index
    %c16 = arith.constant 16 : index
    %35 = vector.load %arg23[%c1, %c16] : memref<36x288xf32, #tpu.memory_space<vmem>>, vector<16x256xf32>
    tpu.vector_store %arg23[%c1, %c16], %34 {strides = array<i32>} : memref<36x288xf32, #tpu.memory_space<vmem>>, vector<16x256xf32>,
    %36 = vector.extract_strided_slice %33 {offsets = [16, 0], sizes = [16, 256], strides = [1, 1]} : vector<32x256xf32> to vector<16x256xf32>
    %c19 = arith.constant 19 : index
    %c16_28 = arith.constant 16 : index
    %37 = vector.load %arg23[%c19, %c16_28] : memref<36x288xf32, #tpu.memory_space<vmem>>, vector<16x256xf32>
    tpu.vector_store %arg23[%c19, %c16_28], %36 {strides = array<i32>} : memref<36x288xf32, #tpu.memory_space<vmem>>, vector<16x256xf32>,
    %c0_29 = arith.constant 0 : index
    %c0_30 = arith.constant 0 : index
    %38 = vector.load %arg23[%c0_29, %c0_30] : memref<36x288xf32, #tpu.memory_space<vmem>>, vector<36x288xf32>
    %39 = arith.truncf %38 : vector<36x288xf32> to vector<36x288xbf16>
    %cst_31 = arith.constant 0.000000e+00 : f32
    %40 = vector.broadcast %cst_31 : f32 to vector<16x256xf32>
    %c0_32 = arith.constant 0 : index
    %c0_33 = arith.constant 0 : index
    %41 = vector.load %arg5[%c0_32, %c0_33] : memref<48x36xbf16, #tpu.memory_space<vmem>>, vector<16x36xbf16>
    %cst_34 = arith.constant dense<0.000000e+00> : vector<16x288xf32>
    %42 = tpu.matmul %41, %39, %cst_34 {dimension_numbers = #tpu.dot_dimension_numbers<[1], [0], [0], [1], [0, 0, 1, 1], [], []>} : vector<16x36xbf16>, vector<36x288xbf16>, vector<16x288xf32> -> vector<16x288xf32>
    %43 = arith.truncf %42 : vector<16x288xf32> to vector<16x288xbf16>
    %c0_35 = arith.constant 0 : index
    %c0_36 = arith.constant 0 : index
    %44 = vector.load %arg6[%c0_35, %c0_36] : memref<864x256xbf16, #tpu.memory_space<vmem>>, vector<288x256xbf16>
    %cst_37 = arith.constant dense<0.000000e+00> : vector<16x256xf32>
    %45 = tpu.matmul %43, %44, %cst_37 {dimension_numbers = #tpu.dot_dimension_numbers<[1], [0], [0], [1], [0, 0, 1, 1], [], []>} : vector<16x288xbf16>, vector<288x256xbf16>, vector<16x256xf32> -> vector<16x256xf32>
    %46 = arith.addf %40, %45 : vector<16x256xf32>
    %c16_38 = arith.constant 16 : index
    %c0_39 = arith.constant 0 : index
    %47 = vector.load %arg5[%c16_38, %c0_39] : memref<48x36xbf16, #tpu.memory_space<vmem>>, vector<16x36xbf16>
    %cst_40 = arith.constant dense<0.000000e+00> : vector<16x288xf32>
    %48 = tpu.matmul %47, %39, %cst_40 {dimension_numbers = #tpu.dot_dimension_numbers<[1], [0], [0], [1], [0, 0, 1, 1], [], []>} : vector<16x36xbf16>, vector<36x288xbf16>, vector<16x288xf32> -> vector<16x288xf32>
    %49 = arith.truncf %48 : vector<16x288xf32> to vector<16x288xbf16>
    %c288 = arith.constant 288 : index
    %c0_41 = arith.constant 0 : index
    %50 = vector.load %arg6[%c288, %c0_41] : memref<864x256xbf16, #tpu.memory_space<vmem>>, vector<288x256xbf16>
    %cst_42 = arith.constant dense<0.000000e+00> : vector<16x256xf32>
    %51 = tpu.matmul %49, %50, %cst_42 {dimension_numbers = #tpu.dot_dimension_numbers<[1], [0], [0], [1], [0, 0, 1, 1], [], []>} : vector<16x288xbf16>, vector<288x256xbf16>, vector<16x256xf32> -> vector<16x256xf32>
    %52 = arith.addf %46, %51 : vector<16x256xf32>
    %c32_43 = arith.constant 32 : index
    %c0_44 = arith.constant 0 : index
    %53 = vector.load %arg5[%c32_43, %c0_44] : memref<48x36xbf16, #tpu.memory_space<vmem>>, vector<16x36xbf16>
    %cst_45 = arith.constant dense<0.000000e+00> : vector<16x288xf32>
    %54 = tpu.matmul %53, %39, %cst_45 {dimension_numbers = #tpu.dot_dimension_numbers<[1], [0], [0], [1], [0, 0, 1, 1], [], []>} : vector<16x36xbf16>, vector<36x288xbf16>, vector<16x288xf32> -> vector<16x288xf32>
    %55 = arith.truncf %54 : vector<16x288xf32> to vector<16x288xbf16>
    %c576 = arith.constant 576 : index
    %c0_46 = arith.constant 0 : index
    %56 = vector.load %arg6[%c576, %c0_46] : memref<864x256xbf16, #tpu.memory_space<vmem>>, vector<288x256xbf16>
    %cst_47 = arith.constant dense<0.000000e+00> : vector<16x256xf32>
    %57 = tpu.matmul %55, %56, %cst_47 {dimension_numbers = #tpu.dot_dimension_numbers<[1], [0], [0], [1], [0, 0, 1, 1], [], []>} : vector<16x288xbf16>, vector<288x256xbf16>, vector<16x256xf32> -> vector<16x256xf32>
    %58 = arith.addf %52, %57 : vector<16x256xf32>
    %c0_48 = arith.constant 0 : index
    %c0_49 = arith.constant 0 : index
    %59 = vector.load %arg7[%c0_48, %c0_49] : memref<1x256xf32, #tpu.memory_space<vmem>>, vector<1x256xf32>
    %60 = vector.broadcast %59 : vector<1x256xf32> to vector<16x256xf32>
    %61 = arith.addf %58, %60 : vector<16x256xf32>
    %c0_50 = arith.constant 0 : index
    %c0_51 = arith.constant 0 : index
    %62 = vector.load %arg8[%c0_50, %c0_51] : memref<256x32xf32, #tpu.memory_space<vmem>>, vector<256x32xf32>
    %c0_52 = arith.constant 0 : index
    %c0_53 = arith.constant 0 : index
    %63 = vector.load %arg9[%c0_52, %c0_53] : memref<32x256xf32, #tpu.memory_space<vmem>>, vector<32x256xf32>
    %cst_54 = arith.constant dense<0.000000e+00> : vector<256xf32>
    %64 = vector.multi_reduction <add>, %61, %cst_54 [0] : vector<16x256xf32> to vector<256xf32>
    %65 = vector.shape_cast %64 : vector<256xf32> to vector<1x256xf32>
    %cst_55 = arith.constant dense<0.000000e+00> : vector<1x32xf32>
    %66 = tpu.matmul %65, %62, %cst_55 {dimension_numbers = #tpu.dot_dimension_numbers<[1], [0], [0], [1], [0, 0, 1, 1], [], []>} : vector<1x256xf32>, vector<256x32xf32>, vector<1x32xf32> -> vector<1x32xf32>
    %cst_56 = arith.constant 7.812500e-03 : f32
    %67 = vector.broadcast %cst_56 : f32 to vector<1x32xf32>
    %68 = arith.mulf %66, %67 : vector<1x32xf32>
    %cst_57 = arith.constant dense<0.000000e+00> : vector<1x256xf32>
    %69 = tpu.matmul %68, %63, %cst_57 {dimension_numbers = #tpu.dot_dimension_numbers<[1], [0], [0], [1], [0, 0, 1, 1], [], []>} : vector<1x32xf32>, vector<32x256xf32>, vector<1x256xf32> -> vector<1x256xf32>
    %70 = vector.broadcast %69 : vector<1x256xf32> to vector<16x256xf32>
    %71 = arith.subf %61, %70 : vector<16x256xf32>
    %72 = arith.mulf %71, %71 : vector<16x256xf32>
    %cst_58 = arith.constant dense<0.000000e+00> : vector<256xf32>
    %73 = vector.multi_reduction <add>, %72, %cst_58 [0] : vector<16x256xf32> to vector<256xf32>
    %74 = vector.shape_cast %73 : vector<256xf32> to vector<1x256xf32>
    %cst_59 = arith.constant dense<0.000000e+00> : vector<1x32xf32>
    %75 = tpu.matmul %74, %62, %cst_59 {dimension_numbers = #tpu.dot_dimension_numbers<[1], [0], [0], [1], [0, 0, 1, 1], [], []>} : vector<1x256xf32>, vector<256x32xf32>, vector<1x32xf32> -> vector<1x32xf32>
    %cst_60 = arith.constant 7.812500e-03 : f32
    %76 = vector.broadcast %cst_60 : f32 to vector<1x32xf32>
    %77 = arith.mulf %75, %76 : vector<1x32xf32>
    %cst_61 = arith.constant 9.99999974E-6 : f32
    %78 = vector.broadcast %cst_61 : f32 to vector<1x32xf32>
    %79 = arith.addf %77, %78 : vector<1x32xf32>
    %80 = math.rsqrt %79 : vector<1x32xf32>
    %c0_62 = arith.constant 0 : index
    %c0_63 = arith.constant 0 : index
    %81 = vector.load %arg10[%c0_62, %c0_63] : memref<1x32xf32, #tpu.memory_space<vmem>>, vector<1x32xf32>
    %82 = arith.mulf %81, %80 : vector<1x32xf32>
    %cst_64 = arith.constant dense<0.000000e+00> : vector<1x256xf32>
    %83 = tpu.matmul %82, %63, %cst_64 {dimension_numbers = #tpu.dot_dimension_numbers<[1], [0], [0], [1], [0, 0, 1, 1], [], []>} : vector<1x32xf32>, vector<32x256xf32>, vector<1x256xf32> -> vector<1x256xf32>
    %c0_65 = arith.constant 0 : index
    %c0_66 = arith.constant 0 : index
    %84 = vector.load %arg11[%c0_65, %c0_66] : memref<1x32xf32, #tpu.memory_space<vmem>>, vector<1x32xf32>
    %cst_67 = arith.constant dense<0.000000e+00> : vector<1x256xf32>
    %85 = tpu.matmul %84, %63, %cst_67 {dimension_numbers = #tpu.dot_dimension_numbers<[1], [0], [0], [1], [0, 0, 1, 1], [], []>} : vector<1x32xf32>, vector<32x256xf32>, vector<1x256xf32> -> vector<1x256xf32>
    %86 = vector.broadcast %83 : vector<1x256xf32> to vector<16x256xf32>
    %87 = arith.mulf %71, %86 : vector<16x256xf32>
    %88 = vector.broadcast %85 : vector<1x256xf32> to vector<16x256xf32>
    %89 = arith.addf %87, %88 : vector<16x256xf32>
    %cst_68 = arith.constant 0.000000e+00 : f32
    %90 = vector.broadcast %cst_68 : f32 to vector<16x256xf32>
    %91 = arith.cmpf oge, %89, %90 : vector<16x256xf32>
    %cst_69 = arith.constant 2.000000e-01 : f32
    %92 = vector.broadcast %cst_69 : f32 to vector<16x256xf32>
    %93 = arith.mulf %92, %89 : vector<16x256xf32>
    %94 = arith.select %91, %89, %93 : vector<16x256xi1>, vector<16x256xf32>
    %95 = vector.extract_strided_slice %94 {offsets = [0, 0], sizes = [8, 256], strides = [1, 1]} : vector<16x256xf32> to vector<8x256xf32>
    %c1_70 = arith.constant 1 : index
    %c32_71 = arith.constant 32 : index
    %96 = vector.load %arg24[%c1_70, %c32_71] : memref<20x320xf32, #tpu.memory_space<vmem>>, vector<8x256xf32>
    tpu.vector_store %arg24[%c1_70, %c32_71], %95 {strides = array<i32>} : memref<20x320xf32, #tpu.memory_space<vmem>>, vector<8x256xf32>,
    %97 = vector.extract_strided_slice %94 {offsets = [8, 0], sizes = [8, 256], strides = [1, 1]} : vector<16x256xf32> to vector<8x256xf32>
    %c11 = arith.constant 11 : index
    %c32_72 = arith.constant 32 : index
    %98 = vector.load %arg24[%c11, %c32_72] : memref<20x320xf32, #tpu.memory_space<vmem>>, vector<8x256xf32>
    tpu.vector_store %arg24[%c11, %c32_72], %97 {strides = array<i32>} : memref<20x320xf32, #tpu.memory_space<vmem>>, vector<8x256xf32>,
    %c0_73 = arith.constant 0 : index
    %c0_74 = arith.constant 0 : index
    %99 = vector.load %arg24[%c0_73, %c0_74] : memref<20x320xf32, #tpu.memory_space<vmem>>, vector<20x320xf32>
    %100 = arith.truncf %99 : vector<20x320xf32> to vector<20x320xbf16>
    %cst_75 = arith.constant 0.000000e+00 : f32
    %101 = vector.broadcast %cst_75 : f32 to vector<8x256xf32>
    %c0_76 = arith.constant 0 : index
    %c0_77 = arith.constant 0 : index
    %102 = vector.load %arg12[%c0_76, %c0_77] : memref<24x20xbf16, #tpu.memory_space<vmem>>, vector<8x20xbf16>
    %cst_78 = arith.constant dense<0.000000e+00> : vector<8x320xf32>
    %103 = tpu.matmul %102, %100, %cst_78 {dimension_numbers = #tpu.dot_dimension_numbers<[1], [0], [0], [1], [0, 0, 1, 1], [], []>} : vector<8x20xbf16>, vector<20x320xbf16>, vector<8x320xf32> -> vector<8x320xf32>
    %104 = arith.truncf %103 : vector<8x320xf32> to vector<8x320xbf16>
    %c0_79 = arith.constant 0 : index
    %c0_80 = arith.constant 0 : index
    %105 = vector.load %arg13[%c0_79, %c0_80] : memref<960x256xbf16, #tpu.memory_space<vmem>>, vector<320x256xbf16>
    %cst_81 = arith.constant dense<0.000000e+00> : vector<8x256xf32>
    %106 = tpu.matmul %104, %105, %cst_81 {dimension_numbers = #tpu.dot_dimension_numbers<[1], [0], [0], [1], [0, 0, 1, 1], [], []>} : vector<8x320xbf16>, vector<320x256xbf16>, vector<8x256xf32> -> vector<8x256xf32>
    %107 = arith.addf %101, %106 : vector<8x256xf32>
    %c8 = arith.constant 8 : index
    %c0_82 = arith.constant 0 : index
    %108 = vector.load %arg12[%c8, %c0_82] : memref<24x20xbf16, #tpu.memory_space<vmem>>, vector<8x20xbf16>
    %cst_83 = arith.constant dense<0.000000e+00> : vector<8x320xf32>
    %109 = tpu.matmul %108, %100, %cst_83 {dimension_numbers = #tpu.dot_dimension_numbers<[1], [0], [0], [1], [0, 0, 1, 1], [], []>} : vector<8x20xbf16>, vector<20x320xbf16>, vector<8x320xf32> -> vector<8x320xf32>
    %110 = arith.truncf %109 : vector<8x320xf32> to vector<8x320xbf16>
    %c320 = arith.constant 320 : index
    %c0_84 = arith.constant 0 : index
    %111 = vector.load %arg13[%c320, %c0_84] : memref<960x256xbf16, #tpu.memory_space<vmem>>, vector<320x256xbf16>
    %cst_85 = arith.constant dense<0.000000e+00> : vector<8x256xf32>
    %112 = tpu.matmul %110, %111, %cst_85 {dimension_numbers = #tpu.dot_dimension_numbers<[1], [0], [0], [1], [0, 0, 1, 1], [], []>} : vector<8x320xbf16>, vector<320x256xbf16>, vector<8x256xf32> -> vector<8x256xf32>
    %113 = arith.addf %107, %112 : vector<8x256xf32>
    %c16_86 = arith.constant 16 : index
    %c0_87 = arith.constant 0 : index
    %114 = vector.load %arg12[%c16_86, %c0_87] : memref<24x20xbf16, #tpu.memory_space<vmem>>, vector<8x20xbf16>
    %cst_88 = arith.constant dense<0.000000e+00> : vector<8x320xf32>
    %115 = tpu.matmul %114, %100, %cst_88 {dimension_numbers = #tpu.dot_dimension_numbers<[1], [0], [0], [1], [0, 0, 1, 1], [], []>} : vector<8x20xbf16>, vector<20x320xbf16>, vector<8x320xf32> -> vector<8x320xf32>
    %116 = arith.truncf %115 : vector<8x320xf32> to vector<8x320xbf16>
    %c640 = arith.constant 640 : index
    %c0_89 = arith.constant 0 : index
    %117 = vector.load %arg13[%c640, %c0_89] : memref<960x256xbf16, #tpu.memory_space<vmem>>, vector<320x256xbf16>
    %cst_90 = arith.constant dense<0.000000e+00> : vector<8x256xf32>
    %118 = tpu.matmul %116, %117, %cst_90 {dimension_numbers = #tpu.dot_dimension_numbers<[1], [0], [0], [1], [0, 0, 1, 1], [], []>} : vector<8x320xbf16>, vector<320x256xbf16>, vector<8x256xf32> -> vector<8x256xf32>
    %119 = arith.addf %113, %118 : vector<8x256xf32>
    %c0_91 = arith.constant 0 : index
    %c0_92 = arith.constant 0 : index
    %120 = vector.load %arg14[%c0_91, %c0_92] : memref<1x256xf32, #tpu.memory_space<vmem>>, vector<1x256xf32>
    %121 = vector.broadcast %120 : vector<1x256xf32> to vector<8x256xf32>
    %122 = arith.addf %119, %121 : vector<8x256xf32>
    %c0_93 = arith.constant 0 : index
    %c0_94 = arith.constant 0 : index
    %123 = vector.load %arg15[%c0_93, %c0_94] : memref<256x64xf32, #tpu.memory_space<vmem>>, vector<256x64xf32>
    %c0_95 = arith.constant 0 : index
    %c0_96 = arith.constant 0 : index
    %124 = vector.load %arg16[%c0_95, %c0_96] : memref<64x256xf32, #tpu.memory_space<vmem>>, vector<64x256xf32>
    %cst_97 = arith.constant dense<0.000000e+00> : vector<256xf32>
    %125 = vector.multi_reduction <add>, %122, %cst_97 [0] : vector<8x256xf32> to vector<256xf32>
    %126 = vector.shape_cast %125 : vector<256xf32> to vector<1x256xf32>
    %cst_98 = arith.constant dense<0.000000e+00> : vector<1x64xf32>
    %127 = tpu.matmul %126, %123, %cst_98 {dimension_numbers = #tpu.dot_dimension_numbers<[1], [0], [0], [1], [0, 0, 1, 1], [], []>} : vector<1x256xf32>, vector<256x64xf32>, vector<1x64xf32> -> vector<1x64xf32>
    %cst_99 = arith.constant 3.125000e-02 : f32
    %128 = vector.broadcast %cst_99 : f32 to vector<1x64xf32>
    %129 = arith.mulf %127, %128 : vector<1x64xf32>
    %cst_100 = arith.constant dense<0.000000e+00> : vector<1x256xf32>
    %130 = tpu.matmul %129, %124, %cst_100 {dimension_numbers = #tpu.dot_dimension_numbers<[1], [0], [0], [1], [0, 0, 1, 1], [], []>} : vector<1x64xf32>, vector<64x256xf32>, vector<1x256xf32> -> vector<1x256xf32>
    %131 = vector.broadcast %130 : vector<1x256xf32> to vector<8x256xf32>
    %132 = arith.subf %122, %131 : vector<8x256xf32>
    %133 = arith.mulf %132, %132 : vector<8x256xf32>
    %cst_101 = arith.constant dense<0.000000e+00> : vector<256xf32>
    %134 = vector.multi_reduction <add>, %133, %cst_101 [0] : vector<8x256xf32> to vector<256xf32>
    %135 = vector.shape_cast %134 : vector<256xf32> to vector<1x256xf32>
    %cst_102 = arith.constant dense<0.000000e+00> : vector<1x64xf32>
    %136 = tpu.matmul %135, %123, %cst_102 {dimension_numbers = #tpu.dot_dimension_numbers<[1], [0], [0], [1], [0, 0, 1, 1], [], []>} : vector<1x256xf32>, vector<256x64xf32>, vector<1x64xf32> -> vector<1x64xf32>
    %cst_103 = arith.constant 3.125000e-02 : f32
    %137 = vector.broadcast %cst_103 : f32 to vector<1x64xf32>
    %138 = arith.mulf %136, %137 : vector<1x64xf32>
    %cst_104 = arith.constant 9.99999974E-6 : f32
    %139 = vector.broadcast %cst_104 : f32 to vector<1x64xf32>
    %140 = arith.addf %138, %139 : vector<1x64xf32>
    %141 = math.rsqrt %140 : vector<1x64xf32>
    %c0_105 = arith.constant 0 : index
    %c0_106 = arith.constant 0 : index
    %142 = vector.load %arg17[%c0_105, %c0_106] : memref<1x64xf32, #tpu.memory_space<vmem>>, vector<1x64xf32>
    %143 = arith.mulf %142, %141 : vector<1x64xf32>
    %cst_107 = arith.constant dense<0.000000e+00> : vector<1x256xf32>
    %144 = tpu.matmul %143, %124, %cst_107 {dimension_numbers = #tpu.dot_dimension_numbers<[1], [0], [0], [1], [0, 0, 1, 1], [], []>} : vector<1x64xf32>, vector<64x256xf32>, vector<1x256xf32> -> vector<1x256xf32>
    %c0_108 = arith.constant 0 : index
    %c0_109 = arith.constant 0 : index
    %145 = vector.load %arg18[%c0_108, %c0_109] : memref<1x64xf32, #tpu.memory_space<vmem>>, vector<1x64xf32>
    %cst_110 = arith.constant dense<0.000000e+00> : vector<1x256xf32>
    %146 = tpu.matmul %145, %124, %cst_110 {dimension_numbers = #tpu.dot_dimension_numbers<[1], [0], [0], [1], [0, 0, 1, 1], [], []>} : vector<1x64xf32>, vector<64x256xf32>, vector<1x256xf32> -> vector<1x256xf32>
    %147 = vector.broadcast %144 : vector<1x256xf32> to vector<8x256xf32>
    %148 = arith.mulf %132, %147 : vector<8x256xf32>
    %149 = vector.broadcast %146 : vector<1x256xf32> to vector<8x256xf32>
    %150 = arith.addf %148, %149 : vector<8x256xf32>
    %cst_111 = arith.constant 0.000000e+00 : f32
    %151 = vector.broadcast %cst_111 : f32 to vector<8x256xf32>
    %152 = arith.cmpf oge, %150, %151 : vector<8x256xf32>
    %cst_112 = arith.constant 2.000000e-01 : f32
    %153 = vector.broadcast %cst_112 : f32 to vector<8x256xf32>
    %154 = arith.mulf %153, %150 : vector<8x256xf32>
    %155 = arith.select %152, %150, %154 : vector<8x256xi1>, vector<8x256xf32>
    %156 = vector.extract_strided_slice %155 {offsets = [0, 0], sizes = [4, 256], strides = [1, 1]} : vector<8x256xf32> to vector<4x256xf32>
    %c1_113 = arith.constant 1 : index
    %c64_114 = arith.constant 64 : index
    %157 = vector.load %arg25[%c1_113, %c64_114] : memref<12x384xf32, #tpu.memory_space<vmem>>, vector<4x256xf32>
    tpu.vector_store %arg25[%c1_113, %c64_114], %156 {strides = array<i32>} : memref<12x384xf32, #tpu.memory_space<vmem>>, vector<4x256xf32>,
    %158 = vector.extract_strided_slice %155 {offsets = [4, 0], sizes = [4, 256], strides = [1, 1]} : vector<8x256xf32> to vector<4x256xf32>
    %c7 = arith.constant 7 : index
    %c64_115 = arith.constant 64 : index
    %159 = vector.load %arg25[%c7, %c64_115] : memref<12x384xf32, #tpu.memory_space<vmem>>, vector<4x256xf32>
    tpu.vector_store %arg25[%c7, %c64_115], %158 {strides = array<i32>} : memref<12x384xf32, #tpu.memory_space<vmem>>, vector<4x256xf32>,
    %c0_116 = arith.constant 0 : index
    %c0_117 = arith.constant 0 : index
    %160 = vector.load %arg25[%c0_116, %c0_117] : memref<12x384xf32, #tpu.memory_space<vmem>>, vector<12x384xf32>
    %161 = arith.truncf %160 : vector<12x384xf32> to vector<12x384xbf16>
    %cst_118 = arith.constant 0.000000e+00 : f32
    %162 = vector.broadcast %cst_118 : f32 to vector<4x2xf32>
    %c0_119 = arith.constant 0 : index
    %c0_120 = arith.constant 0 : index
    %163 = vector.load %arg19[%c0_119, %c0_120] : memref<12x12xbf16, #tpu.memory_space<vmem>>, vector<4x12xbf16>
    %cst_121 = arith.constant dense<0.000000e+00> : vector<4x384xf32>
    %164 = tpu.matmul %163, %161, %cst_121 {dimension_numbers = #tpu.dot_dimension_numbers<[1], [0], [0], [1], [0, 0, 1, 1], [], []>} : vector<4x12xbf16>, vector<12x384xbf16>, vector<4x384xf32> -> vector<4x384xf32>
    %165 = arith.truncf %164 : vector<4x384xf32> to vector<4x384xbf16>
    %c0_122 = arith.constant 0 : index
    %c0_123 = arith.constant 0 : index
    %166 = vector.load %arg20[%c0_122, %c0_123] : memref<1152x2xbf16, #tpu.memory_space<vmem>>, vector<384x2xbf16>
    %cst_124 = arith.constant dense<0.000000e+00> : vector<4x2xf32>
    %167 = tpu.matmul %165, %166, %cst_124 {dimension_numbers = #tpu.dot_dimension_numbers<[1], [0], [0], [1], [0, 0, 1, 1], [], []>} : vector<4x384xbf16>, vector<384x2xbf16>, vector<4x2xf32> -> vector<4x2xf32>
    %168 = arith.addf %162, %167 : vector<4x2xf32>
    %c4 = arith.constant 4 : index
    %c0_125 = arith.constant 0 : index
    %169 = vector.load %arg19[%c4, %c0_125] : memref<12x12xbf16, #tpu.memory_space<vmem>>, vector<4x12xbf16>
    %cst_126 = arith.constant dense<0.000000e+00> : vector<4x384xf32>
    %170 = tpu.matmul %169, %161, %cst_126 {dimension_numbers = #tpu.dot_dimension_numbers<[1], [0], [0], [1], [0, 0, 1, 1], [], []>} : vector<4x12xbf16>, vector<12x384xbf16>, vector<4x384xf32> -> vector<4x384xf32>
    %171 = arith.truncf %170 : vector<4x384xf32> to vector<4x384xbf16>
    %c384 = arith.constant 384 : index
    %c0_127 = arith.constant 0 : index
    %172 = vector.load %arg20[%c384, %c0_127] : memref<1152x2xbf16, #tpu.memory_space<vmem>>, vector<384x2xbf16>
    %cst_128 = arith.constant dense<0.000000e+00> : vector<4x2xf32>
    %173 = tpu.matmul %171, %172, %cst_128 {dimension_numbers = #tpu.dot_dimension_numbers<[1], [0], [0], [1], [0, 0, 1, 1], [], []>} : vector<4x384xbf16>, vector<384x2xbf16>, vector<4x2xf32> -> vector<4x2xf32>
    %174 = arith.addf %168, %173 : vector<4x2xf32>
    %c8_129 = arith.constant 8 : index
    %c0_130 = arith.constant 0 : index
    %175 = vector.load %arg19[%c8_129, %c0_130] : memref<12x12xbf16, #tpu.memory_space<vmem>>, vector<4x12xbf16>
    %cst_131 = arith.constant dense<0.000000e+00> : vector<4x384xf32>
    %176 = tpu.matmul %175, %161, %cst_131 {dimension_numbers = #tpu.dot_dimension_numbers<[1], [0], [0], [1], [0, 0, 1, 1], [], []>} : vector<4x12xbf16>, vector<12x384xbf16>, vector<4x384xf32> -> vector<4x384xf32>
    %177 = arith.truncf %176 : vector<4x384xf32> to vector<4x384xbf16>
    %c768 = arith.constant 768 : index
    %c0_132 = arith.constant 0 : index
    %178 = vector.load %arg20[%c768, %c0_132] : memref<1152x2xbf16, #tpu.memory_space<vmem>>, vector<384x2xbf16>
    %cst_133 = arith.constant dense<0.000000e+00> : vector<4x2xf32>
    %179 = tpu.matmul %177, %178, %cst_133 {dimension_numbers = #tpu.dot_dimension_numbers<[1], [0], [0], [1], [0, 0, 1, 1], [], []>} : vector<4x384xbf16>, vector<384x2xbf16>, vector<4x2xf32> -> vector<4x2xf32>
    %180 = arith.addf %174, %179 : vector<4x2xf32>
    %c0_134 = arith.constant 0 : index
    %c0_135 = arith.constant 0 : index
    %181 = vector.load %arg21[%c0_134, %c0_135] : memref<1x2xf32, #tpu.memory_space<vmem>>, vector<1x2xf32>
    %182 = vector.broadcast %181 : vector<1x2xf32> to vector<4x2xf32>
    %183 = arith.addf %180, %182 : vector<4x2xf32>
    %184 = arith.negf %183 : vector<4x2xf32>
    %185 = math.exp %184 : vector<4x2xf32>
    %cst_136 = arith.constant 1.000000e+00 : f32
    %186 = vector.broadcast %cst_136 : f32 to vector<4x2xf32>
    %187 = arith.addf %186, %185 : vector<4x2xf32>
    %188 = arith.divf %186, %187 : vector<4x2xf32>
    %c0_137 = arith.constant 0 : index
    %c0_138 = arith.constant 0 : index
    %189 = vector.load %arg22[%c0_137, %c0_138] : memref<4x2xf32, #tpu.memory_space<vmem>>, vector<4x2xf32>
    tpu.vector_store %arg22[%c0_137, %c0_138], %188 {strides = array<i32>} : memref<4x2xf32, #tpu.memory_space<vmem>>, vector<4x2xf32>,
    return
  }
  func.func @transform_0(%arg0: i32) -> (i32, i32) {
    %c0_i32 = arith.constant 0 : i32
    %c0_i32_0 = arith.constant 0 : i32
    %c0_i32_1 = arith.constant 0 : i32
    return %c0_i32, %c0_i32_0 : i32, i32
  }
  func.func @transform_1(%arg0: i32) -> (i32, i32) {
    %c0_i32 = arith.constant 0 : i32
    %c0_i32_0 = arith.constant 0 : i32
    %c0_i32_1 = arith.constant 0 : i32
    return %c0_i32, %c0_i32_0 : i32, i32
  }
  func.func @transform_2(%arg0: i32) -> (i32, i32) {
    %c0_i32 = arith.constant 0 : i32
    %c0_i32_0 = arith.constant 0 : i32
    %c0_i32_1 = arith.constant 0 : i32
    return %c0_i32, %c0_i32_0 : i32, i32
  }
  func.func @transform_3(%arg0: i32) -> (i32, i32) {
    %c0_i32 = arith.constant 0 : i32
    %c0_i32_0 = arith.constant 0 : i32
    %c0_i32_1 = arith.constant 0 : i32
    return %c0_i32, %c0_i32_0 : i32, i32
  }
  func.func @transform_4(%arg0: i32) -> (i32, i32) {
    %c0_i32 = arith.constant 0 : i32
    %c0_i32_0 = arith.constant 0 : i32
    %c0_i32_1 = arith.constant 0 : i32
    return %c0_i32, %c0_i32_0 : i32, i32
  }
  func.func @transform_5(%arg0: i32) -> (i32, i32) {
    %c0_i32 = arith.constant 0 : i32
    %c0_i32_0 = arith.constant 0 : i32
    %c0_i32_1 = arith.constant 0 : i32
    return %c0_i32, %c0_i32_0 : i32, i32
  }
  func.func @transform_6(%arg0: i32) -> (i32, i32) {
    %c0_i32 = arith.constant 0 : i32
    %c0_i32_0 = arith.constant 0 : i32
    %c0_i32_1 = arith.constant 0 : i32
    return %c0_i32, %c0_i32_0 : i32, i32
  }
  func.func @transform_7(%arg0: i32) -> (i32, i32) {
    %c0_i32 = arith.constant 0 : i32
    %c0_i32_0 = arith.constant 0 : i32
    %c0_i32_1 = arith.constant 0 : i32
    return %c0_i32, %c0_i32_0 : i32, i32
  }
  func.func @transform_8(%arg0: i32) -> (i32, i32) {
    %c0_i32 = arith.constant 0 : i32
    %c0_i32_0 = arith.constant 0 : i32
    %c0_i32_1 = arith.constant 0 : i32
    return %c0_i32, %c0_i32_0 : i32, i32
  }
  func.func @transform_9(%arg0: i32) -> (i32, i32) {
    %c0_i32 = arith.constant 0 : i32
    %c0_i32_0 = arith.constant 0 : i32
    %c0_i32_1 = arith.constant 0 : i32
    return %c0_i32, %c0_i32_0 : i32, i32
  }
  func.func @transform_10(%arg0: i32) -> (i32, i32) {
    %c0_i32 = arith.constant 0 : i32
    %c0_i32_0 = arith.constant 0 : i32
    %c0_i32_1 = arith.constant 0 : i32
    return %c0_i32, %c0_i32_0 : i32, i32
  }
  func.func @transform_11(%arg0: i32) -> (i32, i32) {
    %c0_i32 = arith.constant 0 : i32
    %c0_i32_0 = arith.constant 0 : i32
    %c0_i32_1 = arith.constant 0 : i32
    return %c0_i32, %c0_i32_0 : i32, i32
  }
  func.func @transform_12(%arg0: i32) -> (i32, i32) {
    %c0_i32 = arith.constant 0 : i32
    %c0_i32_0 = arith.constant 0 : i32
    %c0_i32_1 = arith.constant 0 : i32
    return %c0_i32, %c0_i32_0 : i32, i32
  }
  func.func @transform_13(%arg0: i32) -> (i32, i32) {
    %c0_i32 = arith.constant 0 : i32
    %c0_i32_0 = arith.constant 0 : i32
    %c0_i32_1 = arith.constant 0 : i32
    return %c0_i32, %c0_i32_0 : i32, i32
  }
  func.func @transform_14(%arg0: i32) -> (i32, i32) {
    %c0_i32 = arith.constant 0 : i32
    %c0_i32_0 = arith.constant 0 : i32
    %c0_i32_1 = arith.constant 0 : i32
    return %c0_i32, %c0_i32_0 : i32, i32
  }
  func.func @transform_15(%arg0: i32) -> (i32, i32) {
    %c0_i32 = arith.constant 0 : i32
    %c0_i32_0 = arith.constant 0 : i32
    %c0_i32_1 = arith.constant 0 : i32
    return %c0_i32, %c0_i32_0 : i32, i32
  }
  func.func @transform_16(%arg0: i32) -> (i32, i32) {
    %c0_i32 = arith.constant 0 : i32
    %c0_i32_0 = arith.constant 0 : i32
    %c0_i32_1 = arith.constant 0 : i32
    return %c0_i32, %c0_i32_0 : i32, i32
  }
  func.func @transform_17(%arg0: i32) -> (i32, i32) {
    %c0_i32 = arith.constant 0 : i32
    %c0_i32_0 = arith.constant 0 : i32
    %c0_i32_1 = arith.constant 0 : i32
    return %c0_i32, %c0_i32_0 : i32, i32
  }
  func.func @transform_18(%arg0: i32) -> (i32, i32) {
    %c0_i32 = arith.constant 0 : i32
    %c0_i32_0 = arith.constant 0 : i32
    %c0_i32_1 = arith.constant 0 : i32
    return %c0_i32, %c0_i32_0 : i32, i32
  }
  func.func @transform_19(%arg0: i32) -> (i32, i32) {
    %c0_i32 = arith.constant 0 : i32
    %c0_i32_0 = arith.constant 0 : i32
    %c0_i32_1 = arith.constant 0 : i32
    return %c0_i32, %c0_i32_0 : i32, i32
  }
  func.func @transform_20(%arg0: i32) -> (i32, i32) {
    %c0_i32 = arith.constant 0 : i32
    %c0_i32_0 = arith.constant 0 : i32
    %c0_i32_1 = arith.constant 0 : i32
    return %c0_i32, %c0_i32_0 : i32, i32
  }
  func.func @transform_21(%arg0: i32) -> (i32, i32) {
    %c0_i32 = arith.constant 0 : i32
    %c0_i32_0 = arith.constant 0 : i32
    %c0_i32_1 = arith.constant 0 : i32
    return %c0_i32, %c0_i32_0 : i32, i32
  }
}

</mosaic_0001>

<llo_original>
// kernel: _lambda_.1
$region0: #{_lambda_.1}
  #allocation0 [shape = 'u32[]', space=smem, size = 0x4, offset = 0x4, fixed_abs, tag = 'smem constant byte address 0x4 - core index']
  #allocation1 [shape = 'u32[72,128]{1,0:T(1,128)}', space=vmem, size = 0x9000, scoped, tag = 'internal scratch']
  #allocation2 [shape = 'f32[36,288]{1,0:T(8,128)}', space=vmem, size = 0xf000, scoped, tag = 'scratch operand']
  #allocation3 [shape = 'f32[20,320]{1,0:T(8,128)}', space=vmem, size = 0x9000, scoped, tag = 'scratch operand']
  #allocation4 [shape = 'f32[12,384]{1,0:T(8,128)}', space=vmem, size = 0x6000, scoped, tag = 'scratch operand']
  %s0 = inlined_call_operand.vmem [shape: bf16[68,102], index: 0, kind: input, shape index: {}]
  %s1 = inlined_call_operand.hbm [shape: bf16[96,68], index: 1, kind: input, shape index: {}]
  %s2 = inlined_call_operand.hbm [shape: bf16[306,256], index: 2, kind: input, shape index: {}]
  %s3 = inlined_call_operand.vmem [shape: f32[1,256], index: 3, kind: input, shape index: {}, may-alias: {3,6,13}]
  %s4 = inlined_call_operand.hbm [shape: bf16[48,36], index: 4, kind: input, shape index: {}]
  %s5 = inlined_call_operand.vmem [shape: bf16[864,256], index: 5, kind: input, shape index: {}]
  %s6 = inlined_call_operand.vmem [shape: f32[1,256], index: 6, kind: input, shape index: {}, may-alias: {3,6,13}]
  %s7 = inlined_call_operand.hbm [shape: f32[256,32], index: 7, kind: input, shape index: {}]
  %s8 = inlined_call_operand.vmem [shape: f32[32,256], index: 8, kind: input, shape index: {}]
  %s9 = inlined_call_operand.vmem [shape: f32[1,32], index: 9, kind: input, shape index: {}]
  %s10 = inlined_call_operand.vmem [shape: f32[1,32], index: 10, kind: input, shape index: {}]
  %s11 = inlined_call_operand.vmem [shape: bf16[24,20], index: 11, kind: input, shape index: {}]
  %s12 = inlined_call_operand.hbm [shape: bf16[960,256], index: 12, kind: input, shape index: {}]
  %s13 = inlined_call_operand.vmem [shape: f32[1,256], index: 13, kind: input, shape index: {}, may-alias: {3,6,13}]
  %s14 = inlined_call_operand.hbm [shape: f32[256,64], index: 14, kind: input, shape index: {}]
  %s15 = inlined_call_operand.hbm [shape: f32[64,256], index: 15, kind: input, shape index: {}]
  %s16 = inlined_call_operand.vmem [shape: f32[1,64], index: 16, kind: input, shape index: {}]
  %s17 = inlined_call_operand.vmem [shape: f32[1,64], index: 17, kind: input, shape index: {}]
  %s18 = inlined_call_operand.hbm [shape: bf16[12,12], index: 18, kind: input, shape index: {}]
  %s19 = inlined_call_operand.hbm [shape: bf16[1152,2], index: 19, kind: input, shape index: {}]
  %s20 = inlined_call_operand.vmem [shape: f32[1,2], index: 20, kind: input, shape index: {}]
  %s21 = inlined_call_operand.hbm [shape: f32[4,2], index: 21, kind: output, shape index: {}]
  %s22 = sld [smem:[#allocation0]]
  $region130: #{_lambda_.1} parent=0
    _
  %s24 = ssub.s32 1, %s22
  %s25 = scalar_select 0, %s24, %s22
  $region1: #{_lambda_.1} parent=0
    #allocation5 [shape = 'u8[24576]{0}', space=vmem, size = 0x6000, scoped, tag = 'input window, operand 1, single buffered']
    #allocation6 [shape = 's32[1]{0}', space=sflag, size = 0x4, scoped, tag = 'scoped memory for _lambda_.1']
    #allocation7 [shape = 's32[1]{0}', space=sflag, size = 0x4, scoped, tag = 'scoped memory for _lambda_.1']
    #allocation8 [shape = 'u8[159744]{0}', space=vmem, size = 0x27000, scoped, tag = 'input window, operand 2, single buffered']
    #allocation9 [shape = 's32[1]{0}', space=sflag, size = 0x4, scoped, tag = 'scoped memory for _lambda_.1']
    #allocation10 [shape = 'u8[12288]{0}', space=vmem, size = 0x3000, scoped, tag = 'input window, operand 4, single buffered']
    #allocation11 [shape = 'u8[131072]{0}', space=vmem, size = 0x20000, scoped, tag = 'input window, operand 7, single buffered']
    #allocation12 [shape = 's32[1]{0}', space=sflag, size = 0x4, scoped, tag = 'scoped memory for _lambda_.1']
    #allocation13 [shape = 'u8[491520]{0}', space=vmem, size = 0x78000, scoped, tag = 'input window, operand 12, single buffered']
    #allocation14 [shape = 'u8[131072]{0}', space=vmem, size = 0x20000, scoped, tag = 'input window, operand 14, single buffered']
    #allocation15 [shape = 's32[1]{0}', space=sflag, size = 0x4, scoped, tag = 'scoped memory for _lambda_.1']
    #allocation16 [shape = 'u8[65536]{0}', space=vmem, size = 0x10000, scoped, tag = 'input window, operand 15, single buffered']
    #allocation17 [shape = 'u8[4096]{0}', space=vmem, size = 0x1000, scoped, tag = 'input window, operand 18, single buffered']
    #allocation18 [shape = 's32[1]{0}', space=sflag, size = 0x4, scoped, tag = 'scoped memory for _lambda_.1']
    #allocation19 [shape = 'u8[294912]{0}', space=vmem, size = 0x48000, scoped, tag = 'input window, operand 19, single buffered']
    #allocation20 [shape = 'u8[2048]{0}', space=vmem, size = 0x800, scoped, tag = 'output window, operand 0, single buffered']
    %26 = vsyncpa [#allocation6], 0
    %27 = vsyncpa [#allocation9], 0
    %28 = vsyncpa [#allocation12], 0
    %29 = vsyncpa [#allocation15], 0
    %30 = vsyncpa [#allocation18], 0
    %31 = vsyncpa [#allocation7], 0
    // Predicated region
    $region2: #{_lambda_.1} parent=1 // pred_check
      _
    $region3: #{_lambda_.1} parent=1 // pred_check_branch
      %33 = sbr.rel (0) target = $region5
    $region4: #{_lambda_.1} parent=1 // pred_region
      _
    $region5: #{_lambda_.1} parent=1 // pred_fallthru
      _
    // Predicated region
    $region6: #{_lambda_.1} parent=1 // pred_check
      _
    $region7: #{_lambda_.1} parent=1 // pred_check_branch
      %35 = sbr.rel (0) target = $region9
    $region8: #{_lambda_.1} parent=1 // pred_region
      %37 = vsyncadd [#allocation6], 0
      %s38 = sshll.u32 %s1, 4
      %s39 = int_to_ptr.hbm [resolvable:$true] %s38
      %s40 = sshll.u32 [#allocation5], 4
      %s41 = int_to_ptr.vmem [resolvable:$true] %s40
      %46 = dma.hbm_to_vmem [thread:$0]  %s39, 768, %s41, [#allocation6], 64, 64, 4
    $region9: #{_lambda_.1} parent=1 // pred_fallthru
      _
    // Predicated region
    $region10: #{_lambda_.1} parent=1 // pred_check
      _
    $region11: #{_lambda_.1} parent=1 // pred_check_branch
      %48 = sbr.rel (0) target = $region13
    $region12: #{_lambda_.1} parent=1 // pred_region
      %50 = vsyncadd [#allocation9], 0
      %s51 = sshll.u32 %s2, 4
      %s52 = int_to_ptr.hbm [resolvable:$true] %s51
      %s53 = sshll.u32 [#allocation8], 4
      %s54 = int_to_ptr.vmem [resolvable:$true] %s53
      %59 = dma.hbm_to_vmem [thread:$0]  %s52, 4992, %s54, [#allocation9], 128, 128, 8
    $region13: #{_lambda_.1} parent=1 // pred_fallthru
      _
    // Predicated region
    $region14: #{_lambda_.1} parent=1 // pred_check
      _
    $region15: #{_lambda_.1} parent=1 // pred_check_branch
      %61 = sbr.rel (0) target = $region17
    $region16: #{_lambda_.1} parent=1 // pred_region
      _
    $region17: #{_lambda_.1} parent=1 // pred_fallthru
      _
    // Predicated region
    $region18: #{_lambda_.1} parent=1 // pred_check
      _
    $region19: #{_lambda_.1} parent=1 // pred_check_branch
      %63 = sbr.rel (0) target = $region21
    $region20: #{_lambda_.1} parent=1 // pred_region
      %65 = vsyncadd [#allocation9], 0
      %s66 = sshll.u32 %s4, 4
      %s67 = int_to_ptr.hbm [resolvable:$true] %s66
      %s68 = sshll.u32 [#allocation10], 4
      %s69 = int_to_ptr.vmem [resolvable:$true] %s68
      %74 = dma.hbm_to_vmem [thread:$0]  %s67, 384, %s69, [#allocation9], 64, 64, 4
    $region21: #{_lambda_.1} parent=1 // pred_fallthru
      _
    // Predicated region
    $region22: #{_lambda_.1} parent=1 // pred_check
      _
    $region23: #{_lambda_.1} parent=1 // pred_check_branch
      %76 = sbr.rel (0) target = $region25
    $region24: #{_lambda_.1} parent=1 // pred_region
      _
    $region25: #{_lambda_.1} parent=1 // pred_fallthru
      _
    // Predicated region
    $region26: #{_lambda_.1} parent=1 // pred_check
      _
    $region27: #{_lambda_.1} parent=1 // pred_check_branch
      %78 = sbr.rel (0) target = $region29
    $region28: #{_lambda_.1} parent=1 // pred_region
      _
    $region29: #{_lambda_.1} parent=1 // pred_fallthru
      _
    // Predicated region
    $region30: #{_lambda_.1} parent=1 // pred_check
      _
    $region31: #{_lambda_.1} parent=1 // pred_check_branch
      %80 = sbr.rel (0) target = $region33
    $region32: #{_lambda_.1} parent=1 // pred_region
      %82 = vsyncadd [#allocation12], 0
      %s83 = sshll.u32 %s7, 4
      %s84 = int_to_ptr.hbm [resolvable:$true] %s83
      %s85 = sshll.u32 [#allocation11], 4
      %s86 = int_to_ptr.vmem [resolvable:$true] %s85
      %91 = dma.hbm_to_vmem [thread:$0]  %s84, 4096, %s86, [#allocation12], 128, 128, 8
    $region33: #{_lambda_.1} parent=1 // pred_fallthru
      _
    // Predicated region
    $region34: #{_lambda_.1} parent=1 // pred_check
      _
    $region35: #{_lambda_.1} parent=1 // pred_check_branch
      %93 = sbr.rel (0) target = $region37
    $region36: #{_lambda_.1} parent=1 // pred_region
      _
    $region37: #{_lambda_.1} parent=1 // pred_fallthru
      _
    // Predicated region
    $region38: #{_lambda_.1} parent=1 // pred_check
      _
    $region39: #{_lambda_.1} parent=1 // pred_check_branch
      %95 = sbr.rel (0) target = $region41
    $region40: #{_lambda_.1} parent=1 // pred_region
      _
    $region41: #{_lambda_.1} parent=1 // pred_fallthru
      _
    // Predicated region
    $region42: #{_lambda_.1} parent=1 // pred_check
      _
    $region43: #{_lambda_.1} parent=1 // pred_check_branch
      %97 = sbr.rel (0) target = $region45
    $region44: #{_lambda_.1} parent=1 // pred_region
      _
    $region45: #{_lambda_.1} parent=1 // pred_fallthru
      _
    // Predicated region
    $region46: #{_lambda_.1} parent=1 // pred_check
      _
    $region47: #{_lambda_.1} parent=1 // pred_check_branch
      %99 = sbr.rel (0) target = $region49
    $region48: #{_lambda_.1} parent=1 // pred_region
      _
    $region49: #{_lambda_.1} parent=1 // pred_fallthru
      _
    // Predicated region
    $region50: #{_lambda_.1} parent=1 // pred_check
      _
    $region51: #{_lambda_.1} parent=1 // pred_check_branch
      %101 = sbr.rel (0) target = $region53
    $region52: #{_lambda_.1} parent=1 // pred_region
      %103 = vsyncadd [#allocation12], 0
      %s104 = sshll.u32 %s12, 4
      %s105 = int_to_ptr.hbm [resolvable:$true] %s104
      %s106 = sshll.u32 [#allocation13], 4
      %s107 = int_to_ptr.vmem [resolvable:$true] %s106
      %112 = dma.hbm_to_vmem [thread:$0]  %s105, 15360, %s107, [#allocation12], 128, 128, 8
    $region53: #{_lambda_.1} parent=1 // pred_fallthru
      _
    // Predicated region
    $region54: #{_lambda_.1} parent=1 // pred_check
      _
    $region55: #{_lambda_.1} parent=1 // pred_check_branch
      %114 = sbr.rel (0) target = $region57
    $region56: #{_lambda_.1} parent=1 // pred_region
      _
    $region57: #{_lambda_.1} parent=1 // pred_fallthru
      _
    // Predicated region
    $region58: #{_lambda_.1} parent=1 // pred_check
      _
    $region59: #{_lambda_.1} parent=1 // pred_check_branch
      %116 = sbr.rel (0) target = $region61
    $region60: #{_lambda_.1} parent=1 // pred_region
      %118 = vsyncadd [#allocation15], 0
      %s119 = sshll.u32 %s14, 4
      %s120 = int_to_ptr.hbm [resolvable:$true] %s119
      %s121 = sshll.u32 [#allocation14], 4
      %s122 = int_to_ptr.vmem [resolvable:$true] %s121
      %127 = dma.hbm_to_vmem [thread:$0]  %s120, 4096, %s122, [#allocation15], 128, 128, 8
    $region61: #{_lambda_.1} parent=1 // pred_fallthru
      _
    // Predicated region
    $region62: #{_lambda_.1} parent=1 // pred_check
      _
    $region63: #{_lambda_.1} parent=1 // pred_check_branch
      %129 = sbr.rel (0) target = $region65
    $region64: #{_lambda_.1} parent=1 // pred_region
      %131 = vsyncadd [#allocation15], 0
      %s132 = sshll.u32 %s15, 4
      %s133 = int_to_ptr.hbm [resolvable:$true] %s132
      %s134 = sshll.u32 [#allocation16], 4
      %s135 = int_to_ptr.vmem [resolvable:$true] %s134
      %140 = dma.hbm_to_vmem [thread:$0]  %s133, 2048, %s135, [#allocation15], 256, 256, 16
    $region65: #{_lambda_.1} parent=1 // pred_fallthru
      _
    // Predicated region
    $region66: #{_lambda_.1} parent=1 // pred_check
      _
    $region67: #{_lambda_.1} parent=1 // pred_check_branch
      %142 = sbr.rel (0) target = $region69
    $region68: #{_lambda_.1} parent=1 // pred_region
      _
    $region69: #{_lambda_.1} parent=1 // pred_fallthru
      _
    // Predicated region
    $region70: #{_lambda_.1} parent=1 // pred_check
      _
    $region71: #{_lambda_.1} parent=1 // pred_check_branch
      %144 = sbr.rel (0) target = $region73
    $region72: #{_lambda_.1} parent=1 // pred_region
      _
    $region73: #{_lambda_.1} parent=1 // pred_fallthru
      _
    // Predicated region
    $region74: #{_lambda_.1} parent=1 // pred_check
      _
    $region75: #{_lambda_.1} parent=1 // pred_check_branch
      %146 = sbr.rel (0) target = $region77
    $region76: #{_lambda_.1} parent=1 // pred_region
      %148 = vsyncadd [#allocation18], 0
      %s149 = sshll.u32 %s18, 4
      %s150 = int_to_ptr.hbm [resolvable:$true] %s149
      %s151 = sshll.u32 [#allocation17], 4
      %s152 = int_to_ptr.vmem [resolvable:$true] %s151
      %157 = dma.hbm_to_vmem [thread:$0]  %s150, 128, %s152, [#allocation18], 64, 64, 4
    $region77: #{_lambda_.1} parent=1 // pred_fallthru
      _
    // Predicated region
    $region78: #{_lambda_.1} parent=1 // pred_check
      _
    $region79: #{_lambda_.1} parent=1 // pred_check_branch
      %159 = sbr.rel (0) target = $region81
    $region80: #{_lambda_.1} parent=1 // pred_region
      %161 = vsyncadd [#allocation18], 0
      %s162 = sshll.u32 %s19, 4
      %s163 = int_to_ptr.hbm [resolvable:$true] %s162
      %s164 = sshll.u32 [#allocation19], 4
      %s165 = int_to_ptr.vmem [resolvable:$true] %s164
      %170 = dma.hbm_to_vmem [thread:$0]  %s163, 9216, %s165, [#allocation18], 64, 64, 4
    $region81: #{_lambda_.1} parent=1 // pred_fallthru
      _
    // Predicated region
    $region82: #{_lambda_.1} parent=1 // pred_check
      _
    $region83: #{_lambda_.1} parent=1 // pred_check_branch
      %172 = sbr.rel (0) target = $region85
    $region84: #{_lambda_.1} parent=1 // pred_region
      _
    $region85: #{_lambda_.1} parent=1 // pred_fallthru
      _
    // Predicated region
    $region86: #{_lambda_.1} parent=1 // pred_check
      _
    $region87: #{_lambda_.1} parent=1 // pred_check_branch
      %174 = sbr.rel (0) target = $region89
    $region88: #{_lambda_.1} parent=1 // pred_region
      %176 = dma.done [#allocation6], 768
    $region89: #{_lambda_.1} parent=1 // pred_fallthru
      _
    // Predicated region
    $region90: #{_lambda_.1} parent=1 // pred_check
      _
    $region91: #{_lambda_.1} parent=1 // pred_check_branch
      %178 = sbr.rel (0) target = $region93
    $region92: #{_lambda_.1} parent=1 // pred_region
      %180 = dma.done [#allocation9], 4992
    $region93: #{_lambda_.1} parent=1 // pred_fallthru
      _
    // Predicated region
    $region94: #{_lambda_.1} parent=1 // pred_check
      _
    $region95: #{_lambda_.1} parent=1 // pred_check_branch
      %182 = sbr.rel (0) target = $region97
    $region96: #{_lambda_.1} parent=1 // pred_region
      %184 = dma.done [#allocation9], 384
    $region97: #{_lambda_.1} parent=1 // pred_fallthru
      _
    // Predicated region
    $region98: #{_lambda_.1} parent=1 // pred_check
      _
    $region99: #{_lambda_.1} parent=1 // pred_check_branch
      %186 = sbr.rel (0) target = $region101
    $region100: #{_lambda_.1} parent=1 // pred_region
      %188 = dma.done [#allocation12], 4096
    $region101: #{_lambda_.1} parent=1 // pred_fallthru
      _
    // Predicated region
    $region102: #{_lambda_.1} parent=1 // pred_check
      _
    $region103: #{_lambda_.1} parent=1 // pred_check_branch
      %190 = sbr.rel (0) target = $region105
    $region104: #{_lambda_.1} parent=1 // pred_region
      %192 = dma.done [#allocation12], 15360
    $region105: #{_lambda_.1} parent=1 // pred_fallthru
      _
    // Predicated region
    $region106: #{_lambda_.1} parent=1 // pred_check
      _
    $region107: #{_lambda_.1} parent=1 // pred_check_branch
      %194 = sbr.rel (0) target = $region109
    $region108: #{_lambda_.1} parent=1 // pred_region
      %196 = dma.done [#allocation15], 4096
    $region109: #{_lambda_.1} parent=1 // pred_fallthru
      _
    // Predicated region
    $region110: #{_lambda_.1} parent=1 // pred_check
      _
    $region111: #{_lambda_.1} parent=1 // pred_check_branch
      %198 = sbr.rel (0) target = $region113
    $region112: #{_lambda_.1} parent=1 // pred_region
      %200 = dma.done [#allocation15], 2048
    $region113: #{_lambda_.1} parent=1 // pred_fallthru
      _
    // Predicated region
    $region114: #{_lambda_.1} parent=1 // pred_check
      _
    $region115: #{_lambda_.1} parent=1 // pred_check_branch
      %202 = sbr.rel (0) target = $region117
    $region116: #{_lambda_.1} parent=1 // pred_region
      %204 = dma.done [#allocation18], 128
    $region117: #{_lambda_.1} parent=1 // pred_fallthru
      _
    // Predicated region
    $region118: #{_lambda_.1} parent=1 // pred_check
      _
    $region119: #{_lambda_.1} parent=1 // pred_check_branch
      %206 = sbr.rel (0) target = $region121
    $region120: #{_lambda_.1} parent=1 // pred_region
      %208 = dma.done [#allocation18], 9216
    $region121: #{_lambda_.1} parent=1 // pred_fallthru
      _
    %210 = vst [vmem:[#allocation2] sm:$0xff] 0.0
    %211 = vst [vmem:[#allocation2 + $0x8] sm:$0xff] 0.0
    %vm212 = vcmask 261120
    %213 = vst.msk [vmem:[#allocation2 + $0x10] sm:$0xff] %vm212, 0.0
    %214 = vst [vmem:[#allocation2 + $0x18] sm:$0xff] 0.0
    %215 = vst [vmem:[#allocation2 + $0x20] sm:$0xff] 0.0
    %216 = vst.msk [vmem:[#allocation2 + $0x28] sm:$0xff] %vm212, 0.0
    %217 = vst [vmem:[#allocation2 + $0x30] sm:$0xff] 0.0
    %218 = vst [vmem:[#allocation2 + $0x38] sm:$0xff] 0.0
    %219 = vst.msk [vmem:[#allocation2 + $0x40] sm:$0xff] %vm212, 0.0
    %220 = vst [vmem:[#allocation2 + $0x48] sm:$0xff] 0.0
    %221 = vst [vmem:[#allocation2 + $0x50] sm:$0xff] 0.0
    %222 = vst.msk [vmem:[#allocation2 + $0x58] sm:$0xff] %vm212, 0.0
    %223 = vst [vmem:[#allocation2 + $0x60] sm:$0xf] 0.0
    %224 = vst [vmem:[#allocation2 + $0x68] sm:$0xf] 0.0
    %vm225 = vcmask 257024
    %226 = vst.msk [vmem:[#allocation2 + $0x70] sm:$0xf] %vm225, 0.0
    %227 = vst [vmem:[#allocation3] sm:$0xff] 0.0
    %228 = vst [vmem:[#allocation3 + $0x8] sm:$0xff] 0.0
    %vm229 = vcmask 523264
    %230 = vst.msk [vmem:[#allocation3 + $0x10] sm:$0xff] %vm229, 0.0
    %231 = vst [vmem:[#allocation3 + $0x18] sm:$0xff] 0.0
    %232 = vst [vmem:[#allocation3 + $0x20] sm:$0xff] 0.0
    %233 = vst.msk [vmem:[#allocation3 + $0x28] sm:$0xff] %vm229, 0.0
    %234 = vst [vmem:[#allocation3 + $0x30] sm:$0xf] 0.0
    %235 = vst [vmem:[#allocation3 + $0x38] sm:$0xf] 0.0
    %vm236 = vcmask 519168
    %237 = vst.msk [vmem:[#allocation3 + $0x40] sm:$0xf] %vm236, 0.0
    %238 = vst [vmem:[#allocation4] sm:$0xff] 0.0
    %239 = vst [vmem:[#allocation4 + $0x8] sm:$0xff] 0.0
    %240 = vst [vmem:[#allocation4 + $0x10] sm:$0xff] 0.0
    %241 = vst [vmem:[#allocation4 + $0x18] sm:$0xf] 0.0
    %242 = vst [vmem:[#allocation4 + $0x20] sm:$0xf] 0.0
    %243 = vst [vmem:[#allocation4 + $0x28] sm:$0xf] 0.0
    %v244 = vld [vmem:[%s0] sm:$0xf]
    %v245 = vld [vmem:[%s0 + $0x4] sm:$0xf]
    %v246 = vld [vmem:[%s0 + $0x8] sm:$0xf]
    %v247 = vld [vmem:[%s0 + $0xc] sm:$0xf]
    %v248 = vld [vmem:[%s0 + $0x10] sm:$0xf]
    %v249 = vld [vmem:[%s0 + $0x14] sm:$0xf]
    %v250 = vld [vmem:[%s0 + $0x18] sm:$0xf]
    %v251 = vld [vmem:[%s0 + $0x1c] sm:$0xf]
    %v252 = vld [vmem:[%s0 + $0x20] sm:$0x3]
    %v253 = vld [vmem:[#allocation5] sm:$0xf]
    %v254 = vld [vmem:[#allocation5 + $0x4] sm:$0xf]
    %v255 = vld [vmem:[#allocation5 + $0x8] sm:$0xf]
    %v256 = vld [vmem:[#allocation5 + $0xc] sm:$0xf]
    %v261 = vunpack.c.l.b16 %v253
    %v262 = vunpack.c.l.b16 %v254
    %v263 = vunpack.c.l.b16 %v255
    %v264 = vunpack.c.l.b16 %v256
    %v265 = vpack.c.b16 %v262, %v261
    %v266 = vpack.c.b16 %v264, %v263
    %v276 = vunpack.c.l.b16 %v244
    %v277 = vunpack.c.l.b16 %v245
    %v278 = vunpack.c.l.b16 %v246
    %v279 = vunpack.c.l.b16 %v247
    %v280 = vunpack.c.l.b16 %v248
    %v281 = vunpack.c.l.b16 %v249
    %v282 = vunpack.c.l.b16 %v250
    %v283 = vunpack.c.l.b16 %v251
    %v284 = vunpack.c.l.b16 %v252
    %v285 = vpack.c.b16 %v277, %v276
    %v286 = vpack.c.b16 %v279, %v278
    %v287 = vpack.c.b16 %v281, %v280
    %v288 = vpack.c.b16 %v283, %v282
    %v289 = vpack.c.b16 %v284, %v284
    %vm294 = vcmask 556032
    %v296 = vsel %vm294, %v265, 0
    %v299 = vsel %vm294, %v266, 0
    %vm301 = vcmask 1041408
    %v303 = vsel %vm301, %v289, 0
    %305 = vmatpush.bf16.msra.mxu0 0
    %306 = vmatpush.bf16.msra.mxu0 0
    %307 = vmatpush.bf16.msra.mxu0 0
    %308 = vmatpush.bf16.msra.mxu0 %v303
    %309 = vmatpush.bf16.msra.mxu0 %v288
    %310 = vmatpush.bf16.msra.mxu0 %v287
    %311 = vmatpush.bf16.msra.mxu0 %v286
    %312 = vmatpush.bf16.msra.mxu0 %v285
    %313 = vmatmul.bf16.gmra.mxu0 %v296
    %v314 = vpop.f32.mrf.mxu0
    %v315 = vadd.f32 0.0, %v314
    %v316 = vpop.f32.mrf.mxu0
    %v317 = vadd.f32 0.0, %v316
    %318 = vmatmul.bf16.gmra.mxu0 %v299
    %v319 = vpop.f32.mrf.mxu0
    %v320 = vadd.f32 0.0, %v319
    %v321 = vpop.f32.mrf.mxu0
    %v322 = vadd.f32 0.0, %v321
    %323 = vdwg.mxu0
    %v324 = vpack.c.bf16 %v317, %v315
    %v325 = vpack.c.bf16 %v322, %v320
    %v326 = vld [vmem:[#allocation8] sm:$0xff]
    %v327 = vld [vmem:[#allocation8 + $0x8] sm:$0xff]
    %v328 = vld [vmem:[#allocation8 + $0x10] sm:$0xff]
    %v329 = vld [vmem:[#allocation8 + $0x18] sm:$0xff]
    %v330 = vld [vmem:[#allocation8 + $0x20] sm:$0xff]
    %v331 = vld [vmem:[#allocation8 + $0x28] sm:$0xff]
    %v332 = vld [vmem:[#allocation8 + $0x30] sm:$0xff]
    %v333 = vld [vmem:[#allocation8 + $0x38] sm:$0xff]
    %v334 = vld [vmem:[#allocation8 + $0x40] sm:$0xff]
    %v335 = vld [vmem:[#allocation8 + $0x48] sm:$0xff]
    %v336 = vld [vmem:[#allocation8 + $0x50] sm:$0xff]
    %v337 = vld [vmem:[#allocation8 + $0x58] sm:$0xff]
    %v338 = vld [vmem:[#allocation8 + $0x60] sm:$0x77]
    %v339 = vld [vmem:[#allocation5 + $0x10] sm:$0xf]
    %v340 = vld [vmem:[#allocation5 + $0x14] sm:$0xf]
    %v341 = vld [vmem:[#allocation5 + $0x18] sm:$0xf]
    %v342 = vld [vmem:[#allocation5 + $0x1c] sm:$0xf]
    %v347 = vunpack.c.l.b16 %v339
    %v348 = vunpack.c.l.b16 %v340
    %v349 = vunpack.c.l.b16 %v341
    %v350 = vunpack.c.l.b16 %v342
    %v351 = vpack.c.b16 %v348, %v347
    %v352 = vpack.c.b16 %v350, %v349
    %v354 = vsel %vm294, %v351, 0
    %v357 = vsel %vm294, %v352, 0
    %359 = vmatpush.bf16.msra.mxu0 0
    %360 = vmatpush.bf16.msra.mxu0 0
    %361 = vmatpush.bf16.msra.mxu0 0
    %362 = vmatpush.bf16.msra.mxu0 %v303
    %363 = vmatpush.bf16.msra.mxu0 %v288
    %364 = vmatpush.bf16.msra.mxu0 %v287
    %365 = vmatpush.bf16.msra.mxu0 %v286
    %366 = vmatpush.bf16.msra.mxu0 %v285
    %367 = vmatmul.bf16.gmra.mxu0 %v354
    %v368 = vpop.f32.mrf.mxu0
    %v369 = vadd.f32 0.0, %v368
    %v370 = vpop.f32.mrf.mxu0
    %v371 = vadd.f32 0.0, %v370
    %372 = vmatmul.bf16.gmra.mxu0 %v357
    %v373 = vpop.f32.mrf.mxu0
    %v374 = vadd.f32 0.0, %v373
    %v375 = vpop.f32.mrf.mxu0
    %v376 = vadd.f32 0.0, %v375
    %377 = vdwg.mxu0
    %v378 = vpack.c.bf16 %v371, %v369
    %v379 = vpack.c.bf16 %v376, %v374
    %v380 = vld [vmem:[#allocation8 + $0x60] sm:$0x88]
    %v381 = vld [vmem:[#allocation8 + $0x68] sm:$0xff]
    %v382 = vld [vmem:[#allocation8 + $0x70] sm:$0xff]
    %v383 = vld [vmem:[#allocation8 + $0x78] sm:$0xff]
    %v384 = vld [vmem:[#allocation8 + $0x80] sm:$0xff]
    %v385 = vld [vmem:[#allocation8 + $0x88] sm:$0xff]
    %v386 = vld [vmem:[#allocation8 + $0x90] sm:$0xff]
    %v387 = vld [vmem:[#allocation8 + $0x98] sm:$0xff]
    %v388 = vld [vmem:[#allocation8 + $0xa0] sm:$0xff]
    %v389 = vld [vmem:[#allocation8 + $0xa8] sm:$0xff]
    %v390 = vld [vmem:[#allocation8 + $0xb0] sm:$0xff]
    %v391 = vld [vmem:[#allocation8 + $0xb8] sm:$0xff]
    %v392 = vld [vmem:[#allocation8 + $0xc0] sm:$0xff]
    %v393 = vld [vmem:[#allocation8 + $0xc8] sm:$0x33]
    %v408 = vunpack.c.l.b16 %v380
    %v409 = vunpack.c.h.b16 %v380
    %v410 = vunpack.c.l.b16 %v381
    %v411 = vunpack.c.h.b16 %v381
    %v412 = vunpack.c.l.b16 %v382
    %v413 = vunpack.c.h.b16 %v382
    %v414 = vunpack.c.l.b16 %v383
    %v415 = vunpack.c.h.b16 %v383
    %v416 = vunpack.c.l.b16 %v384
    %v417 = vunpack.c.h.b16 %v384
    %v418 = vunpack.c.l.b16 %v385
    %v419 = vunpack.c.h.b16 %v385
    %v420 = vunpack.c.l.b16 %v386
    %v421 = vunpack.c.h.b16 %v386
    %v422 = vunpack.c.l.b16 %v387
    %v423 = vunpack.c.h.b16 %v387
    %v424 = vunpack.c.l.b16 %v388
    %v425 = vunpack.c.h.b16 %v388
    %v426 = vunpack.c.l.b16 %v389
    %v427 = vunpack.c.h.b16 %v389
    %v428 = vunpack.c.l.b16 %v390
    %v429 = vunpack.c.h.b16 %v390
    %v430 = vunpack.c.l.b16 %v391
    %v431 = vunpack.c.h.b16 %v391
    %v432 = vunpack.c.l.b16 %v392
    %v433 = vunpack.c.h.b16 %v392
    %v434 = vunpack.c.l.b16 %v393
    %v435 = vunpack.c.h.b16 %v393
    %v436 = vpack.c.b16 %v410, %v408
    %v437 = vpack.c.b16 %v411, %v409
    %v438 = vpack.c.b16 %v414, %v412
    %v439 = vpack.c.b16 %v415, %v413
    %v440 = vpack.c.b16 %v418, %v416
    %v441 = vpack.c.b16 %v419, %v417
    %v442 = vpack.c.b16 %v422, %v420
    %v443 = vpack.c.b16 %v423, %v421
    %v444 = vpack.c.b16 %v426, %v424
    %v445 = vpack.c.b16 %v427, %v425
    %v446 = vpack.c.b16 %v430, %v428
    %v447 = vpack.c.b16 %v431, %v429
    %v448 = vpack.c.b16 %v434, %v432
    %v449 = vpack.c.b16 %v435, %v433
    %vm450 = vcmask 1044480
    %v451 = vrot.slane %v436, 3
    %v452 = vrot.slane %v438, 3
    %v453 = vsel %vm450, %v451, %v452
    %v454 = vrot.slane %v437, 3
    %v455 = vrot.slane %v439, 3
    %v456 = vsel %vm450, %v454, %v455
    %v457 = vrot.slane %v440, 3
    %v458 = vsel %vm450, %v452, %v457
    %v459 = vrot.slane %v441, 3
    %v460 = vsel %vm450, %v455, %v459
    %v461 = vrot.slane %v442, 3
    %v462 = vsel %vm450, %v457, %v461
    %v463 = vrot.slane %v443, 3
    %v464 = vsel %vm450, %v459, %v463
    %v465 = vrot.slane %v444, 3
    %v466 = vsel %vm450, %v461, %v465
    %v467 = vrot.slane %v445, 3
    %v468 = vsel %vm450, %v463, %v467
    %v469 = vrot.slane %v446, 3
    %v470 = vsel %vm450, %v465, %v469
    %v471 = vrot.slane %v447, 3
    %v472 = vsel %vm450, %v467, %v471
    %v473 = vrot.slane %v448, 3
    %v474 = vsel %vm450, %v469, %v473
    %v475 = vrot.slane %v449, 3
    %v476 = vsel %vm450, %v471, %v475
    %vm489 = vcmask 834560
    %v491 = vsel %vm489, %v378, 0
    %v494 = vsel %vm489, %v379, 0
    %vm496 = vcmask 1042432
    %v498 = vsel %vm496, %v473, 0
    %v501 = vsel %vm496, %v475, 0
    %503 = vmatpush.bf16.msra.mxu0 0
    %504 = vmatpush.bf16.msra.mxu0 %v498
    %505 = vmatpush.bf16.msra.mxu0 %v474
    %506 = vmatpush.bf16.msra.mxu0 %v470
    %507 = vmatpush.bf16.msra.mxu0 %v466
    %508 = vmatpush.bf16.msra.mxu0 %v462
    %509 = vmatpush.bf16.msra.mxu0 %v458
    %510 = vmatpush.bf16.msra.mxu0 %v453
    %511 = vmatmul.bf16.gmra.mxu0 %v491
    %v512 = vpop.f32.mrf.mxu0
    %v513 = vadd.f32 0.0, %v512
    %v514 = vpop.f32.mrf.mxu0
    %v515 = vadd.f32 0.0, %v514
    %516 = vmatmul.bf16.gmra.mxu0 %v494
    %v517 = vpop.f32.mrf.mxu0
    %v518 = vadd.f32 0.0, %v517
    %v519 = vpop.f32.mrf.mxu0
    %v520 = vadd.f32 0.0, %v519
    %521 = vdwg.mxu0
    %522 = vmatpush.bf16.msra.mxu0 0
    %523 = vmatpush.bf16.msra.mxu0 %v501
    %524 = vmatpush.bf16.msra.mxu0 %v476
    %525 = vmatpush.bf16.msra.mxu0 %v472
    %526 = vmatpush.bf16.msra.mxu0 %v468
    %527 = vmatpush.bf16.msra.mxu0 %v464
    %528 = vmatpush.bf16.msra.mxu0 %v460
    %529 = vmatpush.bf16.msra.mxu0 %v456
    %530 = vmatmul.bf16.gmra.mxu0 %v491
    %v531 = vpop.f32.mrf.mxu0
    %v532 = vadd.f32 0.0, %v531
    %v533 = vpop.f32.mrf.mxu0
    %v534 = vadd.f32 0.0, %v533
    %535 = vmatmul.bf16.gmra.mxu0 %v494
    %v536 = vpop.f32.mrf.mxu0
    %v537 = vadd.f32 0.0, %v536
    %v538 = vpop.f32.mrf.mxu0
    %v539 = vadd.f32 0.0, %v538
    %540 = vdwg.mxu0
    %v554 = vunpack.c.l.b16 %v326
    %v555 = vunpack.c.h.b16 %v326
    %v556 = vunpack.c.l.b16 %v327
    %v557 = vunpack.c.h.b16 %v327
    %v558 = vunpack.c.l.b16 %v328
    %v559 = vunpack.c.h.b16 %v328
    %v560 = vunpack.c.l.b16 %v329
    %v561 = vunpack.c.h.b16 %v329
    %v562 = vunpack.c.l.b16 %v330
    %v563 = vunpack.c.h.b16 %v330
    %v564 = vunpack.c.l.b16 %v331
    %v565 = vunpack.c.h.b16 %v331
    %v566 = vunpack.c.l.b16 %v332
    %v567 = vunpack.c.h.b16 %v332
    %v568 = vunpack.c.l.b16 %v333
    %v569 = vunpack.c.h.b16 %v333
    %v570 = vunpack.c.l.b16 %v334
    %v571 = vunpack.c.h.b16 %v334
    %v572 = vunpack.c.l.b16 %v335
    %v573 = vunpack.c.h.b16 %v335
    %v574 = vunpack.c.l.b16 %v336
    %v575 = vunpack.c.h.b16 %v336
    %v576 = vunpack.c.l.b16 %v337
    %v577 = vunpack.c.h.b16 %v337
    %v578 = vunpack.c.l.b16 %v338
    %v579 = vunpack.c.h.b16 %v338
    %v580 = vpack.c.b16 %v556, %v554
    %v581 = vpack.c.b16 %v557, %v555
    %v582 = vpack.c.b16 %v560, %v558
    %v583 = vpack.c.b16 %v561, %v559
    %v584 = vpack.c.b16 %v564, %v562
    %v585 = vpack.c.b16 %v565, %v563
    %v586 = vpack.c.b16 %v568, %v566
    %v587 = vpack.c.b16 %v569, %v567
    %v588 = vpack.c.b16 %v572, %v570
    %v589 = vpack.c.b16 %v573, %v571
    %v590 = vpack.c.b16 %v576, %v574
    %v591 = vpack.c.b16 %v577, %v575
    %v592 = vpack.c.b16 %v578, %v578
    %v593 = vpack.c.b16 %v579, %v579
    %v607 = vsel %vm489, %v324, 0
    %v610 = vsel %vm489, %v325, 0
    %v613 = vsel %vm496, %v592, 0
    %v616 = vsel %vm496, %v593, 0
    %618 = vmatpush.bf16.msra.mxu0 0
    %619 = vmatpush.bf16.msra.mxu0 %v613
    %620 = vmatpush.bf16.msra.mxu0 %v590
    %621 = vmatpush.bf16.msra.mxu0 %v588
    %622 = vmatpush.bf16.msra.mxu0 %v586
    %623 = vmatpush.bf16.msra.mxu0 %v584
    %624 = vmatpush.bf16.msra.mxu0 %v582
    %625 = vmatpush.bf16.msra.mxu0 %v580
    %626 = vmatmul.bf16.gmra.mxu0 %v607
    %v627 = vpop.f32.mrf.mxu0
    %v628 = vadd.f32 %v513, %v627
    %v629 = vpop.f32.mrf.mxu0
    %v630 = vadd.f32 %v515, %v629
    %631 = vmatmul.bf16.gmra.mxu0 %v610
    %v632 = vpop.f32.mrf.mxu0
    %v633 = vadd.f32 %v518, %v632
    %v634 = vpop.f32.mrf.mxu0
    %v635 = vadd.f32 %v520, %v634
    %636 = vdwg.mxu0
    %637 = vmatpush.bf16.msra.mxu0 0
    %638 = vmatpush.bf16.msra.mxu0 %v616
    %639 = vmatpush.bf16.msra.mxu0 %v591
    %640 = vmatpush.bf16.msra.mxu0 %v589
    %641 = vmatpush.bf16.msra.mxu0 %v587
    %642 = vmatpush.bf16.msra.mxu0 %v585
    %643 = vmatpush.bf16.msra.mxu0 %v583
    %644 = vmatpush.bf16.msra.mxu0 %v581
    %645 = vmatmul.bf16.gmra.mxu0 %v607
    %v646 = vpop.f32.mrf.mxu0
    %v647 = vadd.f32 %v532, %v646
    %v648 = vpop.f32.mrf.mxu0
    %v649 = vadd.f32 %v534, %v648
    %650 = vmatmul.bf16.gmra.mxu0 %v610
    %v651 = vpop.f32.mrf.mxu0
    %v652 = vadd.f32 %v537, %v651
    %v653 = vpop.f32.mrf.mxu0
    %v654 = vadd.f32 %v539, %v653
    %655 = vdwg.mxu0
    %v656 = vld [vmem:[#allocation5 + $0x20] sm:$0xf]
    %v657 = vld [vmem:[#allocation5 + $0x24] sm:$0xf]
    %v658 = vld [vmem:[#allocation5 + $0x28] sm:$0xf]
    %v659 = vld [vmem:[#allocation5 + $0x2c] sm:$0xf]
    %v664 = vunpack.c.l.b16 %v656
    %v665 = vunpack.c.l.b16 %v657
    %v666 = vunpack.c.l.b16 %v658
    %v667 = vunpack.c.l.b16 %v659
    %v668 = vpack.c.b16 %v665, %v664
    %v669 = vpack.c.b16 %v667, %v666
    %v671 = vsel %vm294, %v668, 0
    %v674 = vsel %vm294, %v669, 0
    %676 = vmatpush.bf16.msra.mxu0 0
    %677 = vmatpush.bf16.msra.mxu0 0
    %678 = vmatpush.bf16.msra.mxu0 0
    %679 = vmatpush.bf16.msra.mxu0 %v303
    %680 = vmatpush.bf16.msra.mxu0 %v288
    %681 = vmatpush.bf16.msra.mxu0 %v287
    %682 = vmatpush.bf16.msra.mxu0 %v286
    %683 = vmatpush.bf16.msra.mxu0 %v285
    %684 = vmatmul.bf16.gmra.mxu0 %v671
    %v685 = vpop.f32.mrf.mxu0
    %v686 = vadd.f32 0.0, %v685
    %v687 = vpop.f32.mrf.mxu0
    %v688 = vadd.f32 0.0, %v687
    %689 = vmatmul.bf16.gmra.mxu0 %v674
    %v690 = vpop.f32.mrf.mxu0
    %v691 = vadd.f32 0.0, %v690
    %v692 = vpop.f32.mrf.mxu0
    %v693 = vadd.f32 0.0, %v692
    %694 = vdwg.mxu0
    %v695 = vpack.c.bf16 %v688, %v686
    %v696 = vpack.c.bf16 %v693, %v691
    %v697 = vld [vmem:[#allocation8 + $0xc8] sm:$0xcc]
    %v698 = vld [vmem:[#allocation8 + $0xd0] sm:$0xff]
    %v699 = vld [vmem:[#allocation8 + $0xd8] sm:$0xff]
    %v700 = vld [vmem:[#allocation8 + $0xe0] sm:$0xff]
    %v701 = vld [vmem:[#allocation8 + $0xe8] sm:$0xff]
    %v702 = vld [vmem:[#allocation8 + $0xf0] sm:$0xff]
    %v703 = vld [vmem:[#allocation8 + $0xf8] sm:$0xff]
    %v704 = vld [vmem:[#allocation8 + $0x100] sm:$0xff]
    %v705 = vld [vmem:[#allocation8 + $0x108] sm:$0xff]
    %v706 = vld [vmem:[#allocation8 + $0x110] sm:$0xff]
    %v707 = vld [vmem:[#allocation8 + $0x118] sm:$0xff]
    %v708 = vld [vmem:[#allocation8 + $0x120] sm:$0xff]
    %v709 = vld [vmem:[#allocation8 + $0x128] sm:$0xff]
    %v710 = vld [vmem:[#allocation8 + $0x130] sm:$0x11]
    %v725 = vunpack.c.l.b16 %v697
    %v726 = vunpack.c.h.b16 %v697
    %v727 = vunpack.c.l.b16 %v698
    %v728 = vunpack.c.h.b16 %v698
    %v729 = vunpack.c.l.b16 %v699
    %v730 = vunpack.c.h.b16 %v699
    %v731 = vunpack.c.l.b16 %v700
    %v732 = vunpack.c.h.b16 %v700
    %v733 = vunpack.c.l.b16 %v701
    %v734 = vunpack.c.h.b16 %v701
    %v735 = vunpack.c.l.b16 %v702
    %v736 = vunpack.c.h.b16 %v702
    %v737 = vunpack.c.l.b16 %v703
    %v738 = vunpack.c.h.b16 %v703
    %v739 = vunpack.c.l.b16 %v704
    %v740 = vunpack.c.h.b16 %v704
    %v741 = vunpack.c.l.b16 %v705
    %v742 = vunpack.c.h.b16 %v705
    %v743 = vunpack.c.l.b16 %v706
    %v744 = vunpack.c.h.b16 %v706
    %v745 = vunpack.c.l.b16 %v707
    %v746 = vunpack.c.h.b16 %v707
    %v747 = vunpack.c.l.b16 %v708
    %v748 = vunpack.c.h.b16 %v708
    %v749 = vunpack.c.l.b16 %v709
    %v750 = vunpack.c.h.b16 %v709
    %v751 = vunpack.c.l.b16 %v710
    %v752 = vunpack.c.h.b16 %v710
    %v753 = vpack.c.b16 %v727, %v725
    %v754 = vpack.c.b16 %v728, %v726
    %v755 = vpack.c.b16 %v731, %v729
    %v756 = vpack.c.b16 %v732, %v730
    %v757 = vpack.c.b16 %v735, %v733
    %v758 = vpack.c.b16 %v736, %v734
    %v759 = vpack.c.b16 %v739, %v737
    %v760 = vpack.c.b16 %v740, %v738
    %v761 = vpack.c.b16 %v743, %v741
    %v762 = vpack.c.b16 %v744, %v742
    %v763 = vpack.c.b16 %v747, %v745
    %v764 = vpack.c.b16 %v748, %v746
    %v765 = vpack.c.b16 %v751, %v749
    %v766 = vpack.c.b16 %v752, %v750
    %vm767 = vcmask 1045504
    %v768 = vrot.slane %v753, 2
    %v769 = vrot.slane %v755, 2
    %v770 = vsel %vm767, %v768, %v769
    %v771 = vrot.slane %v754, 2
    %v772 = vrot.slane %v756, 2
    %v773 = vsel %vm767, %v771, %v772
    %v774 = vrot.slane %v757, 2
    %v775 = vsel %vm767, %v769, %v774
    %v776 = vrot.slane %v758, 2
    %v777 = vsel %vm767, %v772, %v776
    %v778 = vrot.slane %v759, 2
    %v779 = vsel %vm767, %v774, %v778
    %v780 = vrot.slane %v760, 2
    %v781 = vsel %vm767, %v776, %v780
    %v782 = vrot.slane %v761, 2
    %v783 = vsel %vm767, %v778, %v782
    %v784 = vrot.slane %v762, 2
    %v785 = vsel %vm767, %v780, %v784
    %v786 = vrot.slane %v763, 2
    %v787 = vsel %vm767, %v782, %v786
    %v788 = vrot.slane %v764, 2
    %v789 = vsel %vm767, %v784, %v788
    %v790 = vrot.slane %v765, 2
    %v791 = vsel %vm767, %v786, %v790
    %v792 = vrot.slane %v766, 2
    %v793 = vsel %vm767, %v788, %v792
    %v807 = vsel %vm489, %v695, 0
    %v810 = vsel %vm489, %v696, 0
    %v813 = vsel %vm496, %v790, 0
    %v816 = vsel %vm496, %v792, 0
    %818 = vmatpush.bf16.msra.mxu0 0
    %819 = vmatpush.bf16.msra.mxu0 %v813
    %820 = vmatpush.bf16.msra.mxu0 %v791
    %821 = vmatpush.bf16.msra.mxu0 %v787
    %822 = vmatpush.bf16.msra.mxu0 %v783
    %823 = vmatpush.bf16.msra.mxu0 %v779
    %824 = vmatpush.bf16.msra.mxu0 %v775
    %825 = vmatpush.bf16.msra.mxu0 %v770
    %826 = vmatmul.bf16.gmra.mxu0 %v807
    %v827 = vpop.f32.mrf.mxu0
    %v828 = vadd.f32 0.0, %v827
    %v829 = vpop.f32.mrf.mxu0
    %v830 = vadd.f32 0.0, %v829
    %831 = vmatmul.bf16.gmra.mxu0 %v810
    %v832 = vpop.f32.mrf.mxu0
    %v833 = vadd.f32 0.0, %v832
    %v834 = vpop.f32.mrf.mxu0
    %v835 = vadd.f32 0.0, %v834
    %836 = vdwg.mxu0
    %837 = vmatpush.bf16.msra.mxu0 0
    %838 = vmatpush.bf16.msra.mxu0 %v816
    %839 = vmatpush.bf16.msra.mxu0 %v793
    %840 = vmatpush.bf16.msra.mxu0 %v789
    %841 = vmatpush.bf16.msra.mxu0 %v785
    %842 = vmatpush.bf16.msra.mxu0 %v781
    %843 = vmatpush.bf16.msra.mxu0 %v777
    %844 = vmatpush.bf16.msra.mxu0 %v773
    %845 = vmatmul.bf16.gmra.mxu0 %v807
    %v846 = vpop.f32.mrf.mxu0
    %v847 = vadd.f32 0.0, %v846
    %v848 = vpop.f32.mrf.mxu0
    %v849 = vadd.f32 0.0, %v848
    %850 = vmatmul.bf16.gmra.mxu0 %v810
    %v851 = vpop.f32.mrf.mxu0
    %v852 = vadd.f32 0.0, %v851
    %v853 = vpop.f32.mrf.mxu0
    %v854 = vadd.f32 0.0, %v853
    %855 = vdwg.mxu0
    %v856 = vadd.f32 %v628, %v828
    %v857 = vadd.f32 %v647, %v847
    %v858 = vadd.f32 %v630, %v830
    %v859 = vadd.f32 %v649, %v849
    %v860 = vadd.f32 %v633, %v833
    %v861 = vadd.f32 %v652, %v852
    %v862 = vadd.f32 %v635, %v835
    %v863 = vadd.f32 %v654, %v854
    %v864 = vld [vmem:[%s3] sm:$0x3]
    %v866 = vperm.slane %v864, 0
    %v867 = vperm.slane %v864, 1
    %v870 = vadd.f32 %v856, %v866
    %v871 = vadd.f32 %v857, %v867
    %v872 = vadd.f32 %v858, %v866
    %v873 = vadd.f32 %v859, %v867
    %v874 = vadd.f32 %v860, %v866
    %v875 = vadd.f32 %v861, %v867
    %v876 = vadd.f32 %v862, %v866
    %v877 = vadd.f32 %v863, %v867
    %vm878 = vcmp.ge.f32.partialorder %v870, 0.0
    %vm879 = vcmp.ge.f32.partialorder %v871, 0.0
    %vm880 = vcmp.ge.f32.partialorder %v872, 0.0
    %vm881 = vcmp.ge.f32.partialorder %v873, 0.0
    %vm882 = vcmp.ge.f32.partialorder %v874, 0.0
    %vm883 = vcmp.ge.f32.partialorder %v875, 0.0
    %vm884 = vcmp.ge.f32.partialorder %v876, 0.0
    %vm885 = vcmp.ge.f32.partialorder %v877, 0.0
    %v886 = vmul.f32 %v870, 0.2
    %v887 = vmul.f32 %v871, 0.2
    %v888 = vmul.f32 %v872, 0.2
    %v889 = vmul.f32 %v873, 0.2
    %v890 = vmul.f32 %v874, 0.2
    %v891 = vmul.f32 %v875, 0.2
    %v892 = vmul.f32 %v876, 0.2
    %v893 = vmul.f32 %v877, 0.2
    %v894 = vsel %vm878, %v870, %v886
    %v895 = vsel %vm879, %v871, %v887
    %v896 = vsel %vm880, %v872, %v888
    %v897 = vsel %vm881, %v873, %v889
    %v898 = vsel %vm882, %v874, %v890
    %v899 = vsel %vm883, %v875, %v891
    %v900 = vsel %vm884, %v876, %v892
    %v901 = vsel %vm885, %v877, %v893
    %vm906 = vcmask 1040384
    %v907 = vrot.slane %v894, 7
    %v908 = vrot.slane %v895, 7
    %v909 = vrot.slane %v896, 7
    %v910 = vsel %vm906, %v907, %v909
    %v911 = vrot.slane %v897, 7
    %v912 = vsel %vm906, %v908, %v911
    %913 = vrot.lane.b32.xlu0 %v907, 16
    %v914 = vpop.permute.xlu0 %913
    %915 = vrot.lane.b32.xlu0 %v908, 16
    %v916 = vpop.permute.xlu0 %915
    %917 = vrot.lane.b32.xlu0 %v910, 16
    %v918 = vpop.permute.xlu0 %917
    %919 = vrot.lane.b32.xlu0 %v912, 16
    %v920 = vpop.permute.xlu0 %919
    %921 = vrot.lane.b32.xlu0 %v909, 16
    %v922 = vpop.permute.xlu0 %921
    %923 = vrot.lane.b32.xlu0 %v911, 16
    %v924 = vpop.permute.xlu0 %923
    %vm925 = vcmask 130048
    %v926 = vsel %vm925, %v914, %v916
    %v927 = vsel %vm925, %v918, %v920
    %v928 = vsel %vm925, %v922, %v924
    %vm938 = vcmask 1047681
    %939 = vst.msk [vmem:[#allocation2] sm:$0xfe] %vm938, %v914
    %940 = vst [vmem:[#allocation2 + $0x8] sm:$0xfe] %v926
    %vm941 = vcmask 130049
    %942 = vst.msk [vmem:[#allocation2 + $0x10] sm:$0xfe] %vm941, %v916
    %vm943 = vcmask 1047680
    %944 = vst.msk [vmem:[#allocation2 + $0x18] sm:$0xff] %vm943, %v918
    %945 = vst [vmem:[#allocation2 + $0x20] sm:$0xff] %v927
    %946 = vst.msk [vmem:[#allocation2 + $0x28] sm:$0xff] %vm925, %v920
    %vm947 = vcmask 1040512
    %948 = vst.msk [vmem:[#allocation2 + $0x30] sm:$0x1] %vm947, %v922
    %949 = vst [vmem:[#allocation2 + $0x38] sm:$0x1] %v928
    %vm950 = vcmask 122880
    %951 = vst.msk [vmem:[#allocation2 + $0x40] sm:$0x1] %vm950, %v924
    %v956 = vrot.slane %v898, 5
    %v957 = vrot.slane %v899, 5
    %v958 = vrot.slane %v900, 5
    %v959 = vsel %vm496, %v956, %v958
    %v960 = vrot.slane %v901, 5
    %v961 = vsel %vm496, %v957, %v960
    %962 = vrot.lane.b32.xlu0 %v956, 16
    %v963 = vpop.permute.xlu0 %962
    %964 = vrot.lane.b32.xlu0 %v957, 16
    %v965 = vpop.permute.xlu0 %964
    %966 = vrot.lane.b32.xlu0 %v959, 16
    %v967 = vpop.permute.xlu0 %966
    %968 = vrot.lane.b32.xlu0 %v961, 16
    %v969 = vpop.permute.xlu0 %968
    %970 = vrot.lane.b32.xlu0 %v958, 16
    %v971 = vpop.permute.xlu0 %970
    %972 = vrot.lane.b32.xlu0 %v960, 16
    %v973 = vpop.permute.xlu0 %972
    %v974 = vsel %vm925, %v963, %v965
    %v975 = vsel %vm925, %v967, %v969
    %v976 = vsel %vm925, %v971, %v973
    %vm986 = vcmask 1047683
    %987 = vst.msk [vmem:[#allocation2 + $0x30] sm:$0xf8] %vm986, %v963
    %988 = vst [vmem:[#allocation2 + $0x38] sm:$0xf8] %v974
    %vm989 = vcmask 130051
    %990 = vst.msk [vmem:[#allocation2 + $0x40] sm:$0xf8] %vm989, %v965
    %991 = vst.msk [vmem:[#allocation2 + $0x48] sm:$0xff] %vm943, %v967
    %992 = vst [vmem:[#allocation2 + $0x50] sm:$0xff] %v975
    %993 = vst.msk [vmem:[#allocation2 + $0x58] sm:$0xff] %vm925, %v969
    %vm994 = vcmask 1042560
    %995 = vst.msk [vmem:[#allocation2 + $0x60] sm:$0x7] %vm994, %v971
    %996 = vst [vmem:[#allocation2 + $0x68] sm:$0x7] %v976
    %vm997 = vcmask 124928
    %998 = vst.msk [vmem:[#allocation2 + $0x70] sm:$0x7] %vm997, %v973
    %v999 = vld [vmem:[#allocation2] sm:$0xff]
    %v1000 = vld [vmem:[#allocation2 + $0x8] sm:$0xff]
    %v1001 = vld [vmem:[#allocation2 + $0x10] sm:$0xff]
    %v1002 = vld [vmem:[#allocation2 + $0x18] sm:$0xff]
    %v1003 = vld [vmem:[#allocation2 + $0x20] sm:$0xff]
    %v1004 = vld [vmem:[#allocation2 + $0x28] sm:$0xff]
    %v1005 = vld [vmem:[#allocation2 + $0x30] sm:$0xff]
    %v1006 = vld [vmem:[#allocation2 + $0x38] sm:$0xff]
    %v1007 = vld [vmem:[#allocation2 + $0x40] sm:$0xff]
    %v1008 = vld [vmem:[#allocation2 + $0x48] sm:$0xff]
    %v1009 = vld [vmem:[#allocation2 + $0x50] sm:$0xff]
    %v1010 = vld [vmem:[#allocation2 + $0x58] sm:$0xff]
    %v1011 = vld [vmem:[#allocation2 + $0x60] sm:$0xf]
    %v1012 = vld [vmem:[#allocation2 + $0x68] sm:$0xf]
    %v1013 = vld [vmem:[#allocation2 + $0x70] sm:$0xf]
    %v1014 = vpack.c.bf16 %v1002, %v999
    %v1015 = vpack.c.bf16 %v1003, %v1000
    %v1016 = vpack.c.bf16 %v1004, %v1001
    %v1017 = vpack.c.bf16 %v1008, %v1005
    %v1018 = vpack.c.bf16 %v1009, %v1006
    %v1019 = vpack.c.bf16 %v1010, %v1007
    %v1020 = vpack.c.bf16 %v1011, %v1011
    %v1021 = vpack.c.bf16 %v1012, %v1012
    %v1022 = vpack.c.bf16 %v1013, %v1013
    %v1023 = vld [vmem:[#allocation10] sm:$0xf]
    %v1024 = vld [vmem:[#allocation10 + $0x4] sm:$0xf]
    %v1027 = vunpack.c.l.b16 %v1023
    %v1028 = vunpack.c.l.b16 %v1024
    %v1029 = vpack.c.b16 %v1028, %v1027
    %vm1030 = vcmask 293888
    %v1032 = vsel %vm1030, %v1029, 0
    %v1035 = vsel %vm301, %v1020, 0
    %v1038 = vsel %vm301, %v1021, 0
    %v1041 = vsel %vm301, %v1022, 0
    %1043 = vmatpush.bf16.msra.mxu0 0
    %1044 = vmatpush.bf16.msra.mxu0 0
    %1045 = vmatpush.bf16.msra.mxu0 0
    %1046 = vmatpush.bf16.msra.mxu0 0
    %1047 = vmatpush.bf16.msra.mxu0 0
    %1048 = vmatpush.bf16.msra.mxu0 %v1035
    %1049 = vmatpush.bf16.msra.mxu0 %v1017
    %1050 = vmatpush.bf16.msra.mxu0 %v1014
    %1051 = vmatmul.bf16.gmra.mxu0 %v1032
    %v1052 = vpop.f32.mrf.mxu0
    %v1053 = vadd.f32 0.0, %v1052
    %v1054 = vpop.f32.mrf.mxu0
    %v1055 = vadd.f32 0.0, %v1054
    %1056 = vdwg.mxu0
    %1057 = vmatpush.bf16.msra.mxu0 0
    %1058 = vmatpush.bf16.msra.mxu0 0
    %1059 = vmatpush.bf16.msra.mxu0 0
    %1060 = vmatpush.bf16.msra.mxu0 0
    %1061 = vmatpush.bf16.msra.mxu0 0
    %1062 = vmatpush.bf16.msra.mxu0 %v1038
    %1063 = vmatpush.bf16.msra.mxu0 %v1018
    %1064 = vmatpush.bf16.msra.mxu0 %v1015
    %1065 = vmatmul.bf16.gmra.mxu0 %v1032
    %v1066 = vpop.f32.mrf.mxu0
    %v1067 = vadd.f32 0.0, %v1066
    %v1068 = vpop.f32.mrf.mxu0
    %v1069 = vadd.f32 0.0, %v1068
    %1070 = vdwg.mxu0
    %1071 = vmatpush.bf16.msra.mxu0 0
    %1072 = vmatpush.bf16.msra.mxu0 0
    %1073 = vmatpush.bf16.msra.mxu0 0
    %1074 = vmatpush.bf16.msra.mxu0 0
    %1075 = vmatpush.bf16.msra.mxu0 0
    %1076 = vmatpush.bf16.msra.mxu0 %v1041
    %1077 = vmatpush.bf16.msra.mxu0 %v1019
    %1078 = vmatpush.bf16.msra.mxu0 %v1016
    %1079 = vmatmul.bf16.gmra.mxu0 %v1032
    %v1080 = vpop.f32.mrf.mxu0
    %v1081 = vadd.f32 0.0, %v1080
    %v1082 = vpop.f32.mrf.mxu0
    %v1083 = vadd.f32 0.0, %v1082
    %1084 = vdwg.mxu0
    %v1085 = vpack.c.bf16 %v1055, %v1053
    %v1086 = vpack.c.bf16 %v1069, %v1067
    %v1087 = vpack.c.bf16 %v1083, %v1081
    %v1088 = vld [vmem:[%s5] sm:$0xff]
    %v1089 = vld [vmem:[%s5 + $0x8] sm:$0xff]
    %v1090 = vld [vmem:[%s5 + $0x10] sm:$0xff]
    %v1091 = vld [vmem:[%s5 + $0x18] sm:$0xff]
    %v1092 = vld [vmem:[%s5 + $0x20] sm:$0xff]
    %v1093 = vld [vmem:[%s5 + $0x28] sm:$0xff]
    %v1094 = vld [vmem:[%s5 + $0x30] sm:$0xff]
    %v1095 = vld [vmem:[%s5 + $0x38] sm:$0xff]
    %v1096 = vld [vmem:[%s5 + $0x40] sm:$0xff]
    %v1097 = vld [vmem:[%s5 + $0x48] sm:$0xff]
    %v1098 = vld [vmem:[%s5 + $0x50] sm:$0xff]
    %v1099 = vld [vmem:[%s5 + $0x58] sm:$0xff]
    %v1100 = vld [vmem:[%s5 + $0x60] sm:$0xff]
    %v1101 = vld [vmem:[%s5 + $0x68] sm:$0xff]
    %v1102 = vld [vmem:[%s5 + $0x70] sm:$0xff]
    %v1103 = vld [vmem:[%s5 + $0x78] sm:$0xff]
    %v1104 = vld [vmem:[%s5 + $0x80] sm:$0xff]
    %v1105 = vld [vmem:[%s5 + $0x88] sm:$0xff]
    %v1106 = vld [vmem:[%s5 + $0x90] sm:$0xff]
    %v1107 = vld [vmem:[%s5 + $0x98] sm:$0xff]
    %v1108 = vld [vmem:[%s5 + $0xa0] sm:$0xff]
    %v1109 = vld [vmem:[%s5 + $0xa8] sm:$0xff]
    %v1110 = vld [vmem:[%s5 + $0xb0] sm:$0xff]
    %v1111 = vld [vmem:[%s5 + $0xb8] sm:$0xff]
    %v1112 = vld [vmem:[%s5 + $0xc0] sm:$0xff]
    %v1113 = vld [vmem:[%s5 + $0xc8] sm:$0xff]
    %v1114 = vld [vmem:[%s5 + $0xd0] sm:$0xff]
    %v1115 = vld [vmem:[%s5 + $0xd8] sm:$0xff]
    %v1116 = vld [vmem:[%s5 + $0xe0] sm:$0xff]
    %v1117 = vld [vmem:[%s5 + $0xe8] sm:$0xff]
    %v1118 = vld [vmem:[%s5 + $0xf0] sm:$0xff]
    %v1119 = vld [vmem:[%s5 + $0xf8] sm:$0xff]
    %v1120 = vld [vmem:[%s5 + $0x100] sm:$0xff]
    %v1121 = vld [vmem:[%s5 + $0x108] sm:$0xff]
    %v1122 = vld [vmem:[%s5 + $0x110] sm:$0xff]
    %v1123 = vld [vmem:[%s5 + $0x118] sm:$0xff]
    %v1124 = vld [vmem:[#allocation10 + $0x8] sm:$0xf]
    %v1125 = vld [vmem:[#allocation10 + $0xc] sm:$0xf]
    %v1128 = vunpack.c.l.b16 %v1124
    %v1129 = vunpack.c.l.b16 %v1125
    %v1130 = vpack.c.b16 %v1129, %v1128
    %v1132 = vsel %vm1030, %v1130, 0
    %1134 = vmatpush.bf16.msra.mxu0 0
    %1135 = vmatpush.bf16.msra.mxu0 0
    %1136 = vmatpush.bf16.msra.mxu0 0
    %1137 = vmatpush.bf16.msra.mxu0 0
    %1138 = vmatpush.bf16.msra.mxu0 0
    %1139 = vmatpush.bf16.msra.mxu0 %v1035
    %1140 = vmatpush.bf16.msra.mxu0 %v1017
    %1141 = vmatpush.bf16.msra.mxu0 %v1014
    %1142 = vmatmul.bf16.gmra.mxu0 %v1132
    %v1143 = vpop.f32.mrf.mxu0
    %v1144 = vadd.f32 0.0, %v1143
    %v1145 = vpop.f32.mrf.mxu0
    %v1146 = vadd.f32 0.0, %v1145
    %1147 = vdwg.mxu0
    %1148 = vmatpush.bf16.msra.mxu0 0
    %1149 = vmatpush.bf16.msra.mxu0 0
    %1150 = vmatpush.bf16.msra.mxu0 0
    %1151 = vmatpush.bf16.msra.mxu0 0
    %1152 = vmatpush.bf16.msra.mxu0 0
    %1153 = vmatpush.bf16.msra.mxu0 %v1038
    %1154 = vmatpush.bf16.msra.mxu0 %v1018
    %1155 = vmatpush.bf16.msra.mxu0 %v1015
    %1156 = vmatmul.bf16.gmra.mxu0 %v1132
    %v1157 = vpop.f32.mrf.mxu0
    %v1158 = vadd.f32 0.0, %v1157
    %v1159 = vpop.f32.mrf.mxu0
    %v1160 = vadd.f32 0.0, %v1159
    %1161 = vdwg.mxu0
    %1162 = vmatpush.bf16.msra.mxu0 0
    %1163 = vmatpush.bf16.msra.mxu0 0
    %1164 = vmatpush.bf16.msra.mxu0 0
    %1165 = vmatpush.bf16.msra.mxu0 0
    %1166 = vmatpush.bf16.msra.mxu0 0
    %1167 = vmatpush.bf16.msra.mxu0 %v1041
    %1168 = vmatpush.bf16.msra.mxu0 %v1019
    %1169 = vmatpush.bf16.msra.mxu0 %v1016
    %1170 = vmatmul.bf16.gmra.mxu0 %v1132
    %v1171 = vpop.f32.mrf.mxu0
    %v1172 = vadd.f32 0.0, %v1171
    %v1173 = vpop.f32.mrf.mxu0
    %v1174 = vadd.f32 0.0, %v1173
    %1175 = vdwg.mxu0
    %v1176 = vpack.c.bf16 %v1146, %v1144
    %v1177 = vpack.c.bf16 %v1160, %v1158
    %v1178 = vpack.c.bf16 %v1174, %v1172
    %v1179 = vld [vmem:[%s5 + $0x120] sm:$0xff]
    %v1180 = vld [vmem:[%s5 + $0x128] sm:$0xff]
    %v1181 = vld [vmem:[%s5 + $0x130] sm:$0xff]
    %v1182 = vld [vmem:[%s5 + $0x138] sm:$0xff]
    %v1183 = vld [vmem:[%s5 + $0x140] sm:$0xff]
    %v1184 = vld [vmem:[%s5 + $0x148] sm:$0xff]
    %v1185 = vld [vmem:[%s5 + $0x150] sm:$0xff]
    %v1186 = vld [vmem:[%s5 + $0x158] sm:$0xff]
    %v1187 = vld [vmem:[%s5 + $0x160] sm:$0xff]
    %v1188 = vld [vmem:[%s5 + $0x168] sm:$0xff]
    %v1189 = vld [vmem:[%s5 + $0x170] sm:$0xff]
    %v1190 = vld [vmem:[%s5 + $0x178] sm:$0xff]
    %v1191 = vld [vmem:[%s5 + $0x180] sm:$0xff]
    %v1192 = vld [vmem:[%s5 + $0x188] sm:$0xff]
    %v1193 = vld [vmem:[%s5 + $0x190] sm:$0xff]
    %v1194 = vld [vmem:[%s5 + $0x198] sm:$0xff]
    %v1195 = vld [vmem:[%s5 + $0x1a0] sm:$0xff]
    %v1196 = vld [vmem:[%s5 + $0x1a8] sm:$0xff]
    %v1197 = vld [vmem:[%s5 + $0x1b0] sm:$0xff]
    %v1198 = vld [vmem:[%s5 + $0x1b8] sm:$0xff]
    %v1199 = vld [vmem:[%s5 + $0x1c0] sm:$0xff]
    %v1200 = vld [vmem:[%s5 + $0x1c8] sm:$0xff]
    %v1201 = vld [vmem:[%s5 + $0x1d0] sm:$0xff]
    %v1202 = vld [vmem:[%s5 + $0x1d8] sm:$0xff]
    %v1203 = vld [vmem:[%s5 + $0x1e0] sm:$0xff]
    %v1204 = vld [vmem:[%s5 + $0x1e8] sm:$0xff]
    %v1205 = vld [vmem:[%s5 + $0x1f0] sm:$0xff]
    %v1206 = vld [vmem:[%s5 + $0x1f8] sm:$0xff]
    %v1207 = vld [vmem:[%s5 + $0x200] sm:$0xff]
    %v1208 = vld [vmem:[%s5 + $0x208] sm:$0xff]
    %v1209 = vld [vmem:[%s5 + $0x210] sm:$0xff]
    %v1210 = vld [vmem:[%s5 + $0x218] sm:$0xff]
    %v1211 = vld [vmem:[%s5 + $0x220] sm:$0xff]
    %v1212 = vld [vmem:[%s5 + $0x228] sm:$0xff]
    %v1213 = vld [vmem:[%s5 + $0x230] sm:$0xff]
    %v1214 = vld [vmem:[%s5 + $0x238] sm:$0xff]
    %v1251 = vunpack.c.l.b16 %v1179
    %v1252 = vunpack.c.h.b16 %v1179
    %v1253 = vunpack.c.l.b16 %v1180
    %v1254 = vunpack.c.h.b16 %v1180
    %v1255 = vunpack.c.l.b16 %v1181
    %v1256 = vunpack.c.h.b16 %v1181
    %v1257 = vunpack.c.l.b16 %v1182
    %v1258 = vunpack.c.h.b16 %v1182
    %v1259 = vunpack.c.l.b16 %v1183
    %v1260 = vunpack.c.h.b16 %v1183
    %v1261 = vunpack.c.l.b16 %v1184
    %v1262 = vunpack.c.h.b16 %v1184
    %v1263 = vunpack.c.l.b16 %v1185
    %v1264 = vunpack.c.h.b16 %v1185
    %v1265 = vunpack.c.l.b16 %v1186
    %v1266 = vunpack.c.h.b16 %v1186
    %v1267 = vunpack.c.l.b16 %v1187
    %v1268 = vunpack.c.h.b16 %v1187
    %v1269 = vunpack.c.l.b16 %v1188
    %v1270 = vunpack.c.h.b16 %v1188
    %v1271 = vunpack.c.l.b16 %v1189
    %v1272 = vunpack.c.h.b16 %v1189
    %v1273 = vunpack.c.l.b16 %v1190
    %v1274 = vunpack.c.h.b16 %v1190
    %v1275 = vunpack.c.l.b16 %v1191
    %v1276 = vunpack.c.h.b16 %v1191
    %v1277 = vunpack.c.l.b16 %v1192
    %v1278 = vunpack.c.h.b16 %v1192
    %v1279 = vunpack.c.l.b16 %v1193
    %v1280 = vunpack.c.h.b16 %v1193
    %v1281 = vunpack.c.l.b16 %v1194
    %v1282 = vunpack.c.h.b16 %v1194
    %v1283 = vunpack.c.l.b16 %v1195
    %v1284 = vunpack.c.h.b16 %v1195
    %v1285 = vunpack.c.l.b16 %v1196
    %v1286 = vunpack.c.h.b16 %v1196
    %v1287 = vunpack.c.l.b16 %v1197
    %v1288 = vunpack.c.h.b16 %v1197
    %v1289 = vunpack.c.l.b16 %v1198
    %v1290 = vunpack.c.h.b16 %v1198
    %v1291 = vunpack.c.l.b16 %v1199
    %v1292 = vunpack.c.h.b16 %v1199
    %v1293 = vunpack.c.l.b16 %v1200
    %v1294 = vunpack.c.h.b16 %v1200
    %v1295 = vunpack.c.l.b16 %v1201
    %v1296 = vunpack.c.h.b16 %v1201
    %v1297 = vunpack.c.l.b16 %v1202
    %v1298 = vunpack.c.h.b16 %v1202
    %v1299 = vunpack.c.l.b16 %v1203
    %v1300 = vunpack.c.h.b16 %v1203
    %v1301 = vunpack.c.l.b16 %v1204
    %v1302 = vunpack.c.h.b16 %v1204
    %v1303 = vunpack.c.l.b16 %v1205
    %v1304 = vunpack.c.h.b16 %v1205
    %v1305 = vunpack.c.l.b16 %v1206
    %v1306 = vunpack.c.h.b16 %v1206
    %v1307 = vunpack.c.l.b16 %v1207
    %v1308 = vunpack.c.h.b16 %v1207
    %v1309 = vunpack.c.l.b16 %v1208
    %v1310 = vunpack.c.h.b16 %v1208
    %v1311 = vunpack.c.l.b16 %v1209
    %v1312 = vunpack.c.h.b16 %v1209
    %v1313 = vunpack.c.l.b16 %v1210
    %v1314 = vunpack.c.h.b16 %v1210
    %v1315 = vunpack.c.l.b16 %v1211
    %v1316 = vunpack.c.h.b16 %v1211
    %v1317 = vunpack.c.l.b16 %v1212
    %v1318 = vunpack.c.h.b16 %v1212
    %v1319 = vunpack.c.l.b16 %v1213
    %v1320 = vunpack.c.h.b16 %v1213
    %v1321 = vunpack.c.l.b16 %v1214
    %v1322 = vunpack.c.h.b16 %v1214
    %v1323 = vpack.c.b16 %v1253, %v1251
    %v1324 = vpack.c.b16 %v1254, %v1252
    %v1325 = vpack.c.b16 %v1257, %v1255
    %v1326 = vpack.c.b16 %v1258, %v1256
    %v1327 = vpack.c.b16 %v1261, %v1259
    %v1328 = vpack.c.b16 %v1262, %v1260
    %v1329 = vpack.c.b16 %v1265, %v1263
    %v1330 = vpack.c.b16 %v1266, %v1264
    %v1331 = vpack.c.b16 %v1269, %v1267
    %v1332 = vpack.c.b16 %v1270, %v1268
    %v1333 = vpack.c.b16 %v1273, %v1271
    %v1334 = vpack.c.b16 %v1274, %v1272
    %v1335 = vpack.c.b16 %v1277, %v1275
    %v1336 = vpack.c.b16 %v1278, %v1276
    %v1337 = vpack.c.b16 %v1281, %v1279
    %v1338 = vpack.c.b16 %v1282, %v1280
    %v1339 = vpack.c.b16 %v1285, %v1283
    %v1340 = vpack.c.b16 %v1286, %v1284
    %v1341 = vpack.c.b16 %v1289, %v1287
    %v1342 = vpack.c.b16 %v1290, %v1288
    %v1343 = vpack.c.b16 %v1293, %v1291
    %v1344 = vpack.c.b16 %v1294, %v1292
    %v1345 = vpack.c.b16 %v1297, %v1295
    %v1346 = vpack.c.b16 %v1298, %v1296
    %v1347 = vpack.c.b16 %v1301, %v1299
    %v1348 = vpack.c.b16 %v1302, %v1300
    %v1349 = vpack.c.b16 %v1305, %v1303
    %v1350 = vpack.c.b16 %v1306, %v1304
    %v1351 = vpack.c.b16 %v1309, %v1307
    %v1352 = vpack.c.b16 %v1310, %v1308
    %v1353 = vpack.c.b16 %v1313, %v1311
    %v1354 = vpack.c.b16 %v1314, %v1312
    %v1355 = vpack.c.b16 %v1317, %v1315
    %v1356 = vpack.c.b16 %v1318, %v1316
    %v1357 = vpack.c.b16 %v1321, %v1319
    %v1358 = vpack.c.b16 %v1322, %v1320
    %v1396 = vsel %vm212, %v1178, 0
    %1398 = vmatpush.bf16.msra.mxu0 %v1337
    %1399 = vmatpush.bf16.msra.mxu0 %v1335
    %1400 = vmatpush.bf16.msra.mxu0 %v1333
    %1401 = vmatpush.bf16.msra.mxu0 %v1331
    %1402 = vmatpush.bf16.msra.mxu0 %v1329
    %1403 = vmatpush.bf16.msra.mxu0 %v1327
    %1404 = vmatpush.bf16.msra.mxu0 %v1325
    %1405 = vmatpush.bf16.msra.mxu0 %v1323
    %1406 = vmatmul.bf16.gmra.mxu0 %v1176
    %v1407 = vpop.f32.mrf.mxu0
    %v1408 = vadd.f32 0.0, %v1407
    %v1409 = vpop.f32.mrf.mxu0
    %v1410 = vadd.f32 0.0, %v1409
    %1411 = vdwg.mxu0
    %1412 = vmatpush.bf16.msra.mxu0 %v1353
    %1413 = vmatpush.bf16.msra.mxu0 %v1351
    %1414 = vmatpush.bf16.msra.mxu0 %v1349
    %1415 = vmatpush.bf16.msra.mxu0 %v1347
    %1416 = vmatpush.bf16.msra.mxu0 %v1345
    %1417 = vmatpush.bf16.msra.mxu0 %v1343
    %1418 = vmatpush.bf16.msra.mxu0 %v1341
    %1419 = vmatpush.bf16.msra.mxu0 %v1339
    %1420 = vmatmul.bf16.gmra.mxu0 %v1177
    %v1421 = vpop.f32.mrf.mxu0
    %v1422 = vadd.f32 %v1408, %v1421
    %v1423 = vpop.f32.mrf.mxu0
    %v1424 = vadd.f32 %v1410, %v1423
    %1425 = vdwg.mxu0
    %1426 = vmatpush.bf16.msra.mxu0 0
    %1427 = vmatpush.bf16.msra.mxu0 0
    %1428 = vmatpush.bf16.msra.mxu0 0
    %1429 = vmatpush.bf16.msra.mxu0 0
    %1430 = vmatpush.bf16.msra.mxu0 0
    %1431 = vmatpush.bf16.msra.mxu0 0
    %1432 = vmatpush.bf16.msra.mxu0 %v1357
    %1433 = vmatpush.bf16.msra.mxu0 %v1355
    %1434 = vmatmul.bf16.gmra.mxu0 %v1396
    %v1435 = vpop.f32.mrf.mxu0
    %v1436 = vadd.f32 %v1422, %v1435
    %v1437 = vpop.f32.mrf.mxu0
    %v1438 = vadd.f32 %v1424, %v1437
    %1439 = vdwg.mxu0
    %1440 = vmatpush.bf16.msra.mxu0 %v1338
    %1441 = vmatpush.bf16.msra.mxu0 %v1336
    %1442 = vmatpush.bf16.msra.mxu0 %v1334
    %1443 = vmatpush.bf16.msra.mxu0 %v1332
    %1444 = vmatpush.bf16.msra.mxu0 %v1330
    %1445 = vmatpush.bf16.msra.mxu0 %v1328
    %1446 = vmatpush.bf16.msra.mxu0 %v1326
    %1447 = vmatpush.bf16.msra.mxu0 %v1324
    %1448 = vmatmul.bf16.gmra.mxu0 %v1176
    %v1449 = vpop.f32.mrf.mxu0
    %v1450 = vadd.f32 0.0, %v1449
    %v1451 = vpop.f32.mrf.mxu0
    %v1452 = vadd.f32 0.0, %v1451
    %1453 = vdwg.mxu0
    %1454 = vmatpush.bf16.msra.mxu0 %v1354
    %1455 = vmatpush.bf16.msra.mxu0 %v1352
    %1456 = vmatpush.bf16.msra.mxu0 %v1350
    %1457 = vmatpush.bf16.msra.mxu0 %v1348
    %1458 = vmatpush.bf16.msra.mxu0 %v1346
    %1459 = vmatpush.bf16.msra.mxu0 %v1344
    %1460 = vmatpush.bf16.msra.mxu0 %v1342
    %1461 = vmatpush.bf16.msra.mxu0 %v1340
    %1462 = vmatmul.bf16.gmra.mxu0 %v1177
    %v1463 = vpop.f32.mrf.mxu0
    %v1464 = vadd.f32 %v1450, %v1463
    %v1465 = vpop.f32.mrf.mxu0
    %v1466 = vadd.f32 %v1452, %v1465
    %1467 = vdwg.mxu0
    %1468 = vmatpush.bf16.msra.mxu0 0
    %1469 = vmatpush.bf16.msra.mxu0 0
    %1470 = vmatpush.bf16.msra.mxu0 0
    %1471 = vmatpush.bf16.msra.mxu0 0
    %1472 = vmatpush.bf16.msra.mxu0 0
    %1473 = vmatpush.bf16.msra.mxu0 0
    %1474 = vmatpush.bf16.msra.mxu0 %v1358
    %1475 = vmatpush.bf16.msra.mxu0 %v1356
    %1476 = vmatmul.bf16.gmra.mxu0 %v1396
    %v1477 = vpop.f32.mrf.mxu0
    %v1478 = vadd.f32 %v1464, %v1477
    %v1479 = vpop.f32.mrf.mxu0
    %v1480 = vadd.f32 %v1466, %v1479
    %1481 = vdwg.mxu0
    %v1518 = vunpack.c.l.b16 %v1088
    %v1519 = vunpack.c.h.b16 %v1088
    %v1520 = vunpack.c.l.b16 %v1089
    %v1521 = vunpack.c.h.b16 %v1089
    %v1522 = vunpack.c.l.b16 %v1090
    %v1523 = vunpack.c.h.b16 %v1090
    %v1524 = vunpack.c.l.b16 %v1091
    %v1525 = vunpack.c.h.b16 %v1091
    %v1526 = vunpack.c.l.b16 %v1092
    %v1527 = vunpack.c.h.b16 %v1092
    %v1528 = vunpack.c.l.b16 %v1093
    %v1529 = vunpack.c.h.b16 %v1093
    %v1530 = vunpack.c.l.b16 %v1094
    %v1531 = vunpack.c.h.b16 %v1094
    %v1532 = vunpack.c.l.b16 %v1095
    %v1533 = vunpack.c.h.b16 %v1095
    %v1534 = vunpack.c.l.b16 %v1096
    %v1535 = vunpack.c.h.b16 %v1096
    %v1536 = vunpack.c.l.b16 %v1097
    %v1537 = vunpack.c.h.b16 %v1097
    %v1538 = vunpack.c.l.b16 %v1098
    %v1539 = vunpack.c.h.b16 %v1098
    %v1540 = vunpack.c.l.b16 %v1099
    %v1541 = vunpack.c.h.b16 %v1099
    %v1542 = vunpack.c.l.b16 %v1100
    %v1543 = vunpack.c.h.b16 %v1100
    %v1544 = vunpack.c.l.b16 %v1101
    %v1545 = vunpack.c.h.b16 %v1101
    %v1546 = vunpack.c.l.b16 %v1102
    %v1547 = vunpack.c.h.b16 %v1102
    %v1548 = vunpack.c.l.b16 %v1103
    %v1549 = vunpack.c.h.b16 %v1103
    %v1550 = vunpack.c.l.b16 %v1104
    %v1551 = vunpack.c.h.b16 %v1104
    %v1552 = vunpack.c.l.b16 %v1105
    %v1553 = vunpack.c.h.b16 %v1105
    %v1554 = vunpack.c.l.b16 %v1106
    %v1555 = vunpack.c.h.b16 %v1106
    %v1556 = vunpack.c.l.b16 %v1107
    %v1557 = vunpack.c.h.b16 %v1107
    %v1558 = vunpack.c.l.b16 %v1108
    %v1559 = vunpack.c.h.b16 %v1108
    %v1560 = vunpack.c.l.b16 %v1109
    %v1561 = vunpack.c.h.b16 %v1109
    %v1562 = vunpack.c.l.b16 %v1110
    %v1563 = vunpack.c.h.b16 %v1110
    %v1564 = vunpack.c.l.b16 %v1111
    %v1565 = vunpack.c.h.b16 %v1111
    %v1566 = vunpack.c.l.b16 %v1112
    %v1567 = vunpack.c.h.b16 %v1112
    %v1568 = vunpack.c.l.b16 %v1113
    %v1569 = vunpack.c.h.b16 %v1113
    %v1570 = vunpack.c.l.b16 %v1114
    %v1571 = vunpack.c.h.b16 %v1114
    %v1572 = vunpack.c.l.b16 %v1115
    %v1573 = vunpack.c.h.b16 %v1115
    %v1574 = vunpack.c.l.b16 %v1116
    %v1575 = vunpack.c.h.b16 %v1116
    %v1576 = vunpack.c.l.b16 %v1117
    %v1577 = vunpack.c.h.b16 %v1117
    %v1578 = vunpack.c.l.b16 %v1118
    %v1579 = vunpack.c.h.b16 %v1118
    %v1580 = vunpack.c.l.b16 %v1119
    %v1581 = vunpack.c.h.b16 %v1119
    %v1582 = vunpack.c.l.b16 %v1120
    %v1583 = vunpack.c.h.b16 %v1120
    %v1584 = vunpack.c.l.b16 %v1121
    %v1585 = vunpack.c.h.b16 %v1121
    %v1586 = vunpack.c.l.b16 %v1122
    %v1587 = vunpack.c.h.b16 %v1122
    %v1588 = vunpack.c.l.b16 %v1123
    %v1589 = vunpack.c.h.b16 %v1123
    %v1590 = vpack.c.b16 %v1520, %v1518
    %v1591 = vpack.c.b16 %v1521, %v1519
    %v1592 = vpack.c.b16 %v1524, %v1522
    %v1593 = vpack.c.b16 %v1525, %v1523
    %v1594 = vpack.c.b16 %v1528, %v1526
    %v1595 = vpack.c.b16 %v1529, %v1527
    %v1596 = vpack.c.b16 %v1532, %v1530
    %v1597 = vpack.c.b16 %v1533, %v1531
    %v1598 = vpack.c.b16 %v1536, %v1534
    %v1599 = vpack.c.b16 %v1537, %v1535
    %v1600 = vpack.c.b16 %v1540, %v1538
    %v1601 = vpack.c.b16 %v1541, %v1539
    %v1602 = vpack.c.b16 %v1544, %v1542
    %v1603 = vpack.c.b16 %v1545, %v1543
    %v1604 = vpack.c.b16 %v1548, %v1546
    %v1605 = vpack.c.b16 %v1549, %v1547
    %v1606 = vpack.c.b16 %v1552, %v1550
    %v1607 = vpack.c.b16 %v1553, %v1551
    %v1608 = vpack.c.b16 %v1556, %v1554
    %v1609 = vpack.c.b16 %v1557, %v1555
    %v1610 = vpack.c.b16 %v1560, %v1558
    %v1611 = vpack.c.b16 %v1561, %v1559
    %v1612 = vpack.c.b16 %v1564, %v1562
    %v1613 = vpack.c.b16 %v1565, %v1563
    %v1614 = vpack.c.b16 %v1568, %v1566
    %v1615 = vpack.c.b16 %v1569, %v1567
    %v1616 = vpack.c.b16 %v1572, %v1570
    %v1617 = vpack.c.b16 %v1573, %v1571
    %v1618 = vpack.c.b16 %v1576, %v1574
    %v1619 = vpack.c.b16 %v1577, %v1575
    %v1620 = vpack.c.b16 %v1580, %v1578
    %v1621 = vpack.c.b16 %v1581, %v1579
    %v1622 = vpack.c.b16 %v1584, %v1582
    %v1623 = vpack.c.b16 %v1585, %v1583
    %v1624 = vpack.c.b16 %v1588, %v1586
    %v1625 = vpack.c.b16 %v1589, %v1587
    %v1663 = vsel %vm212, %v1087, 0
    %1665 = vmatpush.bf16.msra.mxu0 %v1604
    %1666 = vmatpush.bf16.msra.mxu0 %v1602
    %1667 = vmatpush.bf16.msra.mxu0 %v1600
    %1668 = vmatpush.bf16.msra.mxu0 %v1598
    %1669 = vmatpush.bf16.msra.mxu0 %v1596
    %1670 = vmatpush.bf16.msra.mxu0 %v1594
    %1671 = vmatpush.bf16.msra.mxu0 %v1592
    %1672 = vmatpush.bf16.msra.mxu0 %v1590
    %1673 = vmatmul.bf16.gmra.mxu0 %v1085
    %v1674 = vpop.f32.mrf.mxu0
    %v1675 = vadd.f32 %v1436, %v1674
    %v1676 = vpop.f32.mrf.mxu0
    %v1677 = vadd.f32 %v1438, %v1676
    %1678 = vdwg.mxu0
    %1679 = vmatpush.bf16.msra.mxu0 %v1620
    %1680 = vmatpush.bf16.msra.mxu0 %v1618
    %1681 = vmatpush.bf16.msra.mxu0 %v1616
    %1682 = vmatpush.bf16.msra.mxu0 %v1614
    %1683 = vmatpush.bf16.msra.mxu0 %v1612
    %1684 = vmatpush.bf16.msra.mxu0 %v1610
    %1685 = vmatpush.bf16.msra.mxu0 %v1608
    %1686 = vmatpush.bf16.msra.mxu0 %v1606
    %1687 = vmatmul.bf16.gmra.mxu0 %v1086
    %v1688 = vpop.f32.mrf.mxu0
    %v1689 = vadd.f32 %v1675, %v1688
    %v1690 = vpop.f32.mrf.mxu0
    %v1691 = vadd.f32 %v1677, %v1690
    %1692 = vdwg.mxu0
    %1693 = vmatpush.bf16.msra.mxu0 0
    %1694 = vmatpush.bf16.msra.mxu0 0
    %1695 = vmatpush.bf16.msra.mxu0 0
    %1696 = vmatpush.bf16.msra.mxu0 0
    %1697 = vmatpush.bf16.msra.mxu0 0
    %1698 = vmatpush.bf16.msra.mxu0 0
    %1699 = vmatpush.bf16.msra.mxu0 %v1624
    %1700 = vmatpush.bf16.msra.mxu0 %v1622
    %1701 = vmatmul.bf16.gmra.mxu0 %v1663
    %v1702 = vpop.f32.mrf.mxu0
    %v1703 = vadd.f32 %v1689, %v1702
    %v1704 = vpop.f32.mrf.mxu0
    %v1705 = vadd.f32 %v1691, %v1704
    %1706 = vdwg.mxu0
    %1707 = vmatpush.bf16.msra.mxu0 %v1605
    %1708 = vmatpush.bf16.msra.mxu0 %v1603
    %1709 = vmatpush.bf16.msra.mxu0 %v1601
    %1710 = vmatpush.bf16.msra.mxu0 %v1599
    %1711 = vmatpush.bf16.msra.mxu0 %v1597
    %1712 = vmatpush.bf16.msra.mxu0 %v1595
    %1713 = vmatpush.bf16.msra.mxu0 %v1593
    %1714 = vmatpush.bf16.msra.mxu0 %v1591
    %1715 = vmatmul.bf16.gmra.mxu0 %v1085
    %v1716 = vpop.f32.mrf.mxu0
    %v1717 = vadd.f32 %v1478, %v1716
    %v1718 = vpop.f32.mrf.mxu0
    %v1719 = vadd.f32 %v1480, %v1718
    %1720 = vdwg.mxu0
    %1721 = vmatpush.bf16.msra.mxu0 %v1621
    %1722 = vmatpush.bf16.msra.mxu0 %v1619
    %1723 = vmatpush.bf16.msra.mxu0 %v1617
    %1724 = vmatpush.bf16.msra.mxu0 %v1615
    %1725 = vmatpush.bf16.msra.mxu0 %v1613
    %1726 = vmatpush.bf16.msra.mxu0 %v1611
    %1727 = vmatpush.bf16.msra.mxu0 %v1609
    %1728 = vmatpush.bf16.msra.mxu0 %v1607
    %1729 = vmatmul.bf16.gmra.mxu0 %v1086
    %v1730 = vpop.f32.mrf.mxu0
    %v1731 = vadd.f32 %v1717, %v1730
    %v1732 = vpop.f32.mrf.mxu0
    %v1733 = vadd.f32 %v1719, %v1732
    %1734 = vdwg.mxu0
    %1735 = vmatpush.bf16.msra.mxu0 0
    %1736 = vmatpush.bf16.msra.mxu0 0
    %1737 = vmatpush.bf16.msra.mxu0 0
    %1738 = vmatpush.bf16.msra.mxu0 0
    %1739 = vmatpush.bf16.msra.mxu0 0
    %1740 = vmatpush.bf16.msra.mxu0 0
    %1741 = vmatpush.bf16.msra.mxu0 %v1625
    %1742 = vmatpush.bf16.msra.mxu0 %v1623
    %1743 = vmatmul.bf16.gmra.mxu0 %v1663
    %v1744 = vpop.f32.mrf.mxu0
    %v1745 = vadd.f32 %v1731, %v1744
    %v1746 = vpop.f32.mrf.mxu0
    %v1747 = vadd.f32 %v1733, %v1746
    %1748 = vdwg.mxu0
    %v1749 = vld [vmem:[#allocation10 + $0x10] sm:$0xf]
    %v1750 = vld [vmem:[#allocation10 + $0x14] sm:$0xf]
    %v1753 = vunpack.c.l.b16 %v1749
    %v1754 = vunpack.c.l.b16 %v1750
    %v1755 = vpack.c.b16 %v1754, %v1753
    %v1757 = vsel %vm1030, %v1755, 0
    %1759 = vmatpush.bf16.msra.mxu0 0
    %1760 = vmatpush.bf16.msra.mxu0 0
    %1761 = vmatpush.bf16.msra.mxu0 0
    %1762 = vmatpush.bf16.msra.mxu0 0
    %1763 = vmatpush.bf16.msra.mxu0 0
    %1764 = vmatpush.bf16.msra.mxu0 %v1035
    %1765 = vmatpush.bf16.msra.mxu0 %v1017
    %1766 = vmatpush.bf16.msra.mxu0 %v1014
    %1767 = vmatmul.bf16.gmra.mxu0 %v1757
    %v1768 = vpop.f32.mrf.mxu0
    %v1769 = vadd.f32 0.0, %v1768
    %v1770 = vpop.f32.mrf.mxu0
    %v1771 = vadd.f32 0.0, %v1770
    %1772 = vdwg.mxu0
    %1773 = vmatpush.bf16.msra.mxu0 0
    %1774 = vmatpush.bf16.msra.mxu0 0
    %1775 = vmatpush.bf16.msra.mxu0 0
    %1776 = vmatpush.bf16.msra.mxu0 0
    %1777 = vmatpush.bf16.msra.mxu0 0
    %1778 = vmatpush.bf16.msra.mxu0 %v1038
    %1779 = vmatpush.bf16.msra.mxu0 %v1018
    %1780 = vmatpush.bf16.msra.mxu0 %v1015
    %1781 = vmatmul.bf16.gmra.mxu0 %v1757
    %v1782 = vpop.f32.mrf.mxu0
    %v1783 = vadd.f32 0.0, %v1782
    %v1784 = vpop.f32.mrf.mxu0
    %v1785 = vadd.f32 0.0, %v1784
    %1786 = vdwg.mxu0
    %1787 = vmatpush.bf16.msra.mxu0 0
    %1788 = vmatpush.bf16.msra.mxu0 0
    %1789 = vmatpush.bf16.msra.mxu0 0
    %1790 = vmatpush.bf16.msra.mxu0 0
    %1791 = vmatpush.bf16.msra.mxu0 0
    %1792 = vmatpush.bf16.msra.mxu0 %v1041
    %1793 = vmatpush.bf16.msra.mxu0 %v1019
    %1794 = vmatpush.bf16.msra.mxu0 %v1016
    %1795 = vmatmul.bf16.gmra.mxu0 %v1757
    %v1796 = vpop.f32.mrf.mxu0
    %v1797 = vadd.f32 0.0, %v1796
    %v1798 = vpop.f32.mrf.mxu0
    %v1799 = vadd.f32 0.0, %v1798
    %1800 = vdwg.mxu0
    %v1801 = vpack.c.bf16 %v1771, %v1769
    %v1802 = vpack.c.bf16 %v1785, %v1783
    %v1803 = vpack.c.bf16 %v1799, %v1797
    %v1804 = vld [vmem:[%s5 + $0x240] sm:$0xff]
    %v1805 = vld [vmem:[%s5 + $0x248] sm:$0xff]
    %v1806 = vld [vmem:[%s5 + $0x250] sm:$0xff]
    %v1807 = vld [vmem:[%s5 + $0x258] sm:$0xff]
    %v1808 = vld [vmem:[%s5 + $0x260] sm:$0xff]
    %v1809 = vld [vmem:[%s5 + $0x268] sm:$0xff]
    %v1810 = vld [vmem:[%s5 + $0x270] sm:$0xff]
    %v1811 = vld [vmem:[%s5 + $0x278] sm:$0xff]
    %v1812 = vld [vmem:[%s5 + $0x280] sm:$0xff]
    %v1813 = vld [vmem:[%s5 + $0x288] sm:$0xff]
    %v1814 = vld [vmem:[%s5 + $0x290] sm:$0xff]
    %v1815 = vld [vmem:[%s5 + $0x298] sm:$0xff]
    %v1816 = vld [vmem:[%s5 + $0x2a0] sm:$0xff]
    %v1817 = vld [vmem:[%s5 + $0x2a8] sm:$0xff]
    %v1818 = vld [vmem:[%s5 + $0x2b0] sm:$0xff]
    %v1819 = vld [vmem:[%s5 + $0x2b8] sm:$0xff]
    %v1820 = vld [vmem:[%s5 + $0x2c0] sm:$0xff]
    %v1821 = vld [vmem:[%s5 + $0x2c8] sm:$0xff]
    %v1822 = vld [vmem:[%s5 + $0x2d0] sm:$0xff]
    %v1823 = vld [vmem:[%s5 + $0x2d8] sm:$0xff]
    %v1824 = vld [vmem:[%s5 + $0x2e0] sm:$0xff]
    %v1825 = vld [vmem:[%s5 + $0x2e8] sm:$0xff]
    %v1826 = vld [vmem:[%s5 + $0x2f0] sm:$0xff]
    %v1827 = vld [vmem:[%s5 + $0x2f8] sm:$0xff]
    %v1828 = vld [vmem:[%s5 + $0x300] sm:$0xff]
    %v1829 = vld [vmem:[%s5 + $0x308] sm:$0xff]
    %v1830 = vld [vmem:[%s5 + $0x310] sm:$0xff]
    %v1831 = vld [vmem:[%s5 + $0x318] sm:$0xff]
    %v1832 = vld [vmem:[%s5 + $0x320] sm:$0xff]
    %v1833 = vld [vmem:[%s5 + $0x328] sm:$0xff]
    %v1834 = vld [vmem:[%s5 + $0x330] sm:$0xff]
    %v1835 = vld [vmem:[%s5 + $0x338] sm:$0xff]
    %v1836 = vld [vmem:[%s5 + $0x340] sm:$0xff]
    %v1837 = vld [vmem:[%s5 + $0x348] sm:$0xff]
    %v1838 = vld [vmem:[%s5 + $0x350] sm:$0xff]
    %v1839 = vld [vmem:[%s5 + $0x358] sm:$0xff]
    %v1876 = vunpack.c.l.b16 %v1804
    %v1877 = vunpack.c.h.b16 %v1804
    %v1878 = vunpack.c.l.b16 %v1805
    %v1879 = vunpack.c.h.b16 %v1805
    %v1880 = vunpack.c.l.b16 %v1806
    %v1881 = vunpack.c.h.b16 %v1806
    %v1882 = vunpack.c.l.b16 %v1807
    %v1883 = vunpack.c.h.b16 %v1807
    %v1884 = vunpack.c.l.b16 %v1808
    %v1885 = vunpack.c.h.b16 %v1808
    %v1886 = vunpack.c.l.b16 %v1809
    %v1887 = vunpack.c.h.b16 %v1809
    %v1888 = vunpack.c.l.b16 %v1810
    %v1889 = vunpack.c.h.b16 %v1810
    %v1890 = vunpack.c.l.b16 %v1811
    %v1891 = vunpack.c.h.b16 %v1811
    %v1892 = vunpack.c.l.b16 %v1812
    %v1893 = vunpack.c.h.b16 %v1812
    %v1894 = vunpack.c.l.b16 %v1813
    %v1895 = vunpack.c.h.b16 %v1813
    %v1896 = vunpack.c.l.b16 %v1814
    %v1897 = vunpack.c.h.b16 %v1814
    %v1898 = vunpack.c.l.b16 %v1815
    %v1899 = vunpack.c.h.b16 %v1815
    %v1900 = vunpack.c.l.b16 %v1816
    %v1901 = vunpack.c.h.b16 %v1816
    %v1902 = vunpack.c.l.b16 %v1817
    %v1903 = vunpack.c.h.b16 %v1817
    %v1904 = vunpack.c.l.b16 %v1818
    %v1905 = vunpack.c.h.b16 %v1818
    %v1906 = vunpack.c.l.b16 %v1819
    %v1907 = vunpack.c.h.b16 %v1819
    %v1908 = vunpack.c.l.b16 %v1820
    %v1909 = vunpack.c.h.b16 %v1820
    %v1910 = vunpack.c.l.b16 %v1821
    %v1911 = vunpack.c.h.b16 %v1821
    %v1912 = vunpack.c.l.b16 %v1822
    %v1913 = vunpack.c.h.b16 %v1822
    %v1914 = vunpack.c.l.b16 %v1823
    %v1915 = vunpack.c.h.b16 %v1823
    %v1916 = vunpack.c.l.b16 %v1824
    %v1917 = vunpack.c.h.b16 %v1824
    %v1918 = vunpack.c.l.b16 %v1825
    %v1919 = vunpack.c.h.b16 %v1825
    %v1920 = vunpack.c.l.b16 %v1826
    %v1921 = vunpack.c.h.b16 %v1826
    %v1922 = vunpack.c.l.b16 %v1827
    %v1923 = vunpack.c.h.b16 %v1827
    %v1924 = vunpack.c.l.b16 %v1828
    %v1925 = vunpack.c.h.b16 %v1828
    %v1926 = vunpack.c.l.b16 %v1829
    %v1927 = vunpack.c.h.b16 %v1829
    %v1928 = vunpack.c.l.b16 %v1830
    %v1929 = vunpack.c.h.b16 %v1830
    %v1930 = vunpack.c.l.b16 %v1831
    %v1931 = vunpack.c.h.b16 %v1831
    %v1932 = vunpack.c.l.b16 %v1832
    %v1933 = vunpack.c.h.b16 %v1832
    %v1934 = vunpack.c.l.b16 %v1833
    %v1935 = vunpack.c.h.b16 %v1833
    %v1936 = vunpack.c.l.b16 %v1834
    %v1937 = vunpack.c.h.b16 %v1834
    %v1938 = vunpack.c.l.b16 %v1835
    %v1939 = vunpack.c.h.b16 %v1835
    %v1940 = vunpack.c.l.b16 %v1836
    %v1941 = vunpack.c.h.b16 %v1836
    %v1942 = vunpack.c.l.b16 %v1837
    %v1943 = vunpack.c.h.b16 %v1837
    %v1944 = vunpack.c.l.b16 %v1838
    %v1945 = vunpack.c.h.b16 %v1838
    %v1946 = vunpack.c.l.b16 %v1839
    %v1947 = vunpack.c.h.b16 %v1839
    %v1948 = vpack.c.b16 %v1878, %v1876
    %v1949 = vpack.c.b16 %v1879, %v1877
    %v1950 = vpack.c.b16 %v1882, %v1880
    %v1951 = vpack.c.b16 %v1883, %v1881
    %v1952 = vpack.c.b16 %v1886, %v1884
    %v1953 = vpack.c.b16 %v1887, %v1885
    %v1954 = vpack.c.b16 %v1890, %v1888
    %v1955 = vpack.c.b16 %v1891, %v1889
    %v1956 = vpack.c.b16 %v1894, %v1892
    %v1957 = vpack.c.b16 %v1895, %v1893
    %v1958 = vpack.c.b16 %v1898, %v1896
    %v1959 = vpack.c.b16 %v1899, %v1897
    %v1960 = vpack.c.b16 %v1902, %v1900
    %v1961 = vpack.c.b16 %v1903, %v1901
    %v1962 = vpack.c.b16 %v1906, %v1904
    %v1963 = vpack.c.b16 %v1907, %v1905
    %v1964 = vpack.c.b16 %v1910, %v1908
    %v1965 = vpack.c.b16 %v1911, %v1909
    %v1966 = vpack.c.b16 %v1914, %v1912
    %v1967 = vpack.c.b16 %v1915, %v1913
    %v1968 = vpack.c.b16 %v1918, %v1916
    %v1969 = vpack.c.b16 %v1919, %v1917
    %v1970 = vpack.c.b16 %v1922, %v1920
    %v1971 = vpack.c.b16 %v1923, %v1921
    %v1972 = vpack.c.b16 %v1926, %v1924
    %v1973 = vpack.c.b16 %v1927, %v1925
    %v1974 = vpack.c.b16 %v1930, %v1928
    %v1975 = vpack.c.b16 %v1931, %v1929
    %v1976 = vpack.c.b16 %v1934, %v1932
    %v1977 = vpack.c.b16 %v1935, %v1933
    %v1978 = vpack.c.b16 %v1938, %v1936
    %v1979 = vpack.c.b16 %v1939, %v1937
    %v1980 = vpack.c.b16 %v1942, %v1940
    %v1981 = vpack.c.b16 %v1943, %v1941
    %v1982 = vpack.c.b16 %v1946, %v1944
    %v1983 = vpack.c.b16 %v1947, %v1945
    %v2021 = vsel %vm212, %v1803, 0
    %2023 = vmatpush.bf16.msra.mxu0 %v1962
    %2024 = vmatpush.bf16.msra.mxu0 %v1960
    %2025 = vmatpush.bf16.msra.mxu0 %v1958
    %2026 = vmatpush.bf16.msra.mxu0 %v1956
    %2027 = vmatpush.bf16.msra.mxu0 %v1954
    %2028 = vmatpush.bf16.msra.mxu0 %v1952
    %2029 = vmatpush.bf16.msra.mxu0 %v1950
    %2030 = vmatpush.bf16.msra.mxu0 %v1948
    %2031 = vmatmul.bf16.gmra.mxu0 %v1801
    %v2032 = vpop.f32.mrf.mxu0
    %v2033 = vadd.f32 0.0, %v2032
    %v2034 = vpop.f32.mrf.mxu0
    %v2035 = vadd.f32 0.0, %v2034
    %2036 = vdwg.mxu0
    %2037 = vmatpush.bf16.msra.mxu0 %v1978
    %2038 = vmatpush.bf16.msra.mxu0 %v1976
    %2039 = vmatpush.bf16.msra.mxu0 %v1974
    %2040 = vmatpush.bf16.msra.mxu0 %v1972
    %2041 = vmatpush.bf16.msra.mxu0 %v1970
    %2042 = vmatpush.bf16.msra.mxu0 %v1968
    %2043 = vmatpush.bf16.msra.mxu0 %v1966
    %2044 = vmatpush.bf16.msra.mxu0 %v1964
    %2045 = vmatmul.bf16.gmra.mxu0 %v1802
    %v2046 = vpop.f32.mrf.mxu0
    %v2047 = vadd.f32 %v2033, %v2046
    %v2048 = vpop.f32.mrf.mxu0
    %v2049 = vadd.f32 %v2035, %v2048
    %2050 = vdwg.mxu0
    %2051 = vmatpush.bf16.msra.mxu0 0
    %2052 = vmatpush.bf16.msra.mxu0 0
    %2053 = vmatpush.bf16.msra.mxu0 0
    %2054 = vmatpush.bf16.msra.mxu0 0
    %2055 = vmatpush.bf16.msra.mxu0 0
    %2056 = vmatpush.bf16.msra.mxu0 0
    %2057 = vmatpush.bf16.msra.mxu0 %v1982
    %2058 = vmatpush.bf16.msra.mxu0 %v1980
    %2059 = vmatmul.bf16.gmra.mxu0 %v2021
    %v2060 = vpop.f32.mrf.mxu0
    %v2061 = vadd.f32 %v2047, %v2060
    %v2062 = vpop.f32.mrf.mxu0
    %v2063 = vadd.f32 %v2049, %v2062
    %2064 = vdwg.mxu0
    %2065 = vmatpush.bf16.msra.mxu0 %v1963
    %2066 = vmatpush.bf16.msra.mxu0 %v1961
    %2067 = vmatpush.bf16.msra.mxu0 %v1959
    %2068 = vmatpush.bf16.msra.mxu0 %v1957
    %2069 = vmatpush.bf16.msra.mxu0 %v1955
    %2070 = vmatpush.bf16.msra.mxu0 %v1953
    %2071 = vmatpush.bf16.msra.mxu0 %v1951
    %2072 = vmatpush.bf16.msra.mxu0 %v1949
    %2073 = vmatmul.bf16.gmra.mxu0 %v1801
    %v2074 = vpop.f32.mrf.mxu0
    %v2075 = vadd.f32 0.0, %v2074
    %v2076 = vpop.f32.mrf.mxu0
    %v2077 = vadd.f32 0.0, %v2076
    %2078 = vdwg.mxu0
    %2079 = vmatpush.bf16.msra.mxu0 %v1979
    %2080 = vmatpush.bf16.msra.mxu0 %v1977
    %2081 = vmatpush.bf16.msra.mxu0 %v1975
    %2082 = vmatpush.bf16.msra.mxu0 %v1973
    %2083 = vmatpush.bf16.msra.mxu0 %v1971
    %2084 = vmatpush.bf16.msra.mxu0 %v1969
    %2085 = vmatpush.bf16.msra.mxu0 %v1967
    %2086 = vmatpush.bf16.msra.mxu0 %v1965
    %2087 = vmatmul.bf16.gmra.mxu0 %v1802
    %v2088 = vpop.f32.mrf.mxu0
    %v2089 = vadd.f32 %v2075, %v2088
    %v2090 = vpop.f32.mrf.mxu0
    %v2091 = vadd.f32 %v2077, %v2090
    %2092 = vdwg.mxu0
    %2093 = vmatpush.bf16.msra.mxu0 0
    %2094 = vmatpush.bf16.msra.mxu0 0
    %2095 = vmatpush.bf16.msra.mxu0 0
    %2096 = vmatpush.bf16.msra.mxu0 0
    %2097 = vmatpush.bf16.msra.mxu0 0
    %2098 = vmatpush.bf16.msra.mxu0 0
    %2099 = vmatpush.bf16.msra.mxu0 %v1983
    %2100 = vmatpush.bf16.msra.mxu0 %v1981
    %2101 = vmatmul.bf16.gmra.mxu0 %v2021
    %v2102 = vpop.f32.mrf.mxu0
    %v2103 = vadd.f32 %v2089, %v2102
    %v2104 = vpop.f32.mrf.mxu0
    %v2105 = vadd.f32 %v2091, %v2104
    %2106 = vdwg.mxu0
    %v2107 = vadd.f32 %v1703, %v2061
    %v2108 = vadd.f32 %v1745, %v2103
    %v2109 = vadd.f32 %v1705, %v2063
    %v2110 = vadd.f32 %v1747, %v2105
    %v2111 = vld [vmem:[%s6] sm:$0x3]
    %v2113 = vperm.slane %v2111, 0
    %v2114 = vperm.slane %v2111, 1
    %v2117 = vadd.f32 %v2107, %v2113
    %v2118 = vadd.f32 %v2108, %v2114
    %v2119 = vadd.f32 %v2109, %v2113
    %v2120 = vadd.f32 %v2110, %v2114
    %v2121 = vld [vmem:[#allocation11] sm:$0xff]
    %v2122 = vld [vmem:[#allocation11 + $0x8] sm:$0xff]
    %v2123 = vld [vmem:[#allocation11 + $0x10] sm:$0xff]
    %v2124 = vld [vmem:[#allocation11 + $0x18] sm:$0xff]
    %v2125 = vld [vmem:[#allocation11 + $0x20] sm:$0xff]
    %v2126 = vld [vmem:[#allocation11 + $0x28] sm:$0xff]
    %v2127 = vld [vmem:[#allocation11 + $0x30] sm:$0xff]
    %v2128 = vld [vmem:[#allocation11 + $0x38] sm:$0xff]
    %v2129 = vld [vmem:[#allocation11 + $0x40] sm:$0xff]
    %v2130 = vld [vmem:[#allocation11 + $0x48] sm:$0xff]
    %v2131 = vld [vmem:[#allocation11 + $0x50] sm:$0xff]
    %v2132 = vld [vmem:[#allocation11 + $0x58] sm:$0xff]
    %v2133 = vld [vmem:[#allocation11 + $0x60] sm:$0xff]
    %v2134 = vld [vmem:[#allocation11 + $0x68] sm:$0xff]
    %v2135 = vld [vmem:[#allocation11 + $0x70] sm:$0xff]
    %v2136 = vld [vmem:[#allocation11 + $0x78] sm:$0xff]
    %v2137 = vld [vmem:[#allocation11 + $0x80] sm:$0xff]
    %v2138 = vld [vmem:[#allocation11 + $0x88] sm:$0xff]
    %v2139 = vld [vmem:[#allocation11 + $0x90] sm:$0xff]
    %v2140 = vld [vmem:[#allocation11 + $0x98] sm:$0xff]
    %v2141 = vld [vmem:[#allocation11 + $0xa0] sm:$0xff]
    %v2142 = vld [vmem:[#allocation11 + $0xa8] sm:$0xff]
    %v2143 = vld [vmem:[#allocation11 + $0xb0] sm:$0xff]
    %v2144 = vld [vmem:[#allocation11 + $0xb8] sm:$0xff]
    %v2145 = vld [vmem:[#allocation11 + $0xc0] sm:$0xff]
    %v2146 = vld [vmem:[#allocation11 + $0xc8] sm:$0xff]
    %v2147 = vld [vmem:[#allocation11 + $0xd0] sm:$0xff]
    %v2148 = vld [vmem:[#allocation11 + $0xd8] sm:$0xff]
    %v2149 = vld [vmem:[#allocation11 + $0xe0] sm:$0xff]
    %v2150 = vld [vmem:[#allocation11 + $0xe8] sm:$0xff]
    %v2151 = vld [vmem:[#allocation11 + $0xf0] sm:$0xff]
    %v2152 = vld [vmem:[#allocation11 + $0xf8] sm:$0xff]
    %v2153 = vld [vmem:[%s8] sm:$0xff]
    %v2154 = vld [vmem:[%s8 + $0x8] sm:$0xff]
    %v2155 = vld [vmem:[%s8 + $0x10] sm:$0xff]
    %v2156 = vld [vmem:[%s8 + $0x18] sm:$0xff]
    %v2157 = vld [vmem:[%s8 + $0x20] sm:$0xff]
    %v2158 = vld [vmem:[%s8 + $0x28] sm:$0xff]
    %v2159 = vld [vmem:[%s8 + $0x30] sm:$0xff]
    %v2160 = vld [vmem:[%s8 + $0x38] sm:$0xff]
    %v2161 = vadd.f32 %v2117, %v2119
    %v2162 = vrot.slane %v2161, 4
    %v2163 = vadd.f32 %v2161, %v2162
    %v2164 = vrot.slane %v2163, 2
    %v2165 = vadd.f32 %v2163, %v2164
    %v2166 = vrot.slane %v2165, 1
    %v2167 = vadd.f32 %v2165, %v2166
    %v2168 = vadd.f32 %v2118, %v2120
    %v2169 = vrot.slane %v2168, 4
    %v2170 = vadd.f32 %v2168, %v2169
    %v2171 = vrot.slane %v2170, 2
    %v2172 = vadd.f32 %v2170, %v2171
    %v2173 = vrot.slane %v2172, 1
    %v2174 = vadd.f32 %v2172, %v2173
    %2175 = vmatpush.msra.mxu0 %v2136
    %2176 = vmatpush.msra.mxu0 %v2135
    %2177 = vmatpush.msra.mxu0 %v2134
    %2178 = vmatpush.msra.mxu0 %v2133
    %2179 = vmatpush.msra.mxu0 %v2132
    %2180 = vmatpush.msra.mxu0 %v2131
    %2181 = vmatpush.msra.mxu0 %v2130
    %2182 = vmatpush.msra.mxu0 %v2129
    %2183 = vmatpush.msra.mxu0 %v2128
    %2184 = vmatpush.msra.mxu0 %v2127
    %2185 = vmatpush.msra.mxu0 %v2126
    %2186 = vmatpush.msra.mxu0 %v2125
    %2187 = vmatpush.msra.mxu0 %v2124
    %2188 = vmatpush.msra.mxu0 %v2123
    %2189 = vmatpush.msra.mxu0 %v2122
    %2190 = vmatpush.msra.mxu0 %v2121
    %2191 = vmatmul.f32.gmra.mxu0 %v2167
    %v2192 = vpop.f32.mrf.mxu0
    %v2193 = vadd.f32 0.0, %v2192
    %2194 = vdwg.mxu0
    %2195 = vmatpush.msra.mxu0 %v2152
    %2196 = vmatpush.msra.mxu0 %v2151
    %2197 = vmatpush.msra.mxu0 %v2150
    %2198 = vmatpush.msra.mxu0 %v2149
    %2199 = vmatpush.msra.mxu0 %v2148
    %2200 = vmatpush.msra.mxu0 %v2147
    %2201 = vmatpush.msra.mxu0 %v2146
    %2202 = vmatpush.msra.mxu0 %v2145
    %2203 = vmatpush.msra.mxu0 %v2144
    %2204 = vmatpush.msra.mxu0 %v2143
    %2205 = vmatpush.msra.mxu0 %v2142
    %2206 = vmatpush.msra.mxu0 %v2141
    %2207 = vmatpush.msra.mxu0 %v2140
    %2208 = vmatpush.msra.mxu0 %v2139
    %2209 = vmatpush.msra.mxu0 %v2138
    %2210 = vmatpush.msra.mxu0 %v2137
    %2211 = vmatmul.f32.gmra.mxu0 %v2174
    %v2212 = vpop.f32.mrf.mxu0
    %v2213 = vadd.f32 %v2193, %v2212
    %2214 = vdwg.mxu0
    %v2215 = vmul.f32 %v2213, 0.0078125
    %v2217 = vsel %vm212, %v2215, 0
    %2219 = vmatpush.msra.mxu0 0.0
    %2220 = vmatpush.msra.mxu0 0.0
    %2221 = vmatpush.msra.mxu0 0.0
    %2222 = vmatpush.msra.mxu0 0.0
    %2223 = vmatpush.msra.mxu0 0.0
    %2224 = vmatpush.msra.mxu0 0.0
    %2225 = vmatpush.msra.mxu0 0.0
    %2226 = vmatpush.msra.mxu0 0.0
    %2227 = vmatpush.msra.mxu0 0.0
    %2228 = vmatpush.msra.mxu0 0.0
    %2229 = vmatpush.msra.mxu0 0.0
    %2230 = vmatpush.msra.mxu0 0.0
    %2231 = vmatpush.msra.mxu0 %v2159
    %2232 = vmatpush.msra.mxu0 %v2157
    %2233 = vmatpush.msra.mxu0 %v2155
    %2234 = vmatpush.msra.mxu0 %v2153
    %2235 = vmatmul.f32.gmra.mxu0 %v2217
    %v2236 = vpop.f32.mrf.mxu0
    %v2237 = vadd.f32 0.0, %v2236
    %2238 = vdwg.mxu0
    %2239 = vmatpush.msra.mxu0 0.0
    %2240 = vmatpush.msra.mxu0 0.0
    %2241 = vmatpush.msra.mxu0 0.0
    %2242 = vmatpush.msra.mxu0 0.0
    %2243 = vmatpush.msra.mxu0 0.0
    %2244 = vmatpush.msra.mxu0 0.0
    %2245 = vmatpush.msra.mxu0 0.0
    %2246 = vmatpush.msra.mxu0 0.0
    %2247 = vmatpush.msra.mxu0 0.0
    %2248 = vmatpush.msra.mxu0 0.0
    %2249 = vmatpush.msra.mxu0 0.0
    %2250 = vmatpush.msra.mxu0 0.0
    %2251 = vmatpush.msra.mxu0 %v2160
    %2252 = vmatpush.msra.mxu0 %v2158
    %2253 = vmatpush.msra.mxu0 %v2156
    %2254 = vmatpush.msra.mxu0 %v2154
    %2255 = vmatmul.f32.gmra.mxu0 %v2217
    %v2256 = vpop.f32.mrf.mxu0
    %v2257 = vadd.f32 0.0, %v2256
    %2258 = vdwg.mxu0
    %v2259 = vperm.slane %v2237, 0
    %v2260 = vperm.slane %v2257, 0
    %v2261 = vsub.f32 %v2117, %v2259
    %v2262 = vsub.f32 %v2118, %v2260
    %v2263 = vsub.f32 %v2119, %v2259
    %v2264 = vsub.f32 %v2120, %v2260
    %v2265 = vmul.f32 %v2261, %v2261
    %v2266 = vmul.f32 %v2262, %v2262
    %v2267 = vmul.f32 %v2263, %v2263
    %v2268 = vmul.f32 %v2264, %v2264
    %v2269 = vadd.f32 %v2265, %v2267
    %v2270 = vrot.slane %v2269, 4
    %v2271 = vadd.f32 %v2269, %v2270
    %v2272 = vrot.slane %v2271, 2
    %v2273 = vadd.f32 %v2271, %v2272
    %v2274 = vrot.slane %v2273, 1
    %v2275 = vadd.f32 %v2273, %v2274
    %v2276 = vadd.f32 %v2266, %v2268
    %v2277 = vrot.slane %v2276, 4
    %v2278 = vadd.f32 %v2276, %v2277
    %v2279 = vrot.slane %v2278, 2
    %v2280 = vadd.f32 %v2278, %v2279
    %v2281 = vrot.slane %v2280, 1
    %v2282 = vadd.f32 %v2280, %v2281
    %2283 = vmatpush.msra.mxu0 %v2136
    %2284 = vmatpush.msra.mxu0 %v2135
    %2285 = vmatpush.msra.mxu0 %v2134
    %2286 = vmatpush.msra.mxu0 %v2133
    %2287 = vmatpush.msra.mxu0 %v2132
    %2288 = vmatpush.msra.mxu0 %v2131
    %2289 = vmatpush.msra.mxu0 %v2130
    %2290 = vmatpush.msra.mxu0 %v2129
    %2291 = vmatpush.msra.mxu0 %v2128
    %2292 = vmatpush.msra.mxu0 %v2127
    %2293 = vmatpush.msra.mxu0 %v2126
    %2294 = vmatpush.msra.mxu0 %v2125
    %2295 = vmatpush.msra.mxu0 %v2124
    %2296 = vmatpush.msra.mxu0 %v2123
    %2297 = vmatpush.msra.mxu0 %v2122
    %2298 = vmatpush.msra.mxu0 %v2121
    %2299 = vmatmul.f32.gmra.mxu0 %v2275
    %v2300 = vpop.f32.mrf.mxu0
    %v2301 = vadd.f32 0.0, %v2300
    %2302 = vdwg.mxu0
    %2303 = vmatpush.msra.mxu0 %v2152
    %2304 = vmatpush.msra.mxu0 %v2151
    %2305 = vmatpush.msra.mxu0 %v2150
    %2306 = vmatpush.msra.mxu0 %v2149
    %2307 = vmatpush.msra.mxu0 %v2148
    %2308 = vmatpush.msra.mxu0 %v2147
    %2309 = vmatpush.msra.mxu0 %v2146
    %2310 = vmatpush.msra.mxu0 %v2145
    %2311 = vmatpush.msra.mxu0 %v2144
    %2312 = vmatpush.msra.mxu0 %v2143
    %2313 = vmatpush.msra.mxu0 %v2142
    %2314 = vmatpush.msra.mxu0 %v2141
    %2315 = vmatpush.msra.mxu0 %v2140
    %2316 = vmatpush.msra.mxu0 %v2139
    %2317 = vmatpush.msra.mxu0 %v2138
    %2318 = vmatpush.msra.mxu0 %v2137
    %2319 = vmatmul.f32.gmra.mxu0 %v2282
    %v2320 = vpop.f32.mrf.mxu0
    %v2321 = vadd.f32 %v2301, %v2320
    %2322 = vdwg.mxu0
    %v2323 = vmul.f32 %v2321, 0.0078125
    %v2324 = vadd.f32 %v2323, 1e-05
    %v2325 = vrsqrt.pop %v2324
    %v2326 = vmul.f32 %v2325, %v2324
    %v2327 = vmul.f32 %v2326, %v2325
    %v2328 = vmul.f32 0.5, %v2327
    %v2329 = vsub.f32 1.5, %v2328
    %v2330 = vmul.f32 %v2325, %v2329
    %vm2331 = vweird.f32 %v2324
    %vm2332 = vweird.f32 %v2325
    %vm2333 = vmor %vm2331, %vm2332
    %v2334 = vsel %vm2333, %v2325, %v2330
    %v2335 = vld [vmem:[%s9] sm:$0x1]
    %v2336 = vmul.f32 %v2335, %v2334
    %v2338 = vsel %vm212, %v2336, 0
    %2340 = vmatpush.msra.mxu0 0.0
    %2341 = vmatpush.msra.mxu0 0.0
    %2342 = vmatpush.msra.mxu0 0.0
    %2343 = vmatpush.msra.mxu0 0.0
    %2344 = vmatpush.msra.mxu0 0.0
    %2345 = vmatpush.msra.mxu0 0.0
    %2346 = vmatpush.msra.mxu0 0.0
    %2347 = vmatpush.msra.mxu0 0.0
    %2348 = vmatpush.msra.mxu0 0.0
    %2349 = vmatpush.msra.mxu0 0.0
    %2350 = vmatpush.msra.mxu0 0.0
    %2351 = vmatpush.msra.mxu0 0.0
    %2352 = vmatpush.msra.mxu0 %v2159
    %2353 = vmatpush.msra.mxu0 %v2157
    %2354 = vmatpush.msra.mxu0 %v2155
    %2355 = vmatpush.msra.mxu0 %v2153
    %2356 = vmatmul.f32.gmra.mxu0 %v2338
    %v2357 = vpop.f32.mrf.mxu0
    %v2358 = vadd.f32 0.0, %v2357
    %2359 = vdwg.mxu0
    %2360 = vmatpush.msra.mxu0 0.0
    %2361 = vmatpush.msra.mxu0 0.0
    %2362 = vmatpush.msra.mxu0 0.0
    %2363 = vmatpush.msra.mxu0 0.0
    %2364 = vmatpush.msra.mxu0 0.0
    %2365 = vmatpush.msra.mxu0 0.0
    %2366 = vmatpush.msra.mxu0 0.0
    %2367 = vmatpush.msra.mxu0 0.0
    %2368 = vmatpush.msra.mxu0 0.0
    %2369 = vmatpush.msra.mxu0 0.0
    %2370 = vmatpush.msra.mxu0 0.0
    %2371 = vmatpush.msra.mxu0 0.0
    %2372 = vmatpush.msra.mxu0 %v2160
    %2373 = vmatpush.msra.mxu0 %v2158
    %2374 = vmatpush.msra.mxu0 %v2156
    %2375 = vmatpush.msra.mxu0 %v2154
    %2376 = vmatmul.f32.gmra.mxu0 %v2338
    %v2377 = vpop.f32.mrf.mxu0
    %v2378 = vadd.f32 0.0, %v2377
    %2379 = vdwg.mxu0
    %v2380 = vld [vmem:[%s10] sm:$0x1]
    %v2382 = vsel %vm212, %v2380, 0
    %2384 = vmatpush.msra.mxu0 0.0
    %2385 = vmatpush.msra.mxu0 0.0
    %2386 = vmatpush.msra.mxu0 0.0
    %2387 = vmatpush.msra.mxu0 0.0
    %2388 = vmatpush.msra.mxu0 0.0
    %2389 = vmatpush.msra.mxu0 0.0
    %2390 = vmatpush.msra.mxu0 0.0
    %2391 = vmatpush.msra.mxu0 0.0
    %2392 = vmatpush.msra.mxu0 0.0
    %2393 = vmatpush.msra.mxu0 0.0
    %2394 = vmatpush.msra.mxu0 0.0
    %2395 = vmatpush.msra.mxu0 0.0
    %2396 = vmatpush.msra.mxu0 %v2159
    %2397 = vmatpush.msra.mxu0 %v2157
    %2398 = vmatpush.msra.mxu0 %v2155
    %2399 = vmatpush.msra.mxu0 %v2153
    %2400 = vmatmul.f32.gmra.mxu0 %v2382
    %v2401 = vpop.f32.mrf.mxu0
    %v2402 = vadd.f32 0.0, %v2401
    %2403 = vdwg.mxu0
    %2404 = vmatpush.msra.mxu0 0.0
    %2405 = vmatpush.msra.mxu0 0.0
    %2406 = vmatpush.msra.mxu0 0.0
    %2407 = vmatpush.msra.mxu0 0.0
    %2408 = vmatpush.msra.mxu0 0.0
    %2409 = vmatpush.msra.mxu0 0.0
    %2410 = vmatpush.msra.mxu0 0.0
    %2411 = vmatpush.msra.mxu0 0.0
    %2412 = vmatpush.msra.mxu0 0.0
    %2413 = vmatpush.msra.mxu0 0.0
    %2414 = vmatpush.msra.mxu0 0.0
    %2415 = vmatpush.msra.mxu0 0.0
    %2416 = vmatpush.msra.mxu0 %v2160
    %2417 = vmatpush.msra.mxu0 %v2158
    %2418 = vmatpush.msra.mxu0 %v2156
    %2419 = vmatpush.msra.mxu0 %v2154
    %2420 = vmatmul.f32.gmra.mxu0 %v2382
    %v2421 = vpop.f32.mrf.mxu0
    %v2422 = vadd.f32 0.0, %v2421
    %2423 = vdwg.mxu0
    %v2424 = vperm.slane %v2358, 0
    %v2425 = vperm.slane %v2378, 0
    %v2426 = vmul.f32 %v2261, %v2424
    %v2427 = vmul.f32 %v2262, %v2425
    %v2428 = vmul.f32 %v2263, %v2424
    %v2429 = vmul.f32 %v2264, %v2425
    %v2430 = vperm.slane %v2402, 0
    %v2431 = vperm.slane %v2422, 0
    %v2432 = vadd.f32 %v2426, %v2430
    %v2433 = vadd.f32 %v2427, %v2431
    %v2434 = vadd.f32 %v2428, %v2430
    %v2435 = vadd.f32 %v2429, %v2431
    %vm2436 = vcmp.ge.f32.partialorder %v2432, 0.0
    %vm2437 = vcmp.ge.f32.partialorder %v2433, 0.0
    %vm2438 = vcmp.ge.f32.partialorder %v2434, 0.0
    %vm2439 = vcmp.ge.f32.partialorder %v2435, 0.0
    %v2440 = vmul.f32 %v2432, 0.2
    %v2441 = vmul.f32 %v2433, 0.2
    %v2442 = vmul.f32 %v2434, 0.2
    %v2443 = vmul.f32 %v2435, 0.2
    %v2444 = vsel %vm2436, %v2432, %v2440
    %v2445 = vsel %vm2437, %v2433, %v2441
    %v2446 = vsel %vm2438, %v2434, %v2442
    %v2447 = vsel %vm2439, %v2435, %v2443
    %v2450 = vrot.slane %v2444, 7
    %v2451 = vrot.slane %v2445, 7
    %2452 = vrot.lane.b32.xlu0 %v2450, 32
    %v2453 = vpop.permute.xlu0 %2452
    %2454 = vrot.lane.b32.xlu0 %v2451, 32
    %v2455 = vpop.permute.xlu0 %2454
    %v2456 = vsel %vm212, %v2453, %v2455
    %vm2460 = vcmask 1047809
    %2461 = vst.msk [vmem:[#allocation3] sm:$0xfe] %vm2460, %v2453
    %2462 = vst [vmem:[#allocation3 + $0x8] sm:$0xfe] %v2456
    %vm2463 = vcmask 261121
    %2464 = vst.msk [vmem:[#allocation3 + $0x10] sm:$0xfe] %vm2463, %v2455
    %vm2465 = vcmask 1040640
    %2466 = vst.msk [vmem:[#allocation3 + $0x18] sm:$0x1] %vm2465, %v2453
    %2467 = vst [vmem:[#allocation3 + $0x20] sm:$0x1] %v2456
    %vm2468 = vcmask 253952
    %2469 = vst.msk [vmem:[#allocation3 + $0x28] sm:$0x1] %vm2468, %v2455
    %v2472 = vrot.slane %v2446, 5
    %v2473 = vrot.slane %v2447, 5
    %2474 = vrot.lane.b32.xlu0 %v2472, 32
    %v2475 = vpop.permute.xlu0 %2474
    %2476 = vrot.lane.b32.xlu0 %v2473, 32
    %v2477 = vpop.permute.xlu0 %2476
    %v2478 = vsel %vm212, %v2475, %v2477
    %vm2482 = vcmask 1047811
    %2483 = vst.msk [vmem:[#allocation3 + $0x18] sm:$0xf8] %vm2482, %v2475
    %2484 = vst [vmem:[#allocation3 + $0x20] sm:$0xf8] %v2478
    %vm2485 = vcmask 261123
    %2486 = vst.msk [vmem:[#allocation3 + $0x28] sm:$0xf8] %vm2485, %v2477
    %vm2487 = vcmask 1042688
    %2488 = vst.msk [vmem:[#allocation3 + $0x30] sm:$0x7] %vm2487, %v2475
    %2489 = vst [vmem:[#allocation3 + $0x38] sm:$0x7] %v2478
    %vm2490 = vcmask 256000
    %2491 = vst.msk [vmem:[#allocation3 + $0x40] sm:$0x7] %vm2490, %v2477
    %v2492 = vld [vmem:[#allocation3] sm:$0xff]
    %v2493 = vld [vmem:[#allocation3 + $0x8] sm:$0xff]
    %v2494 = vld [vmem:[#allocation3 + $0x10] sm:$0xff]
    %v2495 = vld [vmem:[#allocation3 + $0x18] sm:$0xff]
    %v2496 = vld [vmem:[#allocation3 + $0x20] sm:$0xff]
    %v2497 = vld [vmem:[#allocation3 + $0x28] sm:$0xff]
    %v2498 = vld [vmem:[#allocation3 + $0x30] sm:$0xf]
    %v2499 = vld [vmem:[#allocation3 + $0x38] sm:$0xf]
    %v2500 = vld [vmem:[#allocation3 + $0x40] sm:$0xf]
    %v2501 = vpack.c.bf16 %v2495, %v2492
    %v2502 = vpack.c.bf16 %v2496, %v2493
    %v2503 = vpack.c.bf16 %v2497, %v2494
    %v2504 = vpack.c.bf16 %v2498, %v2498
    %v2505 = vpack.c.bf16 %v2499, %v2499
    %v2506 = vpack.c.bf16 %v2500, %v2500
    %v2507 = vld [vmem:[%s11] sm:$0xf]
    %vm2508 = vcmask 162816
    %v2510 = vsel %vm2508, %v2507, 0
    %v2513 = vsel %vm301, %v2504, 0
    %v2516 = vsel %vm301, %v2505, 0
    %v2519 = vsel %vm301, %v2506, 0
    %2521 = vmatpush.bf16.msra.mxu0 0
    %2522 = vmatpush.bf16.msra.mxu0 0
    %2523 = vmatpush.bf16.msra.mxu0 0
    %2524 = vmatpush.bf16.msra.mxu0 0
    %2525 = vmatpush.bf16.msra.mxu0 0
    %2526 = vmatpush.bf16.msra.mxu0 0
    %2527 = vmatpush.bf16.msra.mxu0 %v2513
    %2528 = vmatpush.bf16.msra.mxu0 %v2501
    %2529 = vmatmul.bf16.gmra.mxu0 %v2510
    %v2530 = vpop.f32.mrf.mxu0
    %v2531 = vadd.f32 0.0, %v2530
    %v2532 = vpop.f32.mrf.mxu0
    %2533 = vdwg.mxu0
    %2534 = vmatpush.bf16.msra.mxu0 0
    %2535 = vmatpush.bf16.msra.mxu0 0
    %2536 = vmatpush.bf16.msra.mxu0 0
    %2537 = vmatpush.bf16.msra.mxu0 0
    %2538 = vmatpush.bf16.msra.mxu0 0
    %2539 = vmatpush.bf16.msra.mxu0 0
    %2540 = vmatpush.bf16.msra.mxu0 %v2516
    %2541 = vmatpush.bf16.msra.mxu0 %v2502
    %2542 = vmatmul.bf16.gmra.mxu0 %v2510
    %v2543 = vpop.f32.mrf.mxu0
    %v2544 = vadd.f32 0.0, %v2543
    %v2545 = vpop.f32.mrf.mxu0
    %2546 = vdwg.mxu0
    %2547 = vmatpush.bf16.msra.mxu0 0
    %2548 = vmatpush.bf16.msra.mxu0 0
    %2549 = vmatpush.bf16.msra.mxu0 0
    %2550 = vmatpush.bf16.msra.mxu0 0
    %2551 = vmatpush.bf16.msra.mxu0 0
    %2552 = vmatpush.bf16.msra.mxu0 0
    %2553 = vmatpush.bf16.msra.mxu0 %v2519
    %2554 = vmatpush.bf16.msra.mxu0 %v2503
    %2555 = vmatmul.bf16.gmra.mxu0 %v2510
    %v2556 = vpop.f32.mrf.mxu0
    %v2557 = vadd.f32 0.0, %v2556
    %v2558 = vpop.f32.mrf.mxu0
    %2559 = vdwg.mxu0
    %v2560 = vpack.c.bf16 %v2531, %v2531
    %v2561 = vpack.c.bf16 %v2544, %v2544
    %v2562 = vpack.c.bf16 %v2557, %v2557
    %v2563 = vld [vmem:[#allocation13] sm:$0xff]
    %v2564 = vld [vmem:[#allocation13 + $0x8] sm:$0xff]
    %v2565 = vld [vmem:[#allocation13 + $0x10] sm:$0xff]
    %v2566 = vld [vmem:[#allocation13 + $0x18] sm:$0xff]
    %v2567 = vld [vmem:[#allocation13 + $0x20] sm:$0xff]
    %v2568 = vld [vmem:[#allocation13 + $0x28] sm:$0xff]
    %v2569 = vld [vmem:[#allocation13 + $0x30] sm:$0xff]
    %v2570 = vld [vmem:[#allocation13 + $0x38] sm:$0xff]
    %v2571 = vld [vmem:[#allocation13 + $0x40] sm:$0xff]
    %v2572 = vld [vmem:[#allocation13 + $0x48] sm:$0xff]
    %v2573 = vld [vmem:[#allocation13 + $0x50] sm:$0xff]
    %v2574 = vld [vmem:[#allocation13 + $0x58] sm:$0xff]
    %v2575 = vld [vmem:[#allocation13 + $0x60] sm:$0xff]
    %v2576 = vld [vmem:[#allocation13 + $0x68] sm:$0xff]
    %v2577 = vld [vmem:[#allocation13 + $0x70] sm:$0xff]
    %v2578 = vld [vmem:[#allocation13 + $0x78] sm:$0xff]
    %v2579 = vld [vmem:[#allocation13 + $0x80] sm:$0xff]
    %v2580 = vld [vmem:[#allocation13 + $0x88] sm:$0xff]
    %v2581 = vld [vmem:[#allocation13 + $0x90] sm:$0xff]
    %v2582 = vld [vmem:[#allocation13 + $0x98] sm:$0xff]
    %v2583 = vld [vmem:[#allocation13 + $0xa0] sm:$0xff]
    %v2584 = vld [vmem:[#allocation13 + $0xa8] sm:$0xff]
    %v2585 = vld [vmem:[#allocation13 + $0xb0] sm:$0xff]
    %v2586 = vld [vmem:[#allocation13 + $0xb8] sm:$0xff]
    %v2587 = vld [vmem:[#allocation13 + $0xc0] sm:$0xff]
    %v2588 = vld [vmem:[#allocation13 + $0xc8] sm:$0xff]
    %v2589 = vld [vmem:[#allocation13 + $0xd0] sm:$0xff]
    %v2590 = vld [vmem:[#allocation13 + $0xd8] sm:$0xff]
    %v2591 = vld [vmem:[#allocation13 + $0xe0] sm:$0xff]
    %v2592 = vld [vmem:[#allocation13 + $0xe8] sm:$0xff]
    %v2593 = vld [vmem:[#allocation13 + $0xf0] sm:$0xff]
    %v2594 = vld [vmem:[#allocation13 + $0xf8] sm:$0xff]
    %v2595 = vld [vmem:[#allocation13 + $0x100] sm:$0xff]
    %v2596 = vld [vmem:[#allocation13 + $0x108] sm:$0xff]
    %v2597 = vld [vmem:[#allocation13 + $0x110] sm:$0xff]
    %v2598 = vld [vmem:[#allocation13 + $0x118] sm:$0xff]
    %v2599 = vld [vmem:[#allocation13 + $0x120] sm:$0xff]
    %v2600 = vld [vmem:[#allocation13 + $0x128] sm:$0xff]
    %v2601 = vld [vmem:[#allocation13 + $0x130] sm:$0xff]
    %v2602 = vld [vmem:[#allocation13 + $0x138] sm:$0xff]
    %v2603 = vld [vmem:[%s11 + $0x4] sm:$0xf]
    %v2605 = vsel %vm2508, %v2603, 0
    %2607 = vmatpush.bf16.msra.mxu0 0
    %2608 = vmatpush.bf16.msra.mxu0 0
    %2609 = vmatpush.bf16.msra.mxu0 0
    %2610 = vmatpush.bf16.msra.mxu0 0
    %2611 = vmatpush.bf16.msra.mxu0 0
    %2612 = vmatpush.bf16.msra.mxu0 0
    %2613 = vmatpush.bf16.msra.mxu0 %v2513
    %2614 = vmatpush.bf16.msra.mxu0 %v2501
    %2615 = vmatmul.bf16.gmra.mxu0 %v2605
    %v2616 = vpop.f32.mrf.mxu0
    %v2617 = vadd.f32 0.0, %v2616
    %v2618 = vpop.f32.mrf.mxu0
    %2619 = vdwg.mxu0
    %2620 = vmatpush.bf16.msra.mxu0 0
    %2621 = vmatpush.bf16.msra.mxu0 0
    %2622 = vmatpush.bf16.msra.mxu0 0
    %2623 = vmatpush.bf16.msra.mxu0 0
    %2624 = vmatpush.bf16.msra.mxu0 0
    %2625 = vmatpush.bf16.msra.mxu0 0
    %2626 = vmatpush.bf16.msra.mxu0 %v2516
    %2627 = vmatpush.bf16.msra.mxu0 %v2502
    %2628 = vmatmul.bf16.gmra.mxu0 %v2605
    %v2629 = vpop.f32.mrf.mxu0
    %v2630 = vadd.f32 0.0, %v2629
    %v2631 = vpop.f32.mrf.mxu0
    %2632 = vdwg.mxu0
    %2633 = vmatpush.bf16.msra.mxu0 0
    %2634 = vmatpush.bf16.msra.mxu0 0
    %2635 = vmatpush.bf16.msra.mxu0 0
    %2636 = vmatpush.bf16.msra.mxu0 0
    %2637 = vmatpush.bf16.msra.mxu0 0
    %2638 = vmatpush.bf16.msra.mxu0 0
    %2639 = vmatpush.bf16.msra.mxu0 %v2519
    %2640 = vmatpush.bf16.msra.mxu0 %v2503
    %2641 = vmatmul.bf16.gmra.mxu0 %v2605
    %v2642 = vpop.f32.mrf.mxu0
    %v2643 = vadd.f32 0.0, %v2642
    %v2644 = vpop.f32.mrf.mxu0
    %2645 = vdwg.mxu0
    %v2646 = vpack.c.bf16 %v2617, %v2617
    %v2647 = vpack.c.bf16 %v2630, %v2630
    %v2648 = vpack.c.bf16 %v2643, %v2643
    %v2649 = vld [vmem:[#allocation13 + $0x140] sm:$0xff]
    %v2650 = vld [vmem:[#allocation13 + $0x148] sm:$0xff]
    %v2651 = vld [vmem:[#allocation13 + $0x150] sm:$0xff]
    %v2652 = vld [vmem:[#allocation13 + $0x158] sm:$0xff]
    %v2653 = vld [vmem:[#allocation13 + $0x160] sm:$0xff]
    %v2654 = vld [vmem:[#allocation13 + $0x168] sm:$0xff]
    %v2655 = vld [vmem:[#allocation13 + $0x170] sm:$0xff]
    %v2656 = vld [vmem:[#allocation13 + $0x178] sm:$0xff]
    %v2657 = vld [vmem:[#allocation13 + $0x180] sm:$0xff]
    %v2658 = vld [vmem:[#allocation13 + $0x188] sm:$0xff]
    %v2659 = vld [vmem:[#allocation13 + $0x190] sm:$0xff]
    %v2660 = vld [vmem:[#allocation13 + $0x198] sm:$0xff]
    %v2661 = vld [vmem:[#allocation13 + $0x1a0] sm:$0xff]
    %v2662 = vld [vmem:[#allocation13 + $0x1a8] sm:$0xff]
    %v2663 = vld [vmem:[#allocation13 + $0x1b0] sm:$0xff]
    %v2664 = vld [vmem:[#allocation13 + $0x1b8] sm:$0xff]
    %v2665 = vld [vmem:[#allocation13 + $0x1c0] sm:$0xff]
    %v2666 = vld [vmem:[#allocation13 + $0x1c8] sm:$0xff]
    %v2667 = vld [vmem:[#allocation13 + $0x1d0] sm:$0xff]
    %v2668 = vld [vmem:[#allocation13 + $0x1d8] sm:$0xff]
    %v2669 = vld [vmem:[#allocation13 + $0x1e0] sm:$0xff]
    %v2670 = vld [vmem:[#allocation13 + $0x1e8] sm:$0xff]
    %v2671 = vld [vmem:[#allocation13 + $0x1f0] sm:$0xff]
    %v2672 = vld [vmem:[#allocation13 + $0x1f8] sm:$0xff]
    %v2673 = vld [vmem:[#allocation13 + $0x200] sm:$0xff]
    %v2674 = vld [vmem:[#allocation13 + $0x208] sm:$0xff]
    %v2675 = vld [vmem:[#allocation13 + $0x210] sm:$0xff]
    %v2676 = vld [vmem:[#allocation13 + $0x218] sm:$0xff]
    %v2677 = vld [vmem:[#allocation13 + $0x220] sm:$0xff]
    %v2678 = vld [vmem:[#allocation13 + $0x228] sm:$0xff]
    %v2679 = vld [vmem:[#allocation13 + $0x230] sm:$0xff]
    %v2680 = vld [vmem:[#allocation13 + $0x238] sm:$0xff]
    %v2681 = vld [vmem:[#allocation13 + $0x240] sm:$0xff]
    %v2682 = vld [vmem:[#allocation13 + $0x248] sm:$0xff]
    %v2683 = vld [vmem:[#allocation13 + $0x250] sm:$0xff]
    %v2684 = vld [vmem:[#allocation13 + $0x258] sm:$0xff]
    %v2685 = vld [vmem:[#allocation13 + $0x260] sm:$0xff]
    %v2686 = vld [vmem:[#allocation13 + $0x268] sm:$0xff]
    %v2687 = vld [vmem:[#allocation13 + $0x270] sm:$0xff]
    %v2688 = vld [vmem:[#allocation13 + $0x278] sm:$0xff]
    %v2729 = vunpack.c.l.b16 %v2649
    %v2730 = vunpack.c.h.b16 %v2649
    %v2731 = vunpack.c.l.b16 %v2650
    %v2732 = vunpack.c.h.b16 %v2650
    %v2733 = vunpack.c.l.b16 %v2651
    %v2734 = vunpack.c.h.b16 %v2651
    %v2735 = vunpack.c.l.b16 %v2652
    %v2736 = vunpack.c.h.b16 %v2652
    %v2737 = vunpack.c.l.b16 %v2653
    %v2738 = vunpack.c.h.b16 %v2653
    %v2739 = vunpack.c.l.b16 %v2654
    %v2740 = vunpack.c.h.b16 %v2654
    %v2741 = vunpack.c.l.b16 %v2655
    %v2742 = vunpack.c.h.b16 %v2655
    %v2743 = vunpack.c.l.b16 %v2656
    %v2744 = vunpack.c.h.b16 %v2656
    %v2745 = vunpack.c.l.b16 %v2657
    %v2746 = vunpack.c.h.b16 %v2657
    %v2747 = vunpack.c.l.b16 %v2658
    %v2748 = vunpack.c.h.b16 %v2658
    %v2749 = vunpack.c.l.b16 %v2659
    %v2750 = vunpack.c.h.b16 %v2659
    %v2751 = vunpack.c.l.b16 %v2660
    %v2752 = vunpack.c.h.b16 %v2660
    %v2753 = vunpack.c.l.b16 %v2661
    %v2754 = vunpack.c.h.b16 %v2661
    %v2755 = vunpack.c.l.b16 %v2662
    %v2756 = vunpack.c.h.b16 %v2662
    %v2757 = vunpack.c.l.b16 %v2663
    %v2758 = vunpack.c.h.b16 %v2663
    %v2759 = vunpack.c.l.b16 %v2664
    %v2760 = vunpack.c.h.b16 %v2664
    %v2761 = vunpack.c.l.b16 %v2665
    %v2762 = vunpack.c.h.b16 %v2665
    %v2763 = vunpack.c.l.b16 %v2666
    %v2764 = vunpack.c.h.b16 %v2666
    %v2765 = vunpack.c.l.b16 %v2667
    %v2766 = vunpack.c.h.b16 %v2667
    %v2767 = vunpack.c.l.b16 %v2668
    %v2768 = vunpack.c.h.b16 %v2668
    %v2769 = vunpack.c.l.b16 %v2669
    %v2770 = vunpack.c.h.b16 %v2669
    %v2771 = vunpack.c.l.b16 %v2670
    %v2772 = vunpack.c.h.b16 %v2670
    %v2773 = vunpack.c.l.b16 %v2671
    %v2774 = vunpack.c.h.b16 %v2671
    %v2775 = vunpack.c.l.b16 %v2672
    %v2776 = vunpack.c.h.b16 %v2672
    %v2777 = vunpack.c.l.b16 %v2673
    %v2778 = vunpack.c.h.b16 %v2673
    %v2779 = vunpack.c.l.b16 %v2674
    %v2780 = vunpack.c.h.b16 %v2674
    %v2781 = vunpack.c.l.b16 %v2675
    %v2782 = vunpack.c.h.b16 %v2675
    %v2783 = vunpack.c.l.b16 %v2676
    %v2784 = vunpack.c.h.b16 %v2676
    %v2785 = vunpack.c.l.b16 %v2677
    %v2786 = vunpack.c.h.b16 %v2677
    %v2787 = vunpack.c.l.b16 %v2678
    %v2788 = vunpack.c.h.b16 %v2678
    %v2789 = vunpack.c.l.b16 %v2679
    %v2790 = vunpack.c.h.b16 %v2679
    %v2791 = vunpack.c.l.b16 %v2680
    %v2792 = vunpack.c.h.b16 %v2680
    %v2793 = vunpack.c.l.b16 %v2681
    %v2794 = vunpack.c.h.b16 %v2681
    %v2795 = vunpack.c.l.b16 %v2682
    %v2796 = vunpack.c.h.b16 %v2682
    %v2797 = vunpack.c.l.b16 %v2683
    %v2798 = vunpack.c.h.b16 %v2683
    %v2799 = vunpack.c.l.b16 %v2684
    %v2800 = vunpack.c.h.b16 %v2684
    %v2801 = vunpack.c.l.b16 %v2685
    %v2802 = vunpack.c.h.b16 %v2685
    %v2803 = vunpack.c.l.b16 %v2686
    %v2804 = vunpack.c.h.b16 %v2686
    %v2805 = vunpack.c.l.b16 %v2687
    %v2806 = vunpack.c.h.b16 %v2687
    %v2807 = vunpack.c.l.b16 %v2688
    %v2808 = vunpack.c.h.b16 %v2688
    %v2809 = vpack.c.b16 %v2731, %v2729
    %v2810 = vpack.c.b16 %v2732, %v2730
    %v2811 = vpack.c.b16 %v2735, %v2733
    %v2812 = vpack.c.b16 %v2736, %v2734
    %v2813 = vpack.c.b16 %v2739, %v2737
    %v2814 = vpack.c.b16 %v2740, %v2738
    %v2815 = vpack.c.b16 %v2743, %v2741
    %v2816 = vpack.c.b16 %v2744, %v2742
    %v2817 = vpack.c.b16 %v2747, %v2745
    %v2818 = vpack.c.b16 %v2748, %v2746
    %v2819 = vpack.c.b16 %v2751, %v2749
    %v2820 = vpack.c.b16 %v2752, %v2750
    %v2821 = vpack.c.b16 %v2755, %v2753
    %v2822 = vpack.c.b16 %v2756, %v2754
    %v2823 = vpack.c.b16 %v2759, %v2757
    %v2824 = vpack.c.b16 %v2760, %v2758
    %v2825 = vpack.c.b16 %v2763, %v2761
    %v2826 = vpack.c.b16 %v2764, %v2762
    %v2827 = vpack.c.b16 %v2767, %v2765
    %v2828 = vpack.c.b16 %v2768, %v2766
    %v2829 = vpack.c.b16 %v2771, %v2769
    %v2830 = vpack.c.b16 %v2772, %v2770
    %v2831 = vpack.c.b16 %v2775, %v2773
    %v2832 = vpack.c.b16 %v2776, %v2774
    %v2833 = vpack.c.b16 %v2779, %v2777
    %v2834 = vpack.c.b16 %v2780, %v2778
    %v2835 = vpack.c.b16 %v2783, %v2781
    %v2836 = vpack.c.b16 %v2784, %v2782
    %v2837 = vpack.c.b16 %v2787, %v2785
    %v2838 = vpack.c.b16 %v2788, %v2786
    %v2839 = vpack.c.b16 %v2791, %v2789
    %v2840 = vpack.c.b16 %v2792, %v2790
    %v2841 = vpack.c.b16 %v2795, %v2793
    %v2842 = vpack.c.b16 %v2796, %v2794
    %v2843 = vpack.c.b16 %v2799, %v2797
    %v2844 = vpack.c.b16 %v2800, %v2798
    %v2845 = vpack.c.b16 %v2803, %v2801
    %v2846 = vpack.c.b16 %v2804, %v2802
    %v2847 = vpack.c.b16 %v2807, %v2805
    %v2848 = vpack.c.b16 %v2808, %v2806
    %v2890 = vsel %vm229, %v2648, 0
    %2892 = vmatpush.bf16.msra.mxu0 %v2823
    %2893 = vmatpush.bf16.msra.mxu0 %v2821
    %2894 = vmatpush.bf16.msra.mxu0 %v2819
    %2895 = vmatpush.bf16.msra.mxu0 %v2817
    %2896 = vmatpush.bf16.msra.mxu0 %v2815
    %2897 = vmatpush.bf16.msra.mxu0 %v2813
    %2898 = vmatpush.bf16.msra.mxu0 %v2811
    %2899 = vmatpush.bf16.msra.mxu0 %v2809
    %2900 = vmatmul.bf16.gmra.mxu0 %v2646
    %v2901 = vpop.f32.mrf.mxu0
    %v2902 = vadd.f32 0.0, %v2901
    %v2903 = vpop.f32.mrf.mxu0
    %2904 = vdwg.mxu0
    %2905 = vmatpush.bf16.msra.mxu0 %v2839
    %2906 = vmatpush.bf16.msra.mxu0 %v2837
    %2907 = vmatpush.bf16.msra.mxu0 %v2835
    %2908 = vmatpush.bf16.msra.mxu0 %v2833
    %2909 = vmatpush.bf16.msra.mxu0 %v2831
    %2910 = vmatpush.bf16.msra.mxu0 %v2829
    %2911 = vmatpush.bf16.msra.mxu0 %v2827
    %2912 = vmatpush.bf16.msra.mxu0 %v2825
    %2913 = vmatmul.bf16.gmra.mxu0 %v2647
    %v2914 = vpop.f32.mrf.mxu0
    %v2915 = vadd.f32 %v2902, %v2914
    %v2916 = vpop.f32.mrf.mxu0
    %2917 = vdwg.mxu0
    %2918 = vmatpush.bf16.msra.mxu0 0
    %2919 = vmatpush.bf16.msra.mxu0 0
    %2920 = vmatpush.bf16.msra.mxu0 0
    %2921 = vmatpush.bf16.msra.mxu0 0
    %2922 = vmatpush.bf16.msra.mxu0 %v2847
    %2923 = vmatpush.bf16.msra.mxu0 %v2845
    %2924 = vmatpush.bf16.msra.mxu0 %v2843
    %2925 = vmatpush.bf16.msra.mxu0 %v2841
    %2926 = vmatmul.bf16.gmra.mxu0 %v2890
    %v2927 = vpop.f32.mrf.mxu0
    %v2928 = vadd.f32 %v2915, %v2927
    %v2929 = vpop.f32.mrf.mxu0
    %2930 = vdwg.mxu0
    %2931 = vmatpush.bf16.msra.mxu0 %v2824
    %2932 = vmatpush.bf16.msra.mxu0 %v2822
    %2933 = vmatpush.bf16.msra.mxu0 %v2820
    %2934 = vmatpush.bf16.msra.mxu0 %v2818
    %2935 = vmatpush.bf16.msra.mxu0 %v2816
    %2936 = vmatpush.bf16.msra.mxu0 %v2814
    %2937 = vmatpush.bf16.msra.mxu0 %v2812
    %2938 = vmatpush.bf16.msra.mxu0 %v2810
    %2939 = vmatmul.bf16.gmra.mxu0 %v2646
    %v2940 = vpop.f32.mrf.mxu0
    %v2941 = vadd.f32 0.0, %v2940
    %v2942 = vpop.f32.mrf.mxu0
    %2943 = vdwg.mxu0
    %2944 = vmatpush.bf16.msra.mxu0 %v2840
    %2945 = vmatpush.bf16.msra.mxu0 %v2838
    %2946 = vmatpush.bf16.msra.mxu0 %v2836
    %2947 = vmatpush.bf16.msra.mxu0 %v2834
    %2948 = vmatpush.bf16.msra.mxu0 %v2832
    %2949 = vmatpush.bf16.msra.mxu0 %v2830
    %2950 = vmatpush.bf16.msra.mxu0 %v2828
    %2951 = vmatpush.bf16.msra.mxu0 %v2826
    %2952 = vmatmul.bf16.gmra.mxu0 %v2647
    %v2953 = vpop.f32.mrf.mxu0
    %v2954 = vadd.f32 %v2941, %v2953
    %v2955 = vpop.f32.mrf.mxu0
    %2956 = vdwg.mxu0
    %2957 = vmatpush.bf16.msra.mxu0 0
    %2958 = vmatpush.bf16.msra.mxu0 0
    %2959 = vmatpush.bf16.msra.mxu0 0
    %2960 = vmatpush.bf16.msra.mxu0 0
    %2961 = vmatpush.bf16.msra.mxu0 %v2848
    %2962 = vmatpush.bf16.msra.mxu0 %v2846
    %2963 = vmatpush.bf16.msra.mxu0 %v2844
    %2964 = vmatpush.bf16.msra.mxu0 %v2842
    %2965 = vmatmul.bf16.gmra.mxu0 %v2890
    %v2966 = vpop.f32.mrf.mxu0
    %v2967 = vadd.f32 %v2954, %v2966
    %v2968 = vpop.f32.mrf.mxu0
    %2969 = vdwg.mxu0
    %v3010 = vunpack.c.l.b16 %v2563
    %v3011 = vunpack.c.h.b16 %v2563
    %v3012 = vunpack.c.l.b16 %v2564
    %v3013 = vunpack.c.h.b16 %v2564
    %v3014 = vunpack.c.l.b16 %v2565
    %v3015 = vunpack.c.h.b16 %v2565
    %v3016 = vunpack.c.l.b16 %v2566
    %v3017 = vunpack.c.h.b16 %v2566
    %v3018 = vunpack.c.l.b16 %v2567
    %v3019 = vunpack.c.h.b16 %v2567
    %v3020 = vunpack.c.l.b16 %v2568
    %v3021 = vunpack.c.h.b16 %v2568
    %v3022 = vunpack.c.l.b16 %v2569
    %v3023 = vunpack.c.h.b16 %v2569
    %v3024 = vunpack.c.l.b16 %v2570
    %v3025 = vunpack.c.h.b16 %v2570
    %v3026 = vunpack.c.l.b16 %v2571
    %v3027 = vunpack.c.h.b16 %v2571
    %v3028 = vunpack.c.l.b16 %v2572
    %v3029 = vunpack.c.h.b16 %v2572
    %v3030 = vunpack.c.l.b16 %v2573
    %v3031 = vunpack.c.h.b16 %v2573
    %v3032 = vunpack.c.l.b16 %v2574
    %v3033 = vunpack.c.h.b16 %v2574
    %v3034 = vunpack.c.l.b16 %v2575
    %v3035 = vunpack.c.h.b16 %v2575
    %v3036 = vunpack.c.l.b16 %v2576
    %v3037 = vunpack.c.h.b16 %v2576
    %v3038 = vunpack.c.l.b16 %v2577
    %v3039 = vunpack.c.h.b16 %v2577
    %v3040 = vunpack.c.l.b16 %v2578
    %v3041 = vunpack.c.h.b16 %v2578
    %v3042 = vunpack.c.l.b16 %v2579
    %v3043 = vunpack.c.h.b16 %v2579
    %v3044 = vunpack.c.l.b16 %v2580
    %v3045 = vunpack.c.h.b16 %v2580
    %v3046 = vunpack.c.l.b16 %v2581
    %v3047 = vunpack.c.h.b16 %v2581
    %v3048 = vunpack.c.l.b16 %v2582
    %v3049 = vunpack.c.h.b16 %v2582
    %v3050 = vunpack.c.l.b16 %v2583
    %v3051 = vunpack.c.h.b16 %v2583
    %v3052 = vunpack.c.l.b16 %v2584
    %v3053 = vunpack.c.h.b16 %v2584
    %v3054 = vunpack.c.l.b16 %v2585
    %v3055 = vunpack.c.h.b16 %v2585
    %v3056 = vunpack.c.l.b16 %v2586
    %v3057 = vunpack.c.h.b16 %v2586
    %v3058 = vunpack.c.l.b16 %v2587
    %v3059 = vunpack.c.h.b16 %v2587
    %v3060 = vunpack.c.l.b16 %v2588
    %v3061 = vunpack.c.h.b16 %v2588
    %v3062 = vunpack.c.l.b16 %v2589
    %v3063 = vunpack.c.h.b16 %v2589
    %v3064 = vunpack.c.l.b16 %v2590
    %v3065 = vunpack.c.h.b16 %v2590
    %v3066 = vunpack.c.l.b16 %v2591
    %v3067 = vunpack.c.h.b16 %v2591
    %v3068 = vunpack.c.l.b16 %v2592
    %v3069 = vunpack.c.h.b16 %v2592
    %v3070 = vunpack.c.l.b16 %v2593
    %v3071 = vunpack.c.h.b16 %v2593
    %v3072 = vunpack.c.l.b16 %v2594
    %v3073 = vunpack.c.h.b16 %v2594
    %v3074 = vunpack.c.l.b16 %v2595
    %v3075 = vunpack.c.h.b16 %v2595
    %v3076 = vunpack.c.l.b16 %v2596
    %v3077 = vunpack.c.h.b16 %v2596
    %v3078 = vunpack.c.l.b16 %v2597
    %v3079 = vunpack.c.h.b16 %v2597
    %v3080 = vunpack.c.l.b16 %v2598
    %v3081 = vunpack.c.h.b16 %v2598
    %v3082 = vunpack.c.l.b16 %v2599
    %v3083 = vunpack.c.h.b16 %v2599
    %v3084 = vunpack.c.l.b16 %v2600
    %v3085 = vunpack.c.h.b16 %v2600
    %v3086 = vunpack.c.l.b16 %v2601
    %v3087 = vunpack.c.h.b16 %v2601
    %v3088 = vunpack.c.l.b16 %v2602
    %v3089 = vunpack.c.h.b16 %v2602
    %v3090 = vpack.c.b16 %v3012, %v3010
    %v3091 = vpack.c.b16 %v3013, %v3011
    %v3092 = vpack.c.b16 %v3016, %v3014
    %v3093 = vpack.c.b16 %v3017, %v3015
    %v3094 = vpack.c.b16 %v3020, %v3018
    %v3095 = vpack.c.b16 %v3021, %v3019
    %v3096 = vpack.c.b16 %v3024, %v3022
    %v3097 = vpack.c.b16 %v3025, %v3023
    %v3098 = vpack.c.b16 %v3028, %v3026
    %v3099 = vpack.c.b16 %v3029, %v3027
    %v3100 = vpack.c.b16 %v3032, %v3030
    %v3101 = vpack.c.b16 %v3033, %v3031
    %v3102 = vpack.c.b16 %v3036, %v3034
    %v3103 = vpack.c.b16 %v3037, %v3035
    %v3104 = vpack.c.b16 %v3040, %v3038
    %v3105 = vpack.c.b16 %v3041, %v3039
    %v3106 = vpack.c.b16 %v3044, %v3042
    %v3107 = vpack.c.b16 %v3045, %v3043
    %v3108 = vpack.c.b16 %v3048, %v3046
    %v3109 = vpack.c.b16 %v3049, %v3047
    %v3110 = vpack.c.b16 %v3052, %v3050
    %v3111 = vpack.c.b16 %v3053, %v3051
    %v3112 = vpack.c.b16 %v3056, %v3054
    %v3113 = vpack.c.b16 %v3057, %v3055
    %v3114 = vpack.c.b16 %v3060, %v3058
    %v3115 = vpack.c.b16 %v3061, %v3059
    %v3116 = vpack.c.b16 %v3064, %v3062
    %v3117 = vpack.c.b16 %v3065, %v3063
    %v3118 = vpack.c.b16 %v3068, %v3066
    %v3119 = vpack.c.b16 %v3069, %v3067
    %v3120 = vpack.c.b16 %v3072, %v3070
    %v3121 = vpack.c.b16 %v3073, %v3071
    %v3122 = vpack.c.b16 %v3076, %v3074
    %v3123 = vpack.c.b16 %v3077, %v3075
    %v3124 = vpack.c.b16 %v3080, %v3078
    %v3125 = vpack.c.b16 %v3081, %v3079
    %v3126 = vpack.c.b16 %v3084, %v3082
    %v3127 = vpack.c.b16 %v3085, %v3083
    %v3128 = vpack.c.b16 %v3088, %v3086
    %v3129 = vpack.c.b16 %v3089, %v3087
    %v3171 = vsel %vm229, %v2562, 0
    %3173 = vmatpush.bf16.msra.mxu0 %v3104
    %3174 = vmatpush.bf16.msra.mxu0 %v3102
    %3175 = vmatpush.bf16.msra.mxu0 %v3100
    %3176 = vmatpush.bf16.msra.mxu0 %v3098
    %3177 = vmatpush.bf16.msra.mxu0 %v3096
    %3178 = vmatpush.bf16.msra.mxu0 %v3094
    %3179 = vmatpush.bf16.msra.mxu0 %v3092
    %3180 = vmatpush.bf16.msra.mxu0 %v3090
    %3181 = vmatmul.bf16.gmra.mxu0 %v2560
    %v3182 = vpop.f32.mrf.mxu0
    %v3183 = vadd.f32 %v2928, %v3182
    %v3184 = vpop.f32.mrf.mxu0
    %3185 = vdwg.mxu0
    %3186 = vmatpush.bf16.msra.mxu0 %v3120
    %3187 = vmatpush.bf16.msra.mxu0 %v3118
    %3188 = vmatpush.bf16.msra.mxu0 %v3116
    %3189 = vmatpush.bf16.msra.mxu0 %v3114
    %3190 = vmatpush.bf16.msra.mxu0 %v3112
    %3191 = vmatpush.bf16.msra.mxu0 %v3110
    %3192 = vmatpush.bf16.msra.mxu0 %v3108
    %3193 = vmatpush.bf16.msra.mxu0 %v3106
    %3194 = vmatmul.bf16.gmra.mxu0 %v2561
    %v3195 = vpop.f32.mrf.mxu0
    %v3196 = vadd.f32 %v3183, %v3195
    %v3197 = vpop.f32.mrf.mxu0
    %3198 = vdwg.mxu0
    %3199 = vmatpush.bf16.msra.mxu0 0
    %3200 = vmatpush.bf16.msra.mxu0 0
    %3201 = vmatpush.bf16.msra.mxu0 0
    %3202 = vmatpush.bf16.msra.mxu0 0
    %3203 = vmatpush.bf16.msra.mxu0 %v3128
    %3204 = vmatpush.bf16.msra.mxu0 %v3126
    %3205 = vmatpush.bf16.msra.mxu0 %v3124
    %3206 = vmatpush.bf16.msra.mxu0 %v3122
    %3207 = vmatmul.bf16.gmra.mxu0 %v3171
    %v3208 = vpop.f32.mrf.mxu0
    %v3209 = vadd.f32 %v3196, %v3208
    %v3210 = vpop.f32.mrf.mxu0
    %3211 = vdwg.mxu0
    %3212 = vmatpush.bf16.msra.mxu0 %v3105
    %3213 = vmatpush.bf16.msra.mxu0 %v3103
    %3214 = vmatpush.bf16.msra.mxu0 %v3101
    %3215 = vmatpush.bf16.msra.mxu0 %v3099
    %3216 = vmatpush.bf16.msra.mxu0 %v3097
    %3217 = vmatpush.bf16.msra.mxu0 %v3095
    %3218 = vmatpush.bf16.msra.mxu0 %v3093
    %3219 = vmatpush.bf16.msra.mxu0 %v3091
    %3220 = vmatmul.bf16.gmra.mxu0 %v2560
    %v3221 = vpop.f32.mrf.mxu0
    %v3222 = vadd.f32 %v2967, %v3221
    %v3223 = vpop.f32.mrf.mxu0
    %3224 = vdwg.mxu0
    %3225 = vmatpush.bf16.msra.mxu0 %v3121
    %3226 = vmatpush.bf16.msra.mxu0 %v3119
    %3227 = vmatpush.bf16.msra.mxu0 %v3117
    %3228 = vmatpush.bf16.msra.mxu0 %v3115
    %3229 = vmatpush.bf16.msra.mxu0 %v3113
    %3230 = vmatpush.bf16.msra.mxu0 %v3111
    %3231 = vmatpush.bf16.msra.mxu0 %v3109
    %3232 = vmatpush.bf16.msra.mxu0 %v3107
    %3233 = vmatmul.bf16.gmra.mxu0 %v2561
    %v3234 = vpop.f32.mrf.mxu0
    %v3235 = vadd.f32 %v3222, %v3234
    %v3236 = vpop.f32.mrf.mxu0
    %3237 = vdwg.mxu0
    %3238 = vmatpush.bf16.msra.mxu0 0
    %3239 = vmatpush.bf16.msra.mxu0 0
    %3240 = vmatpush.bf16.msra.mxu0 0
    %3241 = vmatpush.bf16.msra.mxu0 0
    %3242 = vmatpush.bf16.msra.mxu0 %v3129
    %3243 = vmatpush.bf16.msra.mxu0 %v3127
    %3244 = vmatpush.bf16.msra.mxu0 %v3125
    %3245 = vmatpush.bf16.msra.mxu0 %v3123
    %3246 = vmatmul.bf16.gmra.mxu0 %v3171
    %v3247 = vpop.f32.mrf.mxu0
    %v3248 = vadd.f32 %v3235, %v3247
    %v3249 = vpop.f32.mrf.mxu0
    %3250 = vdwg.mxu0
    %v3251 = vld [vmem:[%s11 + $0x8] sm:$0xf]
    %v3253 = vsel %vm2508, %v3251, 0
    %3255 = vmatpush.bf16.msra.mxu0 0
    %3256 = vmatpush.bf16.msra.mxu0 0
    %3257 = vmatpush.bf16.msra.mxu0 0
    %3258 = vmatpush.bf16.msra.mxu0 0
    %3259 = vmatpush.bf16.msra.mxu0 0
    %3260 = vmatpush.bf16.msra.mxu0 0
    %3261 = vmatpush.bf16.msra.mxu0 %v2513
    %3262 = vmatpush.bf16.msra.mxu0 %v2501
    %3263 = vmatmul.bf16.gmra.mxu0 %v3253
    %v3264 = vpop.f32.mrf.mxu0
    %v3265 = vadd.f32 0.0, %v3264
    %v3266 = vpop.f32.mrf.mxu0
    %3267 = vdwg.mxu0
    %3268 = vmatpush.bf16.msra.mxu0 0
    %3269 = vmatpush.bf16.msra.mxu0 0
    %3270 = vmatpush.bf16.msra.mxu0 0
    %3271 = vmatpush.bf16.msra.mxu0 0
    %3272 = vmatpush.bf16.msra.mxu0 0
    %3273 = vmatpush.bf16.msra.mxu0 0
    %3274 = vmatpush.bf16.msra.mxu0 %v2516
    %3275 = vmatpush.bf16.msra.mxu0 %v2502
    %3276 = vmatmul.bf16.gmra.mxu0 %v3253
    %v3277 = vpop.f32.mrf.mxu0
    %v3278 = vadd.f32 0.0, %v3277
    %v3279 = vpop.f32.mrf.mxu0
    %3280 = vdwg.mxu0
    %3281 = vmatpush.bf16.msra.mxu0 0
    %3282 = vmatpush.bf16.msra.mxu0 0
    %3283 = vmatpush.bf16.msra.mxu0 0
    %3284 = vmatpush.bf16.msra.mxu0 0
    %3285 = vmatpush.bf16.msra.mxu0 0
    %3286 = vmatpush.bf16.msra.mxu0 0
    %3287 = vmatpush.bf16.msra.mxu0 %v2519
    %3288 = vmatpush.bf16.msra.mxu0 %v2503
    %3289 = vmatmul.bf16.gmra.mxu0 %v3253
    %v3290 = vpop.f32.mrf.mxu0
    %v3291 = vadd.f32 0.0, %v3290
    %v3292 = vpop.f32.mrf.mxu0
    %3293 = vdwg.mxu0
    %v3294 = vpack.c.bf16 %v3265, %v3265
    %v3295 = vpack.c.bf16 %v3278, %v3278
    %v3296 = vpack.c.bf16 %v3291, %v3291
    %v3297 = vld [vmem:[#allocation13 + $0x280] sm:$0xff]
    %v3298 = vld [vmem:[#allocation13 + $0x288] sm:$0xff]
    %v3299 = vld [vmem:[#allocation13 + $0x290] sm:$0xff]
    %v3300 = vld [vmem:[#allocation13 + $0x298] sm:$0xff]
    %v3301 = vld [vmem:[#allocation13 + $0x2a0] sm:$0xff]
    %v3302 = vld [vmem:[#allocation13 + $0x2a8] sm:$0xff]
    %v3303 = vld [vmem:[#allocation13 + $0x2b0] sm:$0xff]
    %v3304 = vld [vmem:[#allocation13 + $0x2b8] sm:$0xff]
    %v3305 = vld [vmem:[#allocation13 + $0x2c0] sm:$0xff]
    %v3306 = vld [vmem:[#allocation13 + $0x2c8] sm:$0xff]
    %v3307 = vld [vmem:[#allocation13 + $0x2d0] sm:$0xff]
    %v3308 = vld [vmem:[#allocation13 + $0x2d8] sm:$0xff]
    %v3309 = vld [vmem:[#allocation13 + $0x2e0] sm:$0xff]
    %v3310 = vld [vmem:[#allocation13 + $0x2e8] sm:$0xff]
    %v3311 = vld [vmem:[#allocation13 + $0x2f0] sm:$0xff]
    %v3312 = vld [vmem:[#allocation13 + $0x2f8] sm:$0xff]
    %v3313 = vld [vmem:[#allocation13 + $0x300] sm:$0xff]
    %v3314 = vld [vmem:[#allocation13 + $0x308] sm:$0xff]
    %v3315 = vld [vmem:[#allocation13 + $0x310] sm:$0xff]
    %v3316 = vld [vmem:[#allocation13 + $0x318] sm:$0xff]
    %v3317 = vld [vmem:[#allocation13 + $0x320] sm:$0xff]
    %v3318 = vld [vmem:[#allocation13 + $0x328] sm:$0xff]
    %v3319 = vld [vmem:[#allocation13 + $0x330] sm:$0xff]
    %v3320 = vld [vmem:[#allocation13 + $0x338] sm:$0xff]
    %v3321 = vld [vmem:[#allocation13 + $0x340] sm:$0xff]
    %v3322 = vld [vmem:[#allocation13 + $0x348] sm:$0xff]
    %v3323 = vld [vmem:[#allocation13 + $0x350] sm:$0xff]
    %v3324 = vld [vmem:[#allocation13 + $0x358] sm:$0xff]
    %v3325 = vld [vmem:[#allocation13 + $0x360] sm:$0xff]
    %v3326 = vld [vmem:[#allocation13 + $0x368] sm:$0xff]
    %v3327 = vld [vmem:[#allocation13 + $0x370] sm:$0xff]
    %v3328 = vld [vmem:[#allocation13 + $0x378] sm:$0xff]
    %v3329 = vld [vmem:[#allocation13 + $0x380] sm:$0xff]
    %v3330 = vld [vmem:[#allocation13 + $0x388] sm:$0xff]
    %v3331 = vld [vmem:[#allocation13 + $0x390] sm:$0xff]
    %v3332 = vld [vmem:[#allocation13 + $0x398] sm:$0xff]
    %v3333 = vld [vmem:[#allocation13 + $0x3a0] sm:$0xff]
    %v3334 = vld [vmem:[#allocation13 + $0x3a8] sm:$0xff]
    %v3335 = vld [vmem:[#allocation13 + $0x3b0] sm:$0xff]
    %v3336 = vld [vmem:[#allocation13 + $0x3b8] sm:$0xff]
    %v3377 = vunpack.c.l.b16 %v3297
    %v3378 = vunpack.c.h.b16 %v3297
    %v3379 = vunpack.c.l.b16 %v3298
    %v3380 = vunpack.c.h.b16 %v3298
    %v3381 = vunpack.c.l.b16 %v3299
    %v3382 = vunpack.c.h.b16 %v3299
    %v3383 = vunpack.c.l.b16 %v3300
    %v3384 = vunpack.c.h.b16 %v3300
    %v3385 = vunpack.c.l.b16 %v3301
    %v3386 = vunpack.c.h.b16 %v3301
    %v3387 = vunpack.c.l.b16 %v3302
    %v3388 = vunpack.c.h.b16 %v3302
    %v3389 = vunpack.c.l.b16 %v3303
    %v3390 = vunpack.c.h.b16 %v3303
    %v3391 = vunpack.c.l.b16 %v3304
    %v3392 = vunpack.c.h.b16 %v3304
    %v3393 = vunpack.c.l.b16 %v3305
    %v3394 = vunpack.c.h.b16 %v3305
    %v3395 = vunpack.c.l.b16 %v3306
    %v3396 = vunpack.c.h.b16 %v3306
    %v3397 = vunpack.c.l.b16 %v3307
    %v3398 = vunpack.c.h.b16 %v3307
    %v3399 = vunpack.c.l.b16 %v3308
    %v3400 = vunpack.c.h.b16 %v3308
    %v3401 = vunpack.c.l.b16 %v3309
    %v3402 = vunpack.c.h.b16 %v3309
    %v3403 = vunpack.c.l.b16 %v3310
    %v3404 = vunpack.c.h.b16 %v3310
    %v3405 = vunpack.c.l.b16 %v3311
    %v3406 = vunpack.c.h.b16 %v3311
    %v3407 = vunpack.c.l.b16 %v3312
    %v3408 = vunpack.c.h.b16 %v3312
    %v3409 = vunpack.c.l.b16 %v3313
    %v3410 = vunpack.c.h.b16 %v3313
    %v3411 = vunpack.c.l.b16 %v3314
    %v3412 = vunpack.c.h.b16 %v3314
    %v3413 = vunpack.c.l.b16 %v3315
    %v3414 = vunpack.c.h.b16 %v3315
    %v3415 = vunpack.c.l.b16 %v3316
    %v3416 = vunpack.c.h.b16 %v3316
    %v3417 = vunpack.c.l.b16 %v3317
    %v3418 = vunpack.c.h.b16 %v3317
    %v3419 = vunpack.c.l.b16 %v3318
    %v3420 = vunpack.c.h.b16 %v3318
    %v3421 = vunpack.c.l.b16 %v3319
    %v3422 = vunpack.c.h.b16 %v3319
    %v3423 = vunpack.c.l.b16 %v3320
    %v3424 = vunpack.c.h.b16 %v3320
    %v3425 = vunpack.c.l.b16 %v3321
    %v3426 = vunpack.c.h.b16 %v3321
    %v3427 = vunpack.c.l.b16 %v3322
    %v3428 = vunpack.c.h.b16 %v3322
    %v3429 = vunpack.c.l.b16 %v3323
    %v3430 = vunpack.c.h.b16 %v3323
    %v3431 = vunpack.c.l.b16 %v3324
    %v3432 = vunpack.c.h.b16 %v3324
    %v3433 = vunpack.c.l.b16 %v3325
    %v3434 = vunpack.c.h.b16 %v3325
    %v3435 = vunpack.c.l.b16 %v3326
    %v3436 = vunpack.c.h.b16 %v3326
    %v3437 = vunpack.c.l.b16 %v3327
    %v3438 = vunpack.c.h.b16 %v3327
    %v3439 = vunpack.c.l.b16 %v3328
    %v3440 = vunpack.c.h.b16 %v3328
    %v3441 = vunpack.c.l.b16 %v3329
    %v3442 = vunpack.c.h.b16 %v3329
    %v3443 = vunpack.c.l.b16 %v3330
    %v3444 = vunpack.c.h.b16 %v3330
    %v3445 = vunpack.c.l.b16 %v3331
    %v3446 = vunpack.c.h.b16 %v3331
    %v3447 = vunpack.c.l.b16 %v3332
    %v3448 = vunpack.c.h.b16 %v3332
    %v3449 = vunpack.c.l.b16 %v3333
    %v3450 = vunpack.c.h.b16 %v3333
    %v3451 = vunpack.c.l.b16 %v3334
    %v3452 = vunpack.c.h.b16 %v3334
    %v3453 = vunpack.c.l.b16 %v3335
    %v3454 = vunpack.c.h.b16 %v3335
    %v3455 = vunpack.c.l.b16 %v3336
    %v3456 = vunpack.c.h.b16 %v3336
    %v3457 = vpack.c.b16 %v3379, %v3377
    %v3458 = vpack.c.b16 %v3380, %v3378
    %v3459 = vpack.c.b16 %v3383, %v3381
    %v3460 = vpack.c.b16 %v3384, %v3382
    %v3461 = vpack.c.b16 %v3387, %v3385
    %v3462 = vpack.c.b16 %v3388, %v3386
    %v3463 = vpack.c.b16 %v3391, %v3389
    %v3464 = vpack.c.b16 %v3392, %v3390
    %v3465 = vpack.c.b16 %v3395, %v3393
    %v3466 = vpack.c.b16 %v3396, %v3394
    %v3467 = vpack.c.b16 %v3399, %v3397
    %v3468 = vpack.c.b16 %v3400, %v3398
    %v3469 = vpack.c.b16 %v3403, %v3401
    %v3470 = vpack.c.b16 %v3404, %v3402
    %v3471 = vpack.c.b16 %v3407, %v3405
    %v3472 = vpack.c.b16 %v3408, %v3406
    %v3473 = vpack.c.b16 %v3411, %v3409
    %v3474 = vpack.c.b16 %v3412, %v3410
    %v3475 = vpack.c.b16 %v3415, %v3413
    %v3476 = vpack.c.b16 %v3416, %v3414
    %v3477 = vpack.c.b16 %v3419, %v3417
    %v3478 = vpack.c.b16 %v3420, %v3418
    %v3479 = vpack.c.b16 %v3423, %v3421
    %v3480 = vpack.c.b16 %v3424, %v3422
    %v3481 = vpack.c.b16 %v3427, %v3425
    %v3482 = vpack.c.b16 %v3428, %v3426
    %v3483 = vpack.c.b16 %v3431, %v3429
    %v3484 = vpack.c.b16 %v3432, %v3430
    %v3485 = vpack.c.b16 %v3435, %v3433
    %v3486 = vpack.c.b16 %v3436, %v3434
    %v3487 = vpack.c.b16 %v3439, %v3437
    %v3488 = vpack.c.b16 %v3440, %v3438
    %v3489 = vpack.c.b16 %v3443, %v3441
    %v3490 = vpack.c.b16 %v3444, %v3442
    %v3491 = vpack.c.b16 %v3447, %v3445
    %v3492 = vpack.c.b16 %v3448, %v3446
    %v3493 = vpack.c.b16 %v3451, %v3449
    %v3494 = vpack.c.b16 %v3452, %v3450
    %v3495 = vpack.c.b16 %v3455, %v3453
    %v3496 = vpack.c.b16 %v3456, %v3454
    %v3538 = vsel %vm229, %v3296, 0
    %3540 = vmatpush.bf16.msra.mxu0 %v3471
    %3541 = vmatpush.bf16.msra.mxu0 %v3469
    %3542 = vmatpush.bf16.msra.mxu0 %v3467
    %3543 = vmatpush.bf16.msra.mxu0 %v3465
    %3544 = vmatpush.bf16.msra.mxu0 %v3463
    %3545 = vmatpush.bf16.msra.mxu0 %v3461
    %3546 = vmatpush.bf16.msra.mxu0 %v3459
    %3547 = vmatpush.bf16.msra.mxu0 %v3457
    %3548 = vmatmul.bf16.gmra.mxu0 %v3294
    %v3549 = vpop.f32.mrf.mxu0
    %v3550 = vadd.f32 0.0, %v3549
    %v3551 = vpop.f32.mrf.mxu0
    %3552 = vdwg.mxu0
    %3553 = vmatpush.bf16.msra.mxu0 %v3487
    %3554 = vmatpush.bf16.msra.mxu0 %v3485
    %3555 = vmatpush.bf16.msra.mxu0 %v3483
    %3556 = vmatpush.bf16.msra.mxu0 %v3481
    %3557 = vmatpush.bf16.msra.mxu0 %v3479
    %3558 = vmatpush.bf16.msra.mxu0 %v3477
    %3559 = vmatpush.bf16.msra.mxu0 %v3475
    %3560 = vmatpush.bf16.msra.mxu0 %v3473
    %3561 = vmatmul.bf16.gmra.mxu0 %v3295
    %v3562 = vpop.f32.mrf.mxu0
    %v3563 = vadd.f32 %v3550, %v3562
    %v3564 = vpop.f32.mrf.mxu0
    %3565 = vdwg.mxu0
    %3566 = vmatpush.bf16.msra.mxu0 0
    %3567 = vmatpush.bf16.msra.mxu0 0
    %3568 = vmatpush.bf16.msra.mxu0 0
    %3569 = vmatpush.bf16.msra.mxu0 0
    %3570 = vmatpush.bf16.msra.mxu0 %v3495
    %3571 = vmatpush.bf16.msra.mxu0 %v3493
    %3572 = vmatpush.bf16.msra.mxu0 %v3491
    %3573 = vmatpush.bf16.msra.mxu0 %v3489
    %3574 = vmatmul.bf16.gmra.mxu0 %v3538
    %v3575 = vpop.f32.mrf.mxu0
    %v3576 = vadd.f32 %v3563, %v3575
    %v3577 = vpop.f32.mrf.mxu0
    %3578 = vdwg.mxu0
    %3579 = vmatpush.bf16.msra.mxu0 %v3472
    %3580 = vmatpush.bf16.msra.mxu0 %v3470
    %3581 = vmatpush.bf16.msra.mxu0 %v3468
    %3582 = vmatpush.bf16.msra.mxu0 %v3466
    %3583 = vmatpush.bf16.msra.mxu0 %v3464
    %3584 = vmatpush.bf16.msra.mxu0 %v3462
    %3585 = vmatpush.bf16.msra.mxu0 %v3460
    %3586 = vmatpush.bf16.msra.mxu0 %v3458
    %3587 = vmatmul.bf16.gmra.mxu0 %v3294
    %v3588 = vpop.f32.mrf.mxu0
    %v3589 = vadd.f32 0.0, %v3588
    %v3590 = vpop.f32.mrf.mxu0
    %3591 = vdwg.mxu0
    %3592 = vmatpush.bf16.msra.mxu0 %v3488
    %3593 = vmatpush.bf16.msra.mxu0 %v3486
    %3594 = vmatpush.bf16.msra.mxu0 %v3484
    %3595 = vmatpush.bf16.msra.mxu0 %v3482
    %3596 = vmatpush.bf16.msra.mxu0 %v3480
    %3597 = vmatpush.bf16.msra.mxu0 %v3478
    %3598 = vmatpush.bf16.msra.mxu0 %v3476
    %3599 = vmatpush.bf16.msra.mxu0 %v3474
    %3600 = vmatmul.bf16.gmra.mxu0 %v3295
    %v3601 = vpop.f32.mrf.mxu0
    %v3602 = vadd.f32 %v3589, %v3601
    %v3603 = vpop.f32.mrf.mxu0
    %3604 = vdwg.mxu0
    %3605 = vmatpush.bf16.msra.mxu0 0
    %3606 = vmatpush.bf16.msra.mxu0 0
    %3607 = vmatpush.bf16.msra.mxu0 0
    %3608 = vmatpush.bf16.msra.mxu0 0
    %3609 = vmatpush.bf16.msra.mxu0 %v3496
    %3610 = vmatpush.bf16.msra.mxu0 %v3494
    %3611 = vmatpush.bf16.msra.mxu0 %v3492
    %3612 = vmatpush.bf16.msra.mxu0 %v3490
    %3613 = vmatmul.bf16.gmra.mxu0 %v3538
    %v3614 = vpop.f32.mrf.mxu0
    %v3615 = vadd.f32 %v3602, %v3614
    %v3616 = vpop.f32.mrf.mxu0
    %3617 = vdwg.mxu0
    %v3618 = vadd.f32 %v3209, %v3576
    %v3619 = vadd.f32 %v3248, %v3615
    %v3620 = vld [vmem:[%s13] sm:$0x3]
    %v3622 = vperm.slane %v3620, 0
    %v3623 = vperm.slane %v3620, 1
    %v3626 = vadd.f32 %v3618, %v3622
    %v3627 = vadd.f32 %v3619, %v3623
    %v3628 = vld [vmem:[#allocation14] sm:$0xff]
    %v3629 = vld [vmem:[#allocation14 + $0x8] sm:$0xff]
    %v3630 = vld [vmem:[#allocation14 + $0x10] sm:$0xff]
    %v3631 = vld [vmem:[#allocation14 + $0x18] sm:$0xff]
    %v3632 = vld [vmem:[#allocation14 + $0x20] sm:$0xff]
    %v3633 = vld [vmem:[#allocation14 + $0x28] sm:$0xff]
    %v3634 = vld [vmem:[#allocation14 + $0x30] sm:$0xff]
    %v3635 = vld [vmem:[#allocation14 + $0x38] sm:$0xff]
    %v3636 = vld [vmem:[#allocation14 + $0x40] sm:$0xff]
    %v3637 = vld [vmem:[#allocation14 + $0x48] sm:$0xff]
    %v3638 = vld [vmem:[#allocation14 + $0x50] sm:$0xff]
    %v3639 = vld [vmem:[#allocation14 + $0x58] sm:$0xff]
    %v3640 = vld [vmem:[#allocation14 + $0x60] sm:$0xff]
    %v3641 = vld [vmem:[#allocation14 + $0x68] sm:$0xff]
    %v3642 = vld [vmem:[#allocation14 + $0x70] sm:$0xff]
    %v3643 = vld [vmem:[#allocation14 + $0x78] sm:$0xff]
    %v3644 = vld [vmem:[#allocation14 + $0x80] sm:$0xff]
    %v3645 = vld [vmem:[#allocation14 + $0x88] sm:$0xff]
    %v3646 = vld [vmem:[#allocation14 + $0x90] sm:$0xff]
    %v3647 = vld [vmem:[#allocation14 + $0x98] sm:$0xff]
    %v3648 = vld [vmem:[#allocation14 + $0xa0] sm:$0xff]
    %v3649 = vld [vmem:[#allocation14 + $0xa8] sm:$0xff]
    %v3650 = vld [vmem:[#allocation14 + $0xb0] sm:$0xff]
    %v3651 = vld [vmem:[#allocation14 + $0xb8] sm:$0xff]
    %v3652 = vld [vmem:[#allocation14 + $0xc0] sm:$0xff]
    %v3653 = vld [vmem:[#allocation14 + $0xc8] sm:$0xff]
    %v3654 = vld [vmem:[#allocation14 + $0xd0] sm:$0xff]
    %v3655 = vld [vmem:[#allocation14 + $0xd8] sm:$0xff]
    %v3656 = vld [vmem:[#allocation14 + $0xe0] sm:$0xff]
    %v3657 = vld [vmem:[#allocation14 + $0xe8] sm:$0xff]
    %v3658 = vld [vmem:[#allocation14 + $0xf0] sm:$0xff]
    %v3659 = vld [vmem:[#allocation14 + $0xf8] sm:$0xff]
    %v3660 = vld [vmem:[#allocation16] sm:$0xff]
    %v3661 = vld [vmem:[#allocation16 + $0x8] sm:$0xff]
    %v3662 = vld [vmem:[#allocation16 + $0x10] sm:$0xff]
    %v3663 = vld [vmem:[#allocation16 + $0x18] sm:$0xff]
    %v3664 = vld [vmem:[#allocation16 + $0x20] sm:$0xff]
    %v3665 = vld [vmem:[#allocation16 + $0x28] sm:$0xff]
    %v3666 = vld [vmem:[#allocation16 + $0x30] sm:$0xff]
    %v3667 = vld [vmem:[#allocation16 + $0x38] sm:$0xff]
    %v3668 = vld [vmem:[#allocation16 + $0x40] sm:$0xff]
    %v3669 = vld [vmem:[#allocation16 + $0x48] sm:$0xff]
    %v3670 = vld [vmem:[#allocation16 + $0x50] sm:$0xff]
    %v3671 = vld [vmem:[#allocation16 + $0x58] sm:$0xff]
    %v3672 = vld [vmem:[#allocation16 + $0x60] sm:$0xff]
    %v3673 = vld [vmem:[#allocation16 + $0x68] sm:$0xff]
    %v3674 = vld [vmem:[#allocation16 + $0x70] sm:$0xff]
    %v3675 = vld [vmem:[#allocation16 + $0x78] sm:$0xff]
    %v3676 = vrot.slane %v3626, 4
    %v3677 = vadd.f32 %v3626, %v3676
    %v3678 = vrot.slane %v3677, 2
    %v3679 = vadd.f32 %v3677, %v3678
    %v3680 = vrot.slane %v3679, 1
    %v3681 = vadd.f32 %v3679, %v3680
    %v3682 = vrot.slane %v3627, 4
    %v3683 = vadd.f32 %v3627, %v3682
    %v3684 = vrot.slane %v3683, 2
    %v3685 = vadd.f32 %v3683, %v3684
    %v3686 = vrot.slane %v3685, 1
    %v3687 = vadd.f32 %v3685, %v3686
    %3688 = vmatpush.msra.mxu0 %v3643
    %3689 = vmatpush.msra.mxu0 %v3642
    %3690 = vmatpush.msra.mxu0 %v3641
    %3691 = vmatpush.msra.mxu0 %v3640
    %3692 = vmatpush.msra.mxu0 %v3639
    %3693 = vmatpush.msra.mxu0 %v3638
    %3694 = vmatpush.msra.mxu0 %v3637
    %3695 = vmatpush.msra.mxu0 %v3636
    %3696 = vmatpush.msra.mxu0 %v3635
    %3697 = vmatpush.msra.mxu0 %v3634
    %3698 = vmatpush.msra.mxu0 %v3633
    %3699 = vmatpush.msra.mxu0 %v3632
    %3700 = vmatpush.msra.mxu0 %v3631
    %3701 = vmatpush.msra.mxu0 %v3630
    %3702 = vmatpush.msra.mxu0 %v3629
    %3703 = vmatpush.msra.mxu0 %v3628
    %3704 = vmatmul.f32.gmra.mxu0 %v3681
    %v3705 = vpop.f32.mrf.mxu0
    %v3706 = vadd.f32 0.0, %v3705
    %3707 = vdwg.mxu0
    %3708 = vmatpush.msra.mxu0 %v3659
    %3709 = vmatpush.msra.mxu0 %v3658
    %3710 = vmatpush.msra.mxu0 %v3657
    %3711 = vmatpush.msra.mxu0 %v3656
    %3712 = vmatpush.msra.mxu0 %v3655
    %3713 = vmatpush.msra.mxu0 %v3654
    %3714 = vmatpush.msra.mxu0 %v3653
    %3715 = vmatpush.msra.mxu0 %v3652
    %3716 = vmatpush.msra.mxu0 %v3651
    %3717 = vmatpush.msra.mxu0 %v3650
    %3718 = vmatpush.msra.mxu0 %v3649
    %3719 = vmatpush.msra.mxu0 %v3648
    %3720 = vmatpush.msra.mxu0 %v3647
    %3721 = vmatpush.msra.mxu0 %v3646
    %3722 = vmatpush.msra.mxu0 %v3645
    %3723 = vmatpush.msra.mxu0 %v3644
    %3724 = vmatmul.f32.gmra.mxu0 %v3687
    %v3725 = vpop.f32.mrf.mxu0
    %v3726 = vadd.f32 %v3706, %v3725
    %3727 = vdwg.mxu0
    %v3728 = vmul.f32 %v3726, 0.03125
    %v3730 = vsel %vm229, %v3728, 0
    %3732 = vmatpush.msra.mxu0 0.0
    %3733 = vmatpush.msra.mxu0 0.0
    %3734 = vmatpush.msra.mxu0 0.0
    %3735 = vmatpush.msra.mxu0 0.0
    %3736 = vmatpush.msra.mxu0 0.0
    %3737 = vmatpush.msra.mxu0 0.0
    %3738 = vmatpush.msra.mxu0 0.0
    %3739 = vmatpush.msra.mxu0 0.0
    %3740 = vmatpush.msra.mxu0 %v3674
    %3741 = vmatpush.msra.mxu0 %v3672
    %3742 = vmatpush.msra.mxu0 %v3670
    %3743 = vmatpush.msra.mxu0 %v3668
    %3744 = vmatpush.msra.mxu0 %v3666
    %3745 = vmatpush.msra.mxu0 %v3664
    %3746 = vmatpush.msra.mxu0 %v3662
    %3747 = vmatpush.msra.mxu0 %v3660
    %3748 = vmatmul.f32.gmra.mxu0 %v3730
    %v3749 = vpop.f32.mrf.mxu0
    %v3750 = vadd.f32 0.0, %v3749
    %3751 = vdwg.mxu0
    %3752 = vmatpush.msra.mxu0 0.0
    %3753 = vmatpush.msra.mxu0 0.0
    %3754 = vmatpush.msra.mxu0 0.0
    %3755 = vmatpush.msra.mxu0 0.0
    %3756 = vmatpush.msra.mxu0 0.0
    %3757 = vmatpush.msra.mxu0 0.0
    %3758 = vmatpush.msra.mxu0 0.0
    %3759 = vmatpush.msra.mxu0 0.0
    %3760 = vmatpush.msra.mxu0 %v3675
    %3761 = vmatpush.msra.mxu0 %v3673
    %3762 = vmatpush.msra.mxu0 %v3671
    %3763 = vmatpush.msra.mxu0 %v3669
    %3764 = vmatpush.msra.mxu0 %v3667
    %3765 = vmatpush.msra.mxu0 %v3665
    %3766 = vmatpush.msra.mxu0 %v3663
    %3767 = vmatpush.msra.mxu0 %v3661
    %3768 = vmatmul.f32.gmra.mxu0 %v3730
    %v3769 = vpop.f32.mrf.mxu0
    %v3770 = vadd.f32 0.0, %v3769
    %3771 = vdwg.mxu0
    %v3772 = vperm.slane %v3750, 0
    %v3773 = vperm.slane %v3770, 0
    %v3774 = vsub.f32 %v3626, %v3772
    %v3775 = vsub.f32 %v3627, %v3773
    %v3776 = vmul.f32 %v3774, %v3774
    %v3777 = vmul.f32 %v3775, %v3775
    %v3778 = vrot.slane %v3776, 4
    %v3779 = vadd.f32 %v3776, %v3778
    %v3780 = vrot.slane %v3779, 2
    %v3781 = vadd.f32 %v3779, %v3780
    %v3782 = vrot.slane %v3781, 1
    %v3783 = vadd.f32 %v3781, %v3782
    %v3784 = vrot.slane %v3777, 4
    %v3785 = vadd.f32 %v3777, %v3784
    %v3786 = vrot.slane %v3785, 2
    %v3787 = vadd.f32 %v3785, %v3786
    %v3788 = vrot.slane %v3787, 1
    %v3789 = vadd.f32 %v3787, %v3788
    %3790 = vmatpush.msra.mxu0 %v3643
    %3791 = vmatpush.msra.mxu0 %v3642
    %3792 = vmatpush.msra.mxu0 %v3641
    %3793 = vmatpush.msra.mxu0 %v3640
    %3794 = vmatpush.msra.mxu0 %v3639
    %3795 = vmatpush.msra.mxu0 %v3638
    %3796 = vmatpush.msra.mxu0 %v3637
    %3797 = vmatpush.msra.mxu0 %v3636
    %3798 = vmatpush.msra.mxu0 %v3635
    %3799 = vmatpush.msra.mxu0 %v3634
    %3800 = vmatpush.msra.mxu0 %v3633
    %3801 = vmatpush.msra.mxu0 %v3632
    %3802 = vmatpush.msra.mxu0 %v3631
    %3803 = vmatpush.msra.mxu0 %v3630
    %3804 = vmatpush.msra.mxu0 %v3629
    %3805 = vmatpush.msra.mxu0 %v3628
    %3806 = vmatmul.f32.gmra.mxu0 %v3783
    %v3807 = vpop.f32.mrf.mxu0
    %v3808 = vadd.f32 0.0, %v3807
    %3809 = vdwg.mxu0
    %3810 = vmatpush.msra.mxu0 %v3659
    %3811 = vmatpush.msra.mxu0 %v3658
    %3812 = vmatpush.msra.mxu0 %v3657
    %3813 = vmatpush.msra.mxu0 %v3656
    %3814 = vmatpush.msra.mxu0 %v3655
    %3815 = vmatpush.msra.mxu0 %v3654
    %3816 = vmatpush.msra.mxu0 %v3653
    %3817 = vmatpush.msra.mxu0 %v3652
    %3818 = vmatpush.msra.mxu0 %v3651
    %3819 = vmatpush.msra.mxu0 %v3650
    %3820 = vmatpush.msra.mxu0 %v3649
    %3821 = vmatpush.msra.mxu0 %v3648
    %3822 = vmatpush.msra.mxu0 %v3647
    %3823 = vmatpush.msra.mxu0 %v3646
    %3824 = vmatpush.msra.mxu0 %v3645
    %3825 = vmatpush.msra.mxu0 %v3644
    %3826 = vmatmul.f32.gmra.mxu0 %v3789
    %v3827 = vpop.f32.mrf.mxu0
    %v3828 = vadd.f32 %v3808, %v3827
    %3829 = vdwg.mxu0
    %v3830 = vmul.f32 %v3828, 0.03125
    %v3831 = vadd.f32 %v3830, 1e-05
    %v3832 = vrsqrt.pop %v3831
    %v3833 = vmul.f32 %v3832, %v3831
    %v3834 = vmul.f32 %v3833, %v3832
    %v3835 = vmul.f32 0.5, %v3834
    %v3836 = vsub.f32 1.5, %v3835
    %v3837 = vmul.f32 %v3832, %v3836
    %vm3838 = vweird.f32 %v3831
    %vm3839 = vweird.f32 %v3832
    %vm3840 = vmor %vm3838, %vm3839
    %v3841 = vsel %vm3840, %v3832, %v3837
    %v3842 = vld [vmem:[%s16] sm:$0x1]
    %v3843 = vmul.f32 %v3842, %v3841
    %v3845 = vsel %vm229, %v3843, 0
    %3847 = vmatpush.msra.mxu0 0.0
    %3848 = vmatpush.msra.mxu0 0.0
    %3849 = vmatpush.msra.mxu0 0.0
    %3850 = vmatpush.msra.mxu0 0.0
    %3851 = vmatpush.msra.mxu0 0.0
    %3852 = vmatpush.msra.mxu0 0.0
    %3853 = vmatpush.msra.mxu0 0.0
    %3854 = vmatpush.msra.mxu0 0.0
    %3855 = vmatpush.msra.mxu0 %v3674
    %3856 = vmatpush.msra.mxu0 %v3672
    %3857 = vmatpush.msra.mxu0 %v3670
    %3858 = vmatpush.msra.mxu0 %v3668
    %3859 = vmatpush.msra.mxu0 %v3666
    %3860 = vmatpush.msra.mxu0 %v3664
    %3861 = vmatpush.msra.mxu0 %v3662
    %3862 = vmatpush.msra.mxu0 %v3660
    %3863 = vmatmul.f32.gmra.mxu0 %v3845
    %v3864 = vpop.f32.mrf.mxu0
    %v3865 = vadd.f32 0.0, %v3864
    %3866 = vdwg.mxu0
    %3867 = vmatpush.msra.mxu0 0.0
    %3868 = vmatpush.msra.mxu0 0.0
    %3869 = vmatpush.msra.mxu0 0.0
    %3870 = vmatpush.msra.mxu0 0.0
    %3871 = vmatpush.msra.mxu0 0.0
    %3872 = vmatpush.msra.mxu0 0.0
    %3873 = vmatpush.msra.mxu0 0.0
    %3874 = vmatpush.msra.mxu0 0.0
    %3875 = vmatpush.msra.mxu0 %v3675
    %3876 = vmatpush.msra.mxu0 %v3673
    %3877 = vmatpush.msra.mxu0 %v3671
    %3878 = vmatpush.msra.mxu0 %v3669
    %3879 = vmatpush.msra.mxu0 %v3667
    %3880 = vmatpush.msra.mxu0 %v3665
    %3881 = vmatpush.msra.mxu0 %v3663
    %3882 = vmatpush.msra.mxu0 %v3661
    %3883 = vmatmul.f32.gmra.mxu0 %v3845
    %v3884 = vpop.f32.mrf.mxu0
    %v3885 = vadd.f32 0.0, %v3884
    %3886 = vdwg.mxu0
    %v3887 = vld [vmem:[%s17] sm:$0x1]
    %v3889 = vsel %vm229, %v3887, 0
    %3891 = vmatpush.msra.mxu0 0.0
    %3892 = vmatpush.msra.mxu0 0.0
    %3893 = vmatpush.msra.mxu0 0.0
    %3894 = vmatpush.msra.mxu0 0.0
    %3895 = vmatpush.msra.mxu0 0.0
    %3896 = vmatpush.msra.mxu0 0.0
    %3897 = vmatpush.msra.mxu0 0.0
    %3898 = vmatpush.msra.mxu0 0.0
    %3899 = vmatpush.msra.mxu0 %v3674
    %3900 = vmatpush.msra.mxu0 %v3672
    %3901 = vmatpush.msra.mxu0 %v3670
    %3902 = vmatpush.msra.mxu0 %v3668
    %3903 = vmatpush.msra.mxu0 %v3666
    %3904 = vmatpush.msra.mxu0 %v3664
    %3905 = vmatpush.msra.mxu0 %v3662
    %3906 = vmatpush.msra.mxu0 %v3660
    %3907 = vmatmul.f32.gmra.mxu0 %v3889
    %v3908 = vpop.f32.mrf.mxu0
    %v3909 = vadd.f32 0.0, %v3908
    %3910 = vdwg.mxu0
    %3911 = vmatpush.msra.mxu0 0.0
    %3912 = vmatpush.msra.mxu0 0.0
    %3913 = vmatpush.msra.mxu0 0.0
    %3914 = vmatpush.msra.mxu0 0.0
    %3915 = vmatpush.msra.mxu0 0.0
    %3916 = vmatpush.msra.mxu0 0.0
    %3917 = vmatpush.msra.mxu0 0.0
    %3918 = vmatpush.msra.mxu0 0.0
    %3919 = vmatpush.msra.mxu0 %v3675
    %3920 = vmatpush.msra.mxu0 %v3673
    %3921 = vmatpush.msra.mxu0 %v3671
    %3922 = vmatpush.msra.mxu0 %v3669
    %3923 = vmatpush.msra.mxu0 %v3667
    %3924 = vmatpush.msra.mxu0 %v3665
    %3925 = vmatpush.msra.mxu0 %v3663
    %3926 = vmatpush.msra.mxu0 %v3661
    %3927 = vmatmul.f32.gmra.mxu0 %v3889
    %v3928 = vpop.f32.mrf.mxu0
    %v3929 = vadd.f32 0.0, %v3928
    %3930 = vdwg.mxu0
    %v3931 = vperm.slane %v3865, 0
    %v3932 = vperm.slane %v3885, 0
    %v3933 = vmul.f32 %v3774, %v3931
    %v3934 = vmul.f32 %v3775, %v3932
    %v3935 = vperm.slane %v3909, 0
    %v3936 = vperm.slane %v3929, 0
    %v3937 = vadd.f32 %v3933, %v3935
    %v3938 = vadd.f32 %v3934, %v3936
    %vm3939 = vcmp.ge.f32.partialorder %v3937, 0.0
    %vm3940 = vcmp.ge.f32.partialorder %v3938, 0.0
    %v3941 = vmul.f32 %v3937, 0.2
    %v3942 = vmul.f32 %v3938, 0.2
    %v3943 = vsel %vm3939, %v3937, %v3941
    %v3944 = vsel %vm3940, %v3938, %v3942
    %v3947 = vrot.slane %v3943, 7
    %v3948 = vrot.slane %v3944, 7
    %3949 = vrot.lane.b32.xlu0 %v3947, 64
    %v3950 = vpop.permute.xlu0 %3949
    %3951 = vrot.lane.b32.xlu0 %v3948, 64
    %v3952 = vpop.permute.xlu0 %3951
    %v3953 = vsel %vm229, %v3950, %v3952
    %vm3957 = vcmask 1044993
    %3958 = vst.msk [vmem:[#allocation4] sm:$0x1e] %vm3957, %v3950
    %3959 = vst [vmem:[#allocation4 + $0x8] sm:$0x1e] %v3953
    %vm3960 = vcmask 520193
    %3961 = vst.msk [vmem:[#allocation4 + $0x10] sm:$0x1e] %vm3960, %v3952
    %v3962 = vrot.slane %v3943, 5
    %v3963 = vrot.slane %v3944, 5
    %3964 = vrot.lane.b32.xlu0 %v3962, 64
    %v3965 = vpop.permute.xlu0 %3964
    %3966 = vrot.lane.b32.xlu0 %v3963, 64
    %v3967 = vpop.permute.xlu0 %3966
    %v3968 = vsel %vm229, %v3965, %v3967
    %vm3972 = vcmask 1048071
    %3973 = vst.msk [vmem:[#allocation4] sm:$0x80] %vm3972, %v3965
    %3974 = vst [vmem:[#allocation4 + $0x8] sm:$0x80] %v3968
    %vm3975 = vcmask 523271
    %3976 = vst.msk [vmem:[#allocation4 + $0x10] sm:$0x80] %vm3975, %v3967
    %vm3977 = vcmask 1042944
    %3978 = vst.msk [vmem:[#allocation4 + $0x18] sm:$0x7] %vm3977, %v3965
    %3979 = vst [vmem:[#allocation4 + $0x20] sm:$0x7] %v3968
    %vm3980 = vcmask 518144
    %3981 = vst.msk [vmem:[#allocation4 + $0x28] sm:$0x7] %vm3980, %v3967
    %v3982 = vld [vmem:[#allocation4] sm:$0xff]
    %v3983 = vld [vmem:[#allocation4 + $0x8] sm:$0xff]
    %v3984 = vld [vmem:[#allocation4 + $0x10] sm:$0xff]
    %v3985 = vld [vmem:[#allocation4 + $0x18] sm:$0xf]
    %v3986 = vld [vmem:[#allocation4 + $0x20] sm:$0xf]
    %v3987 = vld [vmem:[#allocation4 + $0x28] sm:$0xf]
    %v3988 = vpack.c.bf16 %v3985, %v3982
    %v3989 = vpack.c.bf16 %v3986, %v3983
    %v3990 = vpack.c.bf16 %v3987, %v3984
    %v3991 = vld [vmem:[#allocation17] sm:$0x3]
    %vm3992 = vcmask 97280
    %v3994 = vsel %vm3992, %v3991, 0
    %vm3996 = vcmask 1045504
    %v3998 = vsel %vm3996, %v3988, 0
    %v4001 = vsel %vm3996, %v3989, 0
    %v4004 = vsel %vm3996, %v3990, 0
    %4006 = vmatpush.bf16.msra.mxu0 0
    %4007 = vmatpush.bf16.msra.mxu0 0
    %4008 = vmatpush.bf16.msra.mxu0 0
    %4009 = vmatpush.bf16.msra.mxu0 0
    %4010 = vmatpush.bf16.msra.mxu0 0
    %4011 = vmatpush.bf16.msra.mxu0 0
    %4012 = vmatpush.bf16.msra.mxu0 0
    %4013 = vmatpush.bf16.msra.mxu0 %v3998
    %4014 = vmatmul.bf16.gmra.mxu0 %v3994
    %v4015 = vpop.f32.mrf.mxu0
    %v4016 = vadd.f32 0.0, %v4015
    %v4017 = vpop.f32.mrf.mxu0
    %4018 = vdwg.mxu0
    %4019 = vmatpush.bf16.msra.mxu0 0
    %4020 = vmatpush.bf16.msra.mxu0 0
    %4021 = vmatpush.bf16.msra.mxu0 0
    %4022 = vmatpush.bf16.msra.mxu0 0
    %4023 = vmatpush.bf16.msra.mxu0 0
    %4024 = vmatpush.bf16.msra.mxu0 0
    %4025 = vmatpush.bf16.msra.mxu0 0
    %4026 = vmatpush.bf16.msra.mxu0 %v4001
    %4027 = vmatmul.bf16.gmra.mxu0 %v3994
    %v4028 = vpop.f32.mrf.mxu0
    %v4029 = vadd.f32 0.0, %v4028
    %v4030 = vpop.f32.mrf.mxu0
    %4031 = vdwg.mxu0
    %4032 = vmatpush.bf16.msra.mxu0 0
    %4033 = vmatpush.bf16.msra.mxu0 0
    %4034 = vmatpush.bf16.msra.mxu0 0
    %4035 = vmatpush.bf16.msra.mxu0 0
    %4036 = vmatpush.bf16.msra.mxu0 0
    %4037 = vmatpush.bf16.msra.mxu0 0
    %4038 = vmatpush.bf16.msra.mxu0 0
    %4039 = vmatpush.bf16.msra.mxu0 %v4004
    %4040 = vmatmul.bf16.gmra.mxu0 %v3994
    %v4041 = vpop.f32.mrf.mxu0
    %v4042 = vadd.f32 0.0, %v4041
    %v4043 = vpop.f32.mrf.mxu0
    %4044 = vdwg.mxu0
    %v4045 = vpack.c.bf16 %v4016, %v4016
    %v4046 = vpack.c.bf16 %v4029, %v4029
    %v4047 = vpack.c.bf16 %v4042, %v4042
    %v4048 = vld [vmem:[#allocation19] sm:$0xf]
    %v4049 = vld [vmem:[#allocation19 + $0x4] sm:$0xf]
    %v4050 = vld [vmem:[#allocation19 + $0x8] sm:$0xf]
    %v4051 = vld [vmem:[#allocation19 + $0xc] sm:$0xf]
    %v4052 = vld [vmem:[#allocation19 + $0x10] sm:$0xf]
    %v4053 = vld [vmem:[#allocation19 + $0x14] sm:$0xf]
    %v4054 = vld [vmem:[#allocation19 + $0x18] sm:$0xf]
    %v4055 = vld [vmem:[#allocation19 + $0x1c] sm:$0xf]
    %v4056 = vld [vmem:[#allocation19 + $0x20] sm:$0xf]
    %v4057 = vld [vmem:[#allocation19 + $0x24] sm:$0xf]
    %v4058 = vld [vmem:[#allocation19 + $0x28] sm:$0xf]
    %v4059 = vld [vmem:[#allocation19 + $0x2c] sm:$0xf]
    %v4060 = vld [vmem:[#allocation19 + $0x30] sm:$0xf]
    %v4061 = vld [vmem:[#allocation19 + $0x34] sm:$0xf]
    %v4062 = vld [vmem:[#allocation19 + $0x38] sm:$0xf]
    %v4063 = vld [vmem:[#allocation19 + $0x3c] sm:$0xf]
    %v4064 = vld [vmem:[#allocation19 + $0x40] sm:$0xf]
    %v4065 = vld [vmem:[#allocation19 + $0x44] sm:$0xf]
    %v4066 = vld [vmem:[#allocation19 + $0x48] sm:$0xf]
    %v4067 = vld [vmem:[#allocation19 + $0x4c] sm:$0xf]
    %v4068 = vld [vmem:[#allocation19 + $0x50] sm:$0xf]
    %v4069 = vld [vmem:[#allocation19 + $0x54] sm:$0xf]
    %v4070 = vld [vmem:[#allocation19 + $0x58] sm:$0xf]
    %v4071 = vld [vmem:[#allocation19 + $0x5c] sm:$0xf]
    %v4072 = vld [vmem:[#allocation19 + $0x60] sm:$0xf]
    %v4073 = vld [vmem:[#allocation19 + $0x64] sm:$0xf]
    %v4074 = vld [vmem:[#allocation19 + $0x68] sm:$0xf]
    %v4075 = vld [vmem:[#allocation19 + $0x6c] sm:$0xf]
    %v4076 = vld [vmem:[#allocation19 + $0x70] sm:$0xf]
    %v4077 = vld [vmem:[#allocation19 + $0x74] sm:$0xf]
    %v4078 = vld [vmem:[#allocation19 + $0x78] sm:$0xf]
    %v4079 = vld [vmem:[#allocation19 + $0x7c] sm:$0xf]
    %v4080 = vld [vmem:[#allocation19 + $0x80] sm:$0xf]
    %v4081 = vld [vmem:[#allocation19 + $0x84] sm:$0xf]
    %v4082 = vld [vmem:[#allocation19 + $0x88] sm:$0xf]
    %v4083 = vld [vmem:[#allocation19 + $0x8c] sm:$0xf]
    %v4084 = vld [vmem:[#allocation19 + $0x90] sm:$0xf]
    %v4085 = vld [vmem:[#allocation19 + $0x94] sm:$0xf]
    %v4086 = vld [vmem:[#allocation19 + $0x98] sm:$0xf]
    %v4087 = vld [vmem:[#allocation19 + $0x9c] sm:$0xf]
    %v4088 = vld [vmem:[#allocation19 + $0xa0] sm:$0xf]
    %v4089 = vld [vmem:[#allocation19 + $0xa4] sm:$0xf]
    %v4090 = vld [vmem:[#allocation19 + $0xa8] sm:$0xf]
    %v4091 = vld [vmem:[#allocation19 + $0xac] sm:$0xf]
    %v4092 = vld [vmem:[#allocation19 + $0xb0] sm:$0xf]
    %v4093 = vld [vmem:[#allocation19 + $0xb4] sm:$0xf]
    %v4094 = vld [vmem:[#allocation19 + $0xb8] sm:$0xf]
    %v4095 = vld [vmem:[#allocation19 + $0xbc] sm:$0xf]
    %v4096 = vld [vmem:[#allocation17] sm:$0xc]
    %v4098 = vunpack.c.l.b16 %v4096
    %v4099 = vpack.c.b16 %v4098, %v4098
    %v4100 = vrot.slane %v4099, 2
    %v4102 = vsel %vm3992, %v4100, 0
    %4104 = vmatpush.bf16.msra.mxu0 0
    %4105 = vmatpush.bf16.msra.mxu0 0
    %4106 = vmatpush.bf16.msra.mxu0 0
    %4107 = vmatpush.bf16.msra.mxu0 0
    %4108 = vmatpush.bf16.msra.mxu0 0
    %4109 = vmatpush.bf16.msra.mxu0 0
    %4110 = vmatpush.bf16.msra.mxu0 0
    %4111 = vmatpush.bf16.msra.mxu0 %v3998
    %4112 = vmatmul.bf16.gmra.mxu0 %v4102
    %v4113 = vpop.f32.mrf.mxu0
    %v4114 = vadd.f32 0.0, %v4113
    %v4115 = vpop.f32.mrf.mxu0
    %4116 = vdwg.mxu0
    %4117 = vmatpush.bf16.msra.mxu0 0
    %4118 = vmatpush.bf16.msra.mxu0 0
    %4119 = vmatpush.bf16.msra.mxu0 0
    %4120 = vmatpush.bf16.msra.mxu0 0
    %4121 = vmatpush.bf16.msra.mxu0 0
    %4122 = vmatpush.bf16.msra.mxu0 0
    %4123 = vmatpush.bf16.msra.mxu0 0
    %4124 = vmatpush.bf16.msra.mxu0 %v4001
    %4125 = vmatmul.bf16.gmra.mxu0 %v4102
    %v4126 = vpop.f32.mrf.mxu0
    %v4127 = vadd.f32 0.0, %v4126
    %v4128 = vpop.f32.mrf.mxu0
    %4129 = vdwg.mxu0
    %4130 = vmatpush.bf16.msra.mxu0 0
    %4131 = vmatpush.bf16.msra.mxu0 0
    %4132 = vmatpush.bf16.msra.mxu0 0
    %4133 = vmatpush.bf16.msra.mxu0 0
    %4134 = vmatpush.bf16.msra.mxu0 0
    %4135 = vmatpush.bf16.msra.mxu0 0
    %4136 = vmatpush.bf16.msra.mxu0 0
    %4137 = vmatpush.bf16.msra.mxu0 %v4004
    %4138 = vmatmul.bf16.gmra.mxu0 %v4102
    %v4139 = vpop.f32.mrf.mxu0
    %v4140 = vadd.f32 0.0, %v4139
    %v4141 = vpop.f32.mrf.mxu0
    %4142 = vdwg.mxu0
    %v4143 = vpack.c.bf16 %v4114, %v4114
    %v4144 = vpack.c.bf16 %v4127, %v4127
    %v4145 = vpack.c.bf16 %v4140, %v4140
    %v4146 = vld [vmem:[#allocation19 + $0xc0] sm:$0xf]
    %v4147 = vld [vmem:[#allocation19 + $0xc4] sm:$0xf]
    %v4148 = vld [vmem:[#allocation19 + $0xc8] sm:$0xf]
    %v4149 = vld [vmem:[#allocation19 + $0xcc] sm:$0xf]
    %v4150 = vld [vmem:[#allocation19 + $0xd0] sm:$0xf]
    %v4151 = vld [vmem:[#allocation19 + $0xd4] sm:$0xf]
    %v4152 = vld [vmem:[#allocation19 + $0xd8] sm:$0xf]
    %v4153 = vld [vmem:[#allocation19 + $0xdc] sm:$0xf]
    %v4154 = vld [vmem:[#allocation19 + $0xe0] sm:$0xf]
    %v4155 = vld [vmem:[#allocation19 + $0xe4] sm:$0xf]
    %v4156 = vld [vmem:[#allocation19 + $0xe8] sm:$0xf]
    %v4157 = vld [vmem:[#allocation19 + $0xec] sm:$0xf]
    %v4158 = vld [vmem:[#allocation19 + $0xf0] sm:$0xf]
    %v4159 = vld [vmem:[#allocation19 + $0xf4] sm:$0xf]
    %v4160 = vld [vmem:[#allocation19 + $0xf8] sm:$0xf]
    %v4161 = vld [vmem:[#allocation19 + $0xfc] sm:$0xf]
    %v4162 = vld [vmem:[#allocation19 + $0x100] sm:$0xf]
    %v4163 = vld [vmem:[#allocation19 + $0x104] sm:$0xf]
    %v4164 = vld [vmem:[#allocation19 + $0x108] sm:$0xf]
    %v4165 = vld [vmem:[#allocation19 + $0x10c] sm:$0xf]
    %v4166 = vld [vmem:[#allocation19 + $0x110] sm:$0xf]
    %v4167 = vld [vmem:[#allocation19 + $0x114] sm:$0xf]
    %v4168 = vld [vmem:[#allocation19 + $0x118] sm:$0xf]
    %v4169 = vld [vmem:[#allocation19 + $0x11c] sm:$0xf]
    %v4170 = vld [vmem:[#allocation19 + $0x120] sm:$0xf]
    %v4171 = vld [vmem:[#allocation19 + $0x124] sm:$0xf]
    %v4172 = vld [vmem:[#allocation19 + $0x128] sm:$0xf]
    %v4173 = vld [vmem:[#allocation19 + $0x12c] sm:$0xf]
    %v4174 = vld [vmem:[#allocation19 + $0x130] sm:$0xf]
    %v4175 = vld [vmem:[#allocation19 + $0x134] sm:$0xf]
    %v4176 = vld [vmem:[#allocation19 + $0x138] sm:$0xf]
    %v4177 = vld [vmem:[#allocation19 + $0x13c] sm:$0xf]
    %v4178 = vld [vmem:[#allocation19 + $0x140] sm:$0xf]
    %v4179 = vld [vmem:[#allocation19 + $0x144] sm:$0xf]
    %v4180 = vld [vmem:[#allocation19 + $0x148] sm:$0xf]
    %v4181 = vld [vmem:[#allocation19 + $0x14c] sm:$0xf]
    %v4182 = vld [vmem:[#allocation19 + $0x150] sm:$0xf]
    %v4183 = vld [vmem:[#allocation19 + $0x154] sm:$0xf]
    %v4184 = vld [vmem:[#allocation19 + $0x158] sm:$0xf]
    %v4185 = vld [vmem:[#allocation19 + $0x15c] sm:$0xf]
    %v4186 = vld [vmem:[#allocation19 + $0x160] sm:$0xf]
    %v4187 = vld [vmem:[#allocation19 + $0x164] sm:$0xf]
    %v4188 = vld [vmem:[#allocation19 + $0x168] sm:$0xf]
    %v4189 = vld [vmem:[#allocation19 + $0x16c] sm:$0xf]
    %v4190 = vld [vmem:[#allocation19 + $0x170] sm:$0xf]
    %v4191 = vld [vmem:[#allocation19 + $0x174] sm:$0xf]
    %v4192 = vld [vmem:[#allocation19 + $0x178] sm:$0xf]
    %v4193 = vld [vmem:[#allocation19 + $0x17c] sm:$0xf]
    %v4242 = vunpack.c.l.b16 %v4146
    %v4243 = vunpack.c.l.b16 %v4147
    %v4244 = vunpack.c.l.b16 %v4148
    %v4245 = vunpack.c.l.b16 %v4149
    %v4246 = vunpack.c.l.b16 %v4150
    %v4247 = vunpack.c.l.b16 %v4151
    %v4248 = vunpack.c.l.b16 %v4152
    %v4249 = vunpack.c.l.b16 %v4153
    %v4250 = vunpack.c.l.b16 %v4154
    %v4251 = vunpack.c.l.b16 %v4155
    %v4252 = vunpack.c.l.b16 %v4156
    %v4253 = vunpack.c.l.b16 %v4157
    %v4254 = vunpack.c.l.b16 %v4158
    %v4255 = vunpack.c.l.b16 %v4159
    %v4256 = vunpack.c.l.b16 %v4160
    %v4257 = vunpack.c.l.b16 %v4161
    %v4258 = vunpack.c.l.b16 %v4162
    %v4259 = vunpack.c.l.b16 %v4163
    %v4260 = vunpack.c.l.b16 %v4164
    %v4261 = vunpack.c.l.b16 %v4165
    %v4262 = vunpack.c.l.b16 %v4166
    %v4263 = vunpack.c.l.b16 %v4167
    %v4264 = vunpack.c.l.b16 %v4168
    %v4265 = vunpack.c.l.b16 %v4169
    %v4266 = vunpack.c.l.b16 %v4170
    %v4267 = vunpack.c.l.b16 %v4171
    %v4268 = vunpack.c.l.b16 %v4172
    %v4269 = vunpack.c.l.b16 %v4173
    %v4270 = vunpack.c.l.b16 %v4174
    %v4271 = vunpack.c.l.b16 %v4175
    %v4272 = vunpack.c.l.b16 %v4176
    %v4273 = vunpack.c.l.b16 %v4177
    %v4274 = vunpack.c.l.b16 %v4178
    %v4275 = vunpack.c.l.b16 %v4179
    %v4276 = vunpack.c.l.b16 %v4180
    %v4277 = vunpack.c.l.b16 %v4181
    %v4278 = vunpack.c.l.b16 %v4182
    %v4279 = vunpack.c.l.b16 %v4183
    %v4280 = vunpack.c.l.b16 %v4184
    %v4281 = vunpack.c.l.b16 %v4185
    %v4282 = vunpack.c.l.b16 %v4186
    %v4283 = vunpack.c.l.b16 %v4187
    %v4284 = vunpack.c.l.b16 %v4188
    %v4285 = vunpack.c.l.b16 %v4189
    %v4286 = vunpack.c.l.b16 %v4190
    %v4287 = vunpack.c.l.b16 %v4191
    %v4288 = vunpack.c.l.b16 %v4192
    %v4289 = vunpack.c.l.b16 %v4193
    %v4290 = vpack.c.b16 %v4243, %v4242
    %v4291 = vpack.c.b16 %v4245, %v4244
    %v4292 = vpack.c.b16 %v4247, %v4246
    %v4293 = vpack.c.b16 %v4249, %v4248
    %v4294 = vpack.c.b16 %v4251, %v4250
    %v4295 = vpack.c.b16 %v4253, %v4252
    %v4296 = vpack.c.b16 %v4255, %v4254
    %v4297 = vpack.c.b16 %v4257, %v4256
    %v4298 = vpack.c.b16 %v4259, %v4258
    %v4299 = vpack.c.b16 %v4261, %v4260
    %v4300 = vpack.c.b16 %v4263, %v4262
    %v4301 = vpack.c.b16 %v4265, %v4264
    %v4302 = vpack.c.b16 %v4267, %v4266
    %v4303 = vpack.c.b16 %v4269, %v4268
    %v4304 = vpack.c.b16 %v4271, %v4270
    %v4305 = vpack.c.b16 %v4273, %v4272
    %v4306 = vpack.c.b16 %v4275, %v4274
    %v4307 = vpack.c.b16 %v4277, %v4276
    %v4308 = vpack.c.b16 %v4279, %v4278
    %v4309 = vpack.c.b16 %v4281, %v4280
    %v4310 = vpack.c.b16 %v4283, %v4282
    %v4311 = vpack.c.b16 %v4285, %v4284
    %v4312 = vpack.c.b16 %v4287, %v4286
    %v4313 = vpack.c.b16 %v4289, %v4288
    %4338 = vmatpush.bf16.msra.mxu0 %v4297
    %4339 = vmatpush.bf16.msra.mxu0 %v4296
    %4340 = vmatpush.bf16.msra.mxu0 %v4295
    %4341 = vmatpush.bf16.msra.mxu0 %v4294
    %4342 = vmatpush.bf16.msra.mxu0 %v4293
    %4343 = vmatpush.bf16.msra.mxu0 %v4292
    %4344 = vmatpush.bf16.msra.mxu0 %v4291
    %4345 = vmatpush.bf16.msra.mxu0 %v4290
    %4346 = vmatmul.bf16.gmra.mxu0 %v4143
    %v4347 = vpop.f32.mrf.mxu0
    %v4348 = vadd.f32 0.0, %v4347
    %v4349 = vpop.f32.mrf.mxu0
    %4350 = vdwg.mxu0
    %4351 = vmatpush.bf16.msra.mxu0 %v4305
    %4352 = vmatpush.bf16.msra.mxu0 %v4304
    %4353 = vmatpush.bf16.msra.mxu0 %v4303
    %4354 = vmatpush.bf16.msra.mxu0 %v4302
    %4355 = vmatpush.bf16.msra.mxu0 %v4301
    %4356 = vmatpush.bf16.msra.mxu0 %v4300
    %4357 = vmatpush.bf16.msra.mxu0 %v4299
    %4358 = vmatpush.bf16.msra.mxu0 %v4298
    %4359 = vmatmul.bf16.gmra.mxu0 %v4144
    %v4360 = vpop.f32.mrf.mxu0
    %v4361 = vadd.f32 %v4348, %v4360
    %v4362 = vpop.f32.mrf.mxu0
    %4363 = vdwg.mxu0
    %4364 = vmatpush.bf16.msra.mxu0 %v4313
    %4365 = vmatpush.bf16.msra.mxu0 %v4312
    %4366 = vmatpush.bf16.msra.mxu0 %v4311
    %4367 = vmatpush.bf16.msra.mxu0 %v4310
    %4368 = vmatpush.bf16.msra.mxu0 %v4309
    %4369 = vmatpush.bf16.msra.mxu0 %v4308
    %4370 = vmatpush.bf16.msra.mxu0 %v4307
    %4371 = vmatpush.bf16.msra.mxu0 %v4306
    %4372 = vmatmul.bf16.gmra.mxu0 %v4145
    %v4373 = vpop.f32.mrf.mxu0
    %v4374 = vadd.f32 %v4361, %v4373
    %v4375 = vpop.f32.mrf.mxu0
    %4376 = vdwg.mxu0
    %v4425 = vunpack.c.l.b16 %v4048
    %v4426 = vunpack.c.l.b16 %v4049
    %v4427 = vunpack.c.l.b16 %v4050
    %v4428 = vunpack.c.l.b16 %v4051
    %v4429 = vunpack.c.l.b16 %v4052
    %v4430 = vunpack.c.l.b16 %v4053
    %v4431 = vunpack.c.l.b16 %v4054
    %v4432 = vunpack.c.l.b16 %v4055
    %v4433 = vunpack.c.l.b16 %v4056
    %v4434 = vunpack.c.l.b16 %v4057
    %v4435 = vunpack.c.l.b16 %v4058
    %v4436 = vunpack.c.l.b16 %v4059
    %v4437 = vunpack.c.l.b16 %v4060
    %v4438 = vunpack.c.l.b16 %v4061
    %v4439 = vunpack.c.l.b16 %v4062
    %v4440 = vunpack.c.l.b16 %v4063
    %v4441 = vunpack.c.l.b16 %v4064
    %v4442 = vunpack.c.l.b16 %v4065
    %v4443 = vunpack.c.l.b16 %v4066
    %v4444 = vunpack.c.l.b16 %v4067
    %v4445 = vunpack.c.l.b16 %v4068
    %v4446 = vunpack.c.l.b16 %v4069
    %v4447 = vunpack.c.l.b16 %v4070
    %v4448 = vunpack.c.l.b16 %v4071
    %v4449 = vunpack.c.l.b16 %v4072
    %v4450 = vunpack.c.l.b16 %v4073
    %v4451 = vunpack.c.l.b16 %v4074
    %v4452 = vunpack.c.l.b16 %v4075
    %v4453 = vunpack.c.l.b16 %v4076
    %v4454 = vunpack.c.l.b16 %v4077
    %v4455 = vunpack.c.l.b16 %v4078
    %v4456 = vunpack.c.l.b16 %v4079
    %v4457 = vunpack.c.l.b16 %v4080
    %v4458 = vunpack.c.l.b16 %v4081
    %v4459 = vunpack.c.l.b16 %v4082
    %v4460 = vunpack.c.l.b16 %v4083
    %v4461 = vunpack.c.l.b16 %v4084
    %v4462 = vunpack.c.l.b16 %v4085
    %v4463 = vunpack.c.l.b16 %v4086
    %v4464 = vunpack.c.l.b16 %v4087
    %v4465 = vunpack.c.l.b16 %v4088
    %v4466 = vunpack.c.l.b16 %v4089
    %v4467 = vunpack.c.l.b16 %v4090
    %v4468 = vunpack.c.l.b16 %v4091
    %v4469 = vunpack.c.l.b16 %v4092
    %v4470 = vunpack.c.l.b16 %v4093
    %v4471 = vunpack.c.l.b16 %v4094
    %v4472 = vunpack.c.l.b16 %v4095
    %v4473 = vpack.c.b16 %v4426, %v4425
    %v4474 = vpack.c.b16 %v4428, %v4427
    %v4475 = vpack.c.b16 %v4430, %v4429
    %v4476 = vpack.c.b16 %v4432, %v4431
    %v4477 = vpack.c.b16 %v4434, %v4433
    %v4478 = vpack.c.b16 %v4436, %v4435
    %v4479 = vpack.c.b16 %v4438, %v4437
    %v4480 = vpack.c.b16 %v4440, %v4439
    %v4481 = vpack.c.b16 %v4442, %v4441
    %v4482 = vpack.c.b16 %v4444, %v4443
    %v4483 = vpack.c.b16 %v4446, %v4445
    %v4484 = vpack.c.b16 %v4448, %v4447
    %v4485 = vpack.c.b16 %v4450, %v4449
    %v4486 = vpack.c.b16 %v4452, %v4451
    %v4487 = vpack.c.b16 %v4454, %v4453
    %v4488 = vpack.c.b16 %v4456, %v4455
    %v4489 = vpack.c.b16 %v4458, %v4457
    %v4490 = vpack.c.b16 %v4460, %v4459
    %v4491 = vpack.c.b16 %v4462, %v4461
    %v4492 = vpack.c.b16 %v4464, %v4463
    %v4493 = vpack.c.b16 %v4466, %v4465
    %v4494 = vpack.c.b16 %v4468, %v4467
    %v4495 = vpack.c.b16 %v4470, %v4469
    %v4496 = vpack.c.b16 %v4472, %v4471
    %4521 = vmatpush.bf16.msra.mxu0 %v4480
    %4522 = vmatpush.bf16.msra.mxu0 %v4479
    %4523 = vmatpush.bf16.msra.mxu0 %v4478
    %4524 = vmatpush.bf16.msra.mxu0 %v4477
    %4525 = vmatpush.bf16.msra.mxu0 %v4476
    %4526 = vmatpush.bf16.msra.mxu0 %v4475
    %4527 = vmatpush.bf16.msra.mxu0 %v4474
    %4528 = vmatpush.bf16.msra.mxu0 %v4473
    %4529 = vmatmul.bf16.gmra.mxu0 %v4045
    %v4530 = vpop.f32.mrf.mxu0
    %v4531 = vadd.f32 %v4374, %v4530
    %v4532 = vpop.f32.mrf.mxu0
    %4533 = vdwg.mxu0
    %4534 = vmatpush.bf16.msra.mxu0 %v4488
    %4535 = vmatpush.bf16.msra.mxu0 %v4487
    %4536 = vmatpush.bf16.msra.mxu0 %v4486
    %4537 = vmatpush.bf16.msra.mxu0 %v4485
    %4538 = vmatpush.bf16.msra.mxu0 %v4484
    %4539 = vmatpush.bf16.msra.mxu0 %v4483
    %4540 = vmatpush.bf16.msra.mxu0 %v4482
    %4541 = vmatpush.bf16.msra.mxu0 %v4481
    %4542 = vmatmul.bf16.gmra.mxu0 %v4046
    %v4543 = vpop.f32.mrf.mxu0
    %v4544 = vadd.f32 %v4531, %v4543
    %v4545 = vpop.f32.mrf.mxu0
    %4546 = vdwg.mxu0
    %4547 = vmatpush.bf16.msra.mxu0 %v4496
    %4548 = vmatpush.bf16.msra.mxu0 %v4495
    %4549 = vmatpush.bf16.msra.mxu0 %v4494
    %4550 = vmatpush.bf16.msra.mxu0 %v4493
    %4551 = vmatpush.bf16.msra.mxu0 %v4492
    %4552 = vmatpush.bf16.msra.mxu0 %v4491
    %4553 = vmatpush.bf16.msra.mxu0 %v4490
    %4554 = vmatpush.bf16.msra.mxu0 %v4489
    %4555 = vmatmul.bf16.gmra.mxu0 %v4047
    %v4556 = vpop.f32.mrf.mxu0
    %v4557 = vadd.f32 %v4544, %v4556
    %v4558 = vpop.f32.mrf.mxu0
    %4559 = vdwg.mxu0
    %v4560 = vld [vmem:[#allocation17 + $0x4] sm:$0x3]
    %v4562 = vsel %vm3992, %v4560, 0
    %4564 = vmatpush.bf16.msra.mxu0 0
    %4565 = vmatpush.bf16.msra.mxu0 0
    %4566 = vmatpush.bf16.msra.mxu0 0
    %4567 = vmatpush.bf16.msra.mxu0 0
    %4568 = vmatpush.bf16.msra.mxu0 0
    %4569 = vmatpush.bf16.msra.mxu0 0
    %4570 = vmatpush.bf16.msra.mxu0 0
    %4571 = vmatpush.bf16.msra.mxu0 %v3998
    %4572 = vmatmul.bf16.gmra.mxu0 %v4562
    %v4573 = vpop.f32.mrf.mxu0
    %v4574 = vadd.f32 0.0, %v4573
    %v4575 = vpop.f32.mrf.mxu0
    %4576 = vdwg.mxu0
    %4577 = vmatpush.bf16.msra.mxu0 0
    %4578 = vmatpush.bf16.msra.mxu0 0
    %4579 = vmatpush.bf16.msra.mxu0 0
    %4580 = vmatpush.bf16.msra.mxu0 0
    %4581 = vmatpush.bf16.msra.mxu0 0
    %4582 = vmatpush.bf16.msra.mxu0 0
    %4583 = vmatpush.bf16.msra.mxu0 0
    %4584 = vmatpush.bf16.msra.mxu0 %v4001
    %4585 = vmatmul.bf16.gmra.mxu0 %v4562
    %v4586 = vpop.f32.mrf.mxu0
    %v4587 = vadd.f32 0.0, %v4586
    %v4588 = vpop.f32.mrf.mxu0
    %4589 = vdwg.mxu0
    %4590 = vmatpush.bf16.msra.mxu0 0
    %4591 = vmatpush.bf16.msra.mxu0 0
    %4592 = vmatpush.bf16.msra.mxu0 0
    %4593 = vmatpush.bf16.msra.mxu0 0
    %4594 = vmatpush.bf16.msra.mxu0 0
    %4595 = vmatpush.bf16.msra.mxu0 0
    %4596 = vmatpush.bf16.msra.mxu0 0
    %4597 = vmatpush.bf16.msra.mxu0 %v4004
    %4598 = vmatmul.bf16.gmra.mxu0 %v4562
    %v4599 = vpop.f32.mrf.mxu0
    %v4600 = vadd.f32 0.0, %v4599
    %v4601 = vpop.f32.mrf.mxu0
    %4602 = vdwg.mxu0
    %v4603 = vpack.c.bf16 %v4574, %v4574
    %v4604 = vpack.c.bf16 %v4587, %v4587
    %v4605 = vpack.c.bf16 %v4600, %v4600
    %v4606 = vld [vmem:[#allocation19 + $0x180] sm:$0xf]
    %v4607 = vld [vmem:[#allocation19 + $0x184] sm:$0xf]
    %v4608 = vld [vmem:[#allocation19 + $0x188] sm:$0xf]
    %v4609 = vld [vmem:[#allocation19 + $0x18c] sm:$0xf]
    %v4610 = vld [vmem:[#allocation19 + $0x190] sm:$0xf]
    %v4611 = vld [vmem:[#allocation19 + $0x194] sm:$0xf]
    %v4612 = vld [vmem:[#allocation19 + $0x198] sm:$0xf]
    %v4613 = vld [vmem:[#allocation19 + $0x19c] sm:$0xf]
    %v4614 = vld [vmem:[#allocation19 + $0x1a0] sm:$0xf]
    %v4615 = vld [vmem:[#allocation19 + $0x1a4] sm:$0xf]
    %v4616 = vld [vmem:[#allocation19 + $0x1a8] sm:$0xf]
    %v4617 = vld [vmem:[#allocation19 + $0x1ac] sm:$0xf]
    %v4618 = vld [vmem:[#allocation19 + $0x1b0] sm:$0xf]
    %v4619 = vld [vmem:[#allocation19 + $0x1b4] sm:$0xf]
    %v4620 = vld [vmem:[#allocation19 + $0x1b8] sm:$0xf]
    %v4621 = vld [vmem:[#allocation19 + $0x1bc] sm:$0xf]
    %v4622 = vld [vmem:[#allocation19 + $0x1c0] sm:$0xf]
    %v4623 = vld [vmem:[#allocation19 + $0x1c4] sm:$0xf]
    %v4624 = vld [vmem:[#allocation19 + $0x1c8] sm:$0xf]
    %v4625 = vld [vmem:[#allocation19 + $0x1cc] sm:$0xf]
    %v4626 = vld [vmem:[#allocation19 + $0x1d0] sm:$0xf]
    %v4627 = vld [vmem:[#allocation19 + $0x1d4] sm:$0xf]
    %v4628 = vld [vmem:[#allocation19 + $0x1d8] sm:$0xf]
    %v4629 = vld [vmem:[#allocation19 + $0x1dc] sm:$0xf]
    %v4630 = vld [vmem:[#allocation19 + $0x1e0] sm:$0xf]
    %v4631 = vld [vmem:[#allocation19 + $0x1e4] sm:$0xf]
    %v4632 = vld [vmem:[#allocation19 + $0x1e8] sm:$0xf]
    %v4633 = vld [vmem:[#allocation19 + $0x1ec] sm:$0xf]
    %v4634 = vld [vmem:[#allocation19 + $0x1f0] sm:$0xf]
    %v4635 = vld [vmem:[#allocation19 + $0x1f4] sm:$0xf]
    %v4636 = vld [vmem:[#allocation19 + $0x1f8] sm:$0xf]
    %v4637 = vld [vmem:[#allocation19 + $0x1fc] sm:$0xf]
    %v4638 = vld [vmem:[#allocation19 + $0x200] sm:$0xf]
    %v4639 = vld [vmem:[#allocation19 + $0x204] sm:$0xf]
    %v4640 = vld [vmem:[#allocation19 + $0x208] sm:$0xf]
    %v4641 = vld [vmem:[#allocation19 + $0x20c] sm:$0xf]
    %v4642 = vld [vmem:[#allocation19 + $0x210] sm:$0xf]
    %v4643 = vld [vmem:[#allocation19 + $0x214] sm:$0xf]
    %v4644 = vld [vmem:[#allocation19 + $0x218] sm:$0xf]
    %v4645 = vld [vmem:[#allocation19 + $0x21c] sm:$0xf]
    %v4646 = vld [vmem:[#allocation19 + $0x220] sm:$0xf]
    %v4647 = vld [vmem:[#allocation19 + $0x224] sm:$0xf]
    %v4648 = vld [vmem:[#allocation19 + $0x228] sm:$0xf]
    %v4649 = vld [vmem:[#allocation19 + $0x22c] sm:$0xf]
    %v4650 = vld [vmem:[#allocation19 + $0x230] sm:$0xf]
    %v4651 = vld [vmem:[#allocation19 + $0x234] sm:$0xf]
    %v4652 = vld [vmem:[#allocation19 + $0x238] sm:$0xf]
    %v4653 = vld [vmem:[#allocation19 + $0x23c] sm:$0xf]
    %v4702 = vunpack.c.l.b16 %v4606
    %v4703 = vunpack.c.l.b16 %v4607
    %v4704 = vunpack.c.l.b16 %v4608
    %v4705 = vunpack.c.l.b16 %v4609
    %v4706 = vunpack.c.l.b16 %v4610
    %v4707 = vunpack.c.l.b16 %v4611
    %v4708 = vunpack.c.l.b16 %v4612
    %v4709 = vunpack.c.l.b16 %v4613
    %v4710 = vunpack.c.l.b16 %v4614
    %v4711 = vunpack.c.l.b16 %v4615
    %v4712 = vunpack.c.l.b16 %v4616
    %v4713 = vunpack.c.l.b16 %v4617
    %v4714 = vunpack.c.l.b16 %v4618
    %v4715 = vunpack.c.l.b16 %v4619
    %v4716 = vunpack.c.l.b16 %v4620
    %v4717 = vunpack.c.l.b16 %v4621
    %v4718 = vunpack.c.l.b16 %v4622
    %v4719 = vunpack.c.l.b16 %v4623
    %v4720 = vunpack.c.l.b16 %v4624
    %v4721 = vunpack.c.l.b16 %v4625
    %v4722 = vunpack.c.l.b16 %v4626
    %v4723 = vunpack.c.l.b16 %v4627
    %v4724 = vunpack.c.l.b16 %v4628
    %v4725 = vunpack.c.l.b16 %v4629
    %v4726 = vunpack.c.l.b16 %v4630
    %v4727 = vunpack.c.l.b16 %v4631
    %v4728 = vunpack.c.l.b16 %v4632
    %v4729 = vunpack.c.l.b16 %v4633
    %v4730 = vunpack.c.l.b16 %v4634
    %v4731 = vunpack.c.l.b16 %v4635
    %v4732 = vunpack.c.l.b16 %v4636
    %v4733 = vunpack.c.l.b16 %v4637
    %v4734 = vunpack.c.l.b16 %v4638
    %v4735 = vunpack.c.l.b16 %v4639
    %v4736 = vunpack.c.l.b16 %v4640
    %v4737 = vunpack.c.l.b16 %v4641
    %v4738 = vunpack.c.l.b16 %v4642
    %v4739 = vunpack.c.l.b16 %v4643
    %v4740 = vunpack.c.l.b16 %v4644
    %v4741 = vunpack.c.l.b16 %v4645
    %v4742 = vunpack.c.l.b16 %v4646
    %v4743 = vunpack.c.l.b16 %v4647
    %v4744 = vunpack.c.l.b16 %v4648
    %v4745 = vunpack.c.l.b16 %v4649
    %v4746 = vunpack.c.l.b16 %v4650
    %v4747 = vunpack.c.l.b16 %v4651
    %v4748 = vunpack.c.l.b16 %v4652
    %v4749 = vunpack.c.l.b16 %v4653
    %v4750 = vpack.c.b16 %v4703, %v4702
    %v4751 = vpack.c.b16 %v4705, %v4704
    %v4752 = vpack.c.b16 %v4707, %v4706
    %v4753 = vpack.c.b16 %v4709, %v4708
    %v4754 = vpack.c.b16 %v4711, %v4710
    %v4755 = vpack.c.b16 %v4713, %v4712
    %v4756 = vpack.c.b16 %v4715, %v4714
    %v4757 = vpack.c.b16 %v4717, %v4716
    %v4758 = vpack.c.b16 %v4719, %v4718
    %v4759 = vpack.c.b16 %v4721, %v4720
    %v4760 = vpack.c.b16 %v4723, %v4722
    %v4761 = vpack.c.b16 %v4725, %v4724
    %v4762 = vpack.c.b16 %v4727, %v4726
    %v4763 = vpack.c.b16 %v4729, %v4728
    %v4764 = vpack.c.b16 %v4731, %v4730
    %v4765 = vpack.c.b16 %v4733, %v4732
    %v4766 = vpack.c.b16 %v4735, %v4734
    %v4767 = vpack.c.b16 %v4737, %v4736
    %v4768 = vpack.c.b16 %v4739, %v4738
    %v4769 = vpack.c.b16 %v4741, %v4740
    %v4770 = vpack.c.b16 %v4743, %v4742
    %v4771 = vpack.c.b16 %v4745, %v4744
    %v4772 = vpack.c.b16 %v4747, %v4746
    %v4773 = vpack.c.b16 %v4749, %v4748
    %4798 = vmatpush.bf16.msra.mxu0 %v4757
    %4799 = vmatpush.bf16.msra.mxu0 %v4756
    %4800 = vmatpush.bf16.msra.mxu0 %v4755
    %4801 = vmatpush.bf16.msra.mxu0 %v4754
    %4802 = vmatpush.bf16.msra.mxu0 %v4753
    %4803 = vmatpush.bf16.msra.mxu0 %v4752
    %4804 = vmatpush.bf16.msra.mxu0 %v4751
    %4805 = vmatpush.bf16.msra.mxu0 %v4750
    %4806 = vmatmul.bf16.gmra.mxu0 %v4603
    %v4807 = vpop.f32.mrf.mxu0
    %v4808 = vadd.f32 0.0, %v4807
    %v4809 = vpop.f32.mrf.mxu0
    %4810 = vdwg.mxu0
    %4811 = vmatpush.bf16.msra.mxu0 %v4765
    %4812 = vmatpush.bf16.msra.mxu0 %v4764
    %4813 = vmatpush.bf16.msra.mxu0 %v4763
    %4814 = vmatpush.bf16.msra.mxu0 %v4762
    %4815 = vmatpush.bf16.msra.mxu0 %v4761
    %4816 = vmatpush.bf16.msra.mxu0 %v4760
    %4817 = vmatpush.bf16.msra.mxu0 %v4759
    %4818 = vmatpush.bf16.msra.mxu0 %v4758
    %4819 = vmatmul.bf16.gmra.mxu0 %v4604
    %v4820 = vpop.f32.mrf.mxu0
    %v4821 = vadd.f32 %v4808, %v4820
    %v4822 = vpop.f32.mrf.mxu0
    %4823 = vdwg.mxu0
    %4824 = vmatpush.bf16.msra.mxu0 %v4773
    %4825 = vmatpush.bf16.msra.mxu0 %v4772
    %4826 = vmatpush.bf16.msra.mxu0 %v4771
    %4827 = vmatpush.bf16.msra.mxu0 %v4770
    %4828 = vmatpush.bf16.msra.mxu0 %v4769
    %4829 = vmatpush.bf16.msra.mxu0 %v4768
    %4830 = vmatpush.bf16.msra.mxu0 %v4767
    %4831 = vmatpush.bf16.msra.mxu0 %v4766
    %4832 = vmatmul.bf16.gmra.mxu0 %v4605
    %v4833 = vpop.f32.mrf.mxu0
    %v4834 = vadd.f32 %v4821, %v4833
    %v4835 = vpop.f32.mrf.mxu0
    %4836 = vdwg.mxu0
    %v4837 = vadd.f32 %v4557, %v4834
    %v4838 = vld [vmem:[%s20] sm:$0x1]
    %v4840 = vperm.slane %v4838, 0
    %v4842 = vadd.f32 %v4837, %v4840
    %v4843 = vxor.u32 %v4842, 2147483648
    %v4844 = vmul.f32 %v4843, 1.442695
    %v4845 = vpow.pop %v4844
    %v4846 = vadd.f32 %v4845, 1.0
    %v4847 = vrcp.pop %v4846
    %v4848 = vmul.f32 %v4846, %v4847
    %v4849 = vsub.f32 1.0, %v4848
    %v4850 = vmul.f32 %v4847, %v4849
    %v4851 = vadd.f32 %v4847, %v4850
    %vm4852 = vweird.f32 %v4846
    %vm4853 = vweird.f32 %v4847
    %vm4854 = vmor %vm4852, %vm4853
    %v4855 = vsel %vm4854, %v4847, %v4851
    %v4856 = vand.u32 2147483647, %v4846
    %vm4857 = vcmp.eq.f32.partialorder %v4856, 8.507059e+37
    %v4858 = vand.u32 %v4846, 2147483648
    %v4859 = vor.u32 1.1754944e-38, %v4858
    %v4860 = vsel %vm4857, %v4859, %v4855
    %v4861 = vmul.f32 1.0, %v4860
    %vm4862 = vcmask 11264
    %4863 = vst.msk [vmem:[#allocation20] sm:$0xf] %vm4862, %v4861
    // Predicated region
    $region122: #{_lambda_.1} parent=1 // pred_check
      _
    $region123: #{_lambda_.1} parent=1 // pred_check_branch
      %4865 = sbr.rel (0) target = $region125
    $region124: #{_lambda_.1} parent=1 // pred_region
      %4867 = vsyncadd [#allocation7], 0
      %s4869 = sshll.u32 [#allocation20], 4
      %s4870 = int_to_ptr.vmem [resolvable:$true] %s4869
      %s4871 = sshll.u32 %s21, 4
      %s4872 = int_to_ptr.hbm [resolvable:$true] %s4871
      %4874 = dma.vmem_to_hbm [thread:$0]  %s4870, 64, %s4872, [#allocation7]
    $region125: #{_lambda_.1} parent=1 // pred_fallthru
      _
    // Predicated region
    $region126: #{_lambda_.1} parent=1 // pred_check
      _
    $region127: #{_lambda_.1} parent=1 // pred_check_branch
      %4876 = sbr.rel (0) target = $region129
    $region128: #{_lambda_.1} parent=1 // pred_region
      %4878 = dma.done [#allocation7], 64
    $region129: #{_lambda_.1} parent=1 // pred_fallthru
      _
    %4879 = vsyncpa [#allocation6], 1
    %4880 = vsyncpa [#allocation9], 1
    %4881 = vsyncpa [#allocation12], 1
    %4882 = vsyncpa [#allocation15], 1
    %4883 = vsyncpa [#allocation18], 1
    %4884 = vsyncpa [#allocation7], 1

</llo_original>
